<compile_context>
chip_gen: v7x
topology: tpu7x:2x2x1
jax: 0.10.0
libtpu: 0.0.40
codegen_flags: <defaults>
</compile_context>

<pallas_src>
import jax
import jax.numpy as jnp
from jax import lax
from jax.experimental import pallas as pl
from jax.experimental.pallas import tpu as pltpu


# ----------------------------------------------------------------------------
# Compiler params / tiling helpers
# ----------------------------------------------------------------------------
def _vmem_limit_bytes():
    # ~3/4 of physical VMEM per generation; v7x-safe fallback if query fails.
    try:
        cap = pltpu.get_tpu_info().vmem_capacity_bytes
    except Exception:
        cap = 64 * 1024 * 1024
    return int(min(cap * 3 // 4, 100 * 1024 * 1024))


def _compiler_params(n_grid_axes):
    return pltpu.CompilerParams(
        dimension_semantics=("parallel",) * n_grid_axes,
        vmem_limit_bytes=_vmem_limit_bytes(),
    )


def _pick_row_tile(h, w, target_rows=1024):
    """Largest rh dividing H with rh % 8 == 0 (or rh == H) whose slab has at
    most ~target_rows output pixels (per-step overhead ~0.35us amortizes best
    with >=512-row matmul tiles; slab VMEM stays bounded for v7x)."""
    divs = [d for d in range(1, h + 1) if h % d == 0 and (d % 8 == 0 or d == h)]
    fitting = [d for d in divs if d * w <= target_rows]
    return max(fitting) if fitting else min(divs)


# ----------------------------------------------------------------------------
# Fused kernel: dual-backbone 3x3 conv (stride 1, pad 1) + bias + ReLU
#               + per-pixel discrepancy map, all from one VMEM-resident slab.
# ----------------------------------------------------------------------------
def _make_fused_kernel(rh, w_img, cin, cout, npad):
    k = 9 * cin
    m = rh * w_img

    def kernel(x_ref, w_ref, b_ref, feat_ref, d_ref):
        xs = x_ref[...][0]                         # (rh+2, W+2, Cin) bf16 slab
        wmat = w_ref[...]                          # (9*Cin, Npad) bf16

        # In-VMEM im2col: 9 shifted taps of the halo slab feed one f32
        # accumulator (single HBM read of the input, single output store).
        acc = jnp.zeros((m, npad), jnp.float32)
        for kh in range(3):
            for kw in range(3):
                t = kh * 3 + kw
                tap = xs[kh:kh + rh, kw:kw + w_img, :].reshape(m, cin)
                wt = wmat[t * cin:(t + 1) * cin, :]
                acc = acc + jnp.dot(tap, wt, preferred_element_type=jnp.float32)

        y = jnp.maximum(acc + b_ref[...], 0.0)     # (M, Npad) f32, both nets
        feat_ref[...] = y.reshape(1, rh, w_img, npad).astype(feat_ref.dtype)

        # Fused cal_discrepancy(OOM=False, aggregation=False) epilogue:
        # per-pixel channel-L2 normalize, then sum_c (fe_n - fa_n)^2.
        fe = y[:, :cout]
        fa = y[:, cout:2 * cout]
        eps = 1e-12                                # torch F.normalize eps
        inv_fe = lax.rsqrt(jnp.maximum(jnp.sum(fe * fe, axis=1, keepdims=True),
                                       eps * eps))
        inv_fa = lax.rsqrt(jnp.maximum(jnp.sum(fa * fa, axis=1, keepdims=True),
                                       eps * eps))
        diff = fe * inv_fe - fa * inv_fa
        d_ref[...] = jnp.sum(diff * diff, axis=1).reshape(1, rh, w_img)

    return kernel


def hdm_fused_forward(x_nchw, params_expert, params_apprentice, target_rows=1024):
    """One pallas_call producing (features_nhwc bf16 (B,H,W,Npad),
    discrepancy map f32 (B,H,W), Cout)."""
    B, Cin, H, W = x_nchw.shape
    w_e, b_e = params_expert
    w_a, b_a = params_apprentice
    Cout = w_e.shape[-1]
    K = 9 * Cin
    Npad = ((2 * Cout + 127) // 128) * 128         # lane-dense stores, MXU fill
    rh = _pick_row_tile(H, W, target_rows)
    n_slabs = H // rh

    # NCHW -> NHWC once; pad the 3x3 halo once (tiny copy, no 9x im2col).
    x = jnp.transpose(x_nchw, (0, 2, 3, 1))
    xp = jnp.pad(x, ((0, 0), (1, 1), (1, 1), (0, 0))).astype(jnp.bfloat16)
    if n_slabs == 1:
        slabs = xp                                  # (B, H+2, W+2, Cin)
    else:                                           # overlapping row slabs
        slabs = jnp.stack([xp[:, r * rh:r * rh + rh + 2] for r in range(n_slabs)],
                          axis=1).reshape(B * n_slabs, rh + 2, W + 2, Cin)

    # Fused weights: expert -> cols [0:Cout], apprentice -> [Cout:2*Cout].
    wcat = jnp.zeros((K, Npad), jnp.float32)
    wcat = wcat.at[:, :Cout].set(w_e.reshape(K, Cout))
    wcat = wcat.at[:, Cout:2 * Cout].set(w_a.reshape(K, Cout))
    wcat = wcat.astype(jnp.bfloat16)
    bcat = jnp.zeros((1, Npad), jnp.float32)
    bcat = bcat.at[:, :Cout].set(b_e.reshape(1, Cout))
    bcat = bcat.at[:, Cout:2 * Cout].set(b_a.reshape(1, Cout))

    kernel = _make_fused_kernel(rh, W, Cin, Cout, Npad)
    grid = (B, n_slabs)
    # NOTE: the constant weight/bias blocks could use pipeline_mode=pl.Buffered(1)
    # to skip double-buffering at large Cout; omitted for lowering portability.
    feat, d = pl.pallas_call(
        kernel,
        out_shape=(jax.ShapeDtypeStruct((B, H, W, Npad), jnp.bfloat16),
                   jax.ShapeDtypeStruct((B, H, W), jnp.float32)),
        grid_spec=pltpu.PrefetchScalarGridSpec(
            num_scalar_prefetch=0,
            grid=grid,
            in_specs=[
                pl.BlockSpec((1, rh + 2, W + 2, Cin),
                             lambda b, r: (b * n_slabs + r, 0, 0, 0)),
                pl.BlockSpec((K, Npad), lambda b, r: (0, 0)),
                pl.BlockSpec((1, Npad), lambda b, r: (0, 0)),
            ],
            out_specs=[
                pl.BlockSpec((1, rh, W, Npad), lambda b, r: (b, r, 0, 0)),
                pl.BlockSpec((1, rh, W), lambda b, r: (b, r, 0)),
            ],
        ),
        compiler_params=_compiler_params(len(grid)),
    )(slabs, wcat, bcat)
    return feat, d, Cout


# ----------------------------------------------------------------------------
# HDMModel equivalents
# ----------------------------------------------------------------------------
def hdm_forward(x_nchw, params_expert, params_apprentice):
    """HDMModel.forward: {'FE': ME(x), 'FA': MA(x)} (NCHW f32, expert frozen),
    plus the fused per-pixel discrepancy map d_p (B,H,W) that cal_am/cal_loss
    consume — computed for free while the feature tiles are still in VMEM."""
    feat, d, cout = hdm_fused_forward(x_nchw, params_expert, params_apprentice)
    fe = jnp.transpose(feat[..., :cout], (0, 3, 1, 2)).astype(jnp.float32)
    fa = jnp.transpose(feat[..., cout:2 * cout], (0, 3, 1, 2)).astype(jnp.float32)
    features = {"FE": lax.stop_gradient(fe),        # mirrors torch.no_grad()
                "FA": fa}
    return features, d


def cal_discrepancy_weighting(d_p, OOM, normal, gamma, aggregation=True):
    """cal_discrepancy's OOM-weighting / aggregation applied to the fused
    per-pixel map d_p (pure-JAX glue; the normalize+reduce already ran in the
    Pallas kernel)."""
    if OOM:
        mu = jnp.mean(d_p)
        w = (d_p / mu) ** gamma if normal else (mu / jnp.maximum(d_p, 1e-12)) ** gamma
        w = lax.stop_gradient(w)
    else:
        w = jnp.ones_like(d_p)
    out = jnp.sum(d_p * w) if aggregation else d_p
    return out, jnp.sum(w)


def init_backbone_params(key, cin, cout):
    kw, kb = jax.random.split(key)
    w = jax.random.normal(kw, (3, 3, cin, cout), jnp.float32) * 0.1
    b = jax.random.normal(kb, (1, cout), jnp.float32) * 0.01
    return w, b


# ----------------------------------------------------------------------------
# Pure-JAX references (tolerance checks only)
# ----------------------------------------------------------------------------
def _ref_backbone_nchw(x_nchw, w, b):
    x = jnp.transpose(x_nchw, (0, 2, 3, 1)).astype(jnp.bfloat16).astype(jnp.float32)
    B, H, W, Cin = x.shape
    xp = jnp.pad(x, ((0, 0), (1, 1), (1, 1), (0, 0)))
    taps = [xp[:, kh:kh + H, kw:kw + W, :] for kh in range(3) for kw in range(3)]
    p = jnp.concatenate(taps, axis=-1).reshape(-1, 9 * Cin)
    w2 = w.reshape(9 * Cin, -1).astype(jnp.bfloat16).astype(jnp.float32)
    y = jnp.maximum(p @ w2 + b.reshape(1, -1), 0.0)
    return jnp.transpose(y.reshape(B, H, W, -1), (0, 3, 1, 2))


def _ref_discrepancy_map(fe_nchw, fa_nchw):
    eps = 1e-12
    fe_n = fe_nchw / jnp.maximum(
        jnp.sqrt(jnp.sum(fe_nchw ** 2, axis=1, keepdims=True)), eps)
    fa_n = fa_nchw / jnp.maximum(
        jnp.sqrt(jnp.sum(fa_nchw ** 2, axis=1, keepdims=True)), eps)
    return jnp.sum((fe_n - fa_n) ** 2, axis=1)


if __name__ == "__main__":
    key = jax.random.PRNGKey(0)
    kx, ke, ka = jax.random.split(key, 3)

    B, Cin, H, W, Cout = 2, 4, 16, 16, 32
    x = jax.random.normal(kx, (B, Cin, H, W), jnp.float32)       # NCHW input

    params_expert = init_backbone_params(ke, Cin, Cout)
    params_apprentice = init_backbone_params(ka, Cin, Cout)

    features, d_map = hdm_forward(x, params_expert, params_apprentice)
    jax.block_until_ready((features, d_map))

    assert features["FE"].shape == (B, Cout, H, W)
    assert features["FA"].shape == (B, Cout, H, W)
    assert d_map.shape == (B, H, W)

    # Loose-tolerance correctness checks against pure-JAX references
    # (kernel runs bf16 matmuls with f32 accumulation and bf16 feature store).
    fe_ref = _ref_backbone_nchw(x, *params_expert)
    fa_ref = _ref_backbone_nchw(x, *params_apprentice)
    d_ref = _ref_discrepancy_map(fe_ref, fa_ref)
    assert jnp.allclose(features["FE"], fe_ref, atol=2e-2, rtol=2e-2)
    assert jnp.allclose(features["FA"], fa_ref, atol=2e-2, rtol=2e-2)
    assert jnp.allclose(d_map, d_ref, atol=2e-2, rtol=2e-2)

    # Loss-side weighting/aggregation semantics on the fused map (pure JAX).
    loss_n, w_n = cal_discrepancy_weighting(d_map, OOM=False, normal=True, gamma=2)
    jax.block_until_ready((loss_n, w_n))

    print("KERNEL_OK")
</pallas_src>

<mosaic_0001>
module attributes {stable_mosaic.version = 11 : i64} {
  func.func @kernel(%arg0: i32, %arg1: i32, %arg2: memref<1x18x18x4xbf16, #tpu.memory_space<vmem>>, %arg3: memref<36x128xbf16, #tpu.memory_space<vmem>>, %arg4: memref<1x128xf32, #tpu.memory_space<vmem>>, %arg5: memref<1x16x16x128xbf16, #tpu.memory_space<vmem>>, %arg6: memref<1x16x16xf32, #tpu.memory_space<vmem>>) attributes {dimension_semantics = [#tpu.dimension_semantics<parallel>, #tpu.dimension_semantics<parallel>], iteration_bounds = array<i64: 2, 1>, scalar_prefetch = 0 : i64, scratch_operands = 0 : i64, tpu.core_type = #tpu.core_type<tc>, window_params = [{transform_indices = @transform_0, window_bounds = array<i64: 1, 18, 18, 4>}, {pipeline_mode = #tpu.pipeline_mode<synchronous>, transform_indices = @transform_1, window_bounds = array<i64: 36, 128>}, {pipeline_mode = #tpu.pipeline_mode<synchronous>, transform_indices = @transform_2, window_bounds = array<i64: 1, 128>}, {transform_indices = @transform_3, window_bounds = array<i64: 1, 16, 16, 128>}, {transform_indices = @transform_4, window_bounds = array<i64: 1, 16, 16>}]} {
    %c0 = arith.constant 0 : index
    %c0_0 = arith.constant 0 : index
    %c0_1 = arith.constant 0 : index
    %c0_2 = arith.constant 0 : index
    %0 = vector.load %arg2[%c0, %c0_0, %c0_1, %c0_2] : memref<1x18x18x4xbf16, #tpu.memory_space<vmem>>, vector<1x18x18x4xbf16>
    %1 = vector.shape_cast %0 : vector<1x18x18x4xbf16> to vector<18x18x4xbf16>
    %c0_3 = arith.constant 0 : index
    %c0_4 = arith.constant 0 : index
    %2 = vector.load %arg3[%c0_3, %c0_4] : memref<36x128xbf16, #tpu.memory_space<vmem>>, vector<36x128xbf16>
    %cst = arith.constant 0.000000e+00 : f32
    %3 = vector.broadcast %cst : f32 to vector<256x128xf32>
    %4 = vector.extract_strided_slice %1 {offsets = [0, 0, 0], sizes = [16, 16, 4], strides = [1, 1, 1]} : vector<18x18x4xbf16> to vector<16x16x4xbf16>
    %5 = vector.shape_cast %4 : vector<16x16x4xbf16> to vector<256x4xbf16>
    %6 = vector.extract_strided_slice %2 {offsets = [0, 0], sizes = [4, 128], strides = [1, 1]} : vector<36x128xbf16> to vector<4x128xbf16>
    %cst_5 = arith.constant dense<0.000000e+00> : vector<256x128xf32>
    %7 = tpu.matmul %5, %6, %cst_5 {dimension_numbers = #tpu.dot_dimension_numbers<[1], [0], [0], [1], [0, 0, 1, 1], [], []>} : vector<256x4xbf16>, vector<4x128xbf16>, vector<256x128xf32> -> vector<256x128xf32>
    %8 = arith.addf %3, %7 : vector<256x128xf32>
    %9 = vector.extract_strided_slice %1 {offsets = [0, 1, 0], sizes = [16, 16, 4], strides = [1, 1, 1]} : vector<18x18x4xbf16> to vector<16x16x4xbf16>
    %10 = vector.shape_cast %9 : vector<16x16x4xbf16> to vector<256x4xbf16>
    %11 = vector.extract_strided_slice %2 {offsets = [4, 0], sizes = [4, 128], strides = [1, 1]} : vector<36x128xbf16> to vector<4x128xbf16>
    %cst_6 = arith.constant dense<0.000000e+00> : vector<256x128xf32>
    %12 = tpu.matmul %10, %11, %cst_6 {dimension_numbers = #tpu.dot_dimension_numbers<[1], [0], [0], [1], [0, 0, 1, 1], [], []>} : vector<256x4xbf16>, vector<4x128xbf16>, vector<256x128xf32> -> vector<256x128xf32>
    %13 = arith.addf %8, %12 : vector<256x128xf32>
    %14 = vector.extract_strided_slice %1 {offsets = [0, 2, 0], sizes = [16, 16, 4], strides = [1, 1, 1]} : vector<18x18x4xbf16> to vector<16x16x4xbf16>
    %15 = vector.shape_cast %14 : vector<16x16x4xbf16> to vector<256x4xbf16>
    %16 = vector.extract_strided_slice %2 {offsets = [8, 0], sizes = [4, 128], strides = [1, 1]} : vector<36x128xbf16> to vector<4x128xbf16>
    %cst_7 = arith.constant dense<0.000000e+00> : vector<256x128xf32>
    %17 = tpu.matmul %15, %16, %cst_7 {dimension_numbers = #tpu.dot_dimension_numbers<[1], [0], [0], [1], [0, 0, 1, 1], [], []>} : vector<256x4xbf16>, vector<4x128xbf16>, vector<256x128xf32> -> vector<256x128xf32>
    %18 = arith.addf %13, %17 : vector<256x128xf32>
    %19 = vector.extract_strided_slice %1 {offsets = [1, 0, 0], sizes = [16, 16, 4], strides = [1, 1, 1]} : vector<18x18x4xbf16> to vector<16x16x4xbf16>
    %20 = vector.shape_cast %19 : vector<16x16x4xbf16> to vector<256x4xbf16>
    %21 = vector.extract_strided_slice %2 {offsets = [12, 0], sizes = [4, 128], strides = [1, 1]} : vector<36x128xbf16> to vector<4x128xbf16>
    %cst_8 = arith.constant dense<0.000000e+00> : vector<256x128xf32>
    %22 = tpu.matmul %20, %21, %cst_8 {dimension_numbers = #tpu.dot_dimension_numbers<[1], [0], [0], [1], [0, 0, 1, 1], [], []>} : vector<256x4xbf16>, vector<4x128xbf16>, vector<256x128xf32> -> vector<256x128xf32>
    %23 = arith.addf %18, %22 : vector<256x128xf32>
    %24 = vector.extract_strided_slice %1 {offsets = [1, 1, 0], sizes = [16, 16, 4], strides = [1, 1, 1]} : vector<18x18x4xbf16> to vector<16x16x4xbf16>
    %25 = vector.shape_cast %24 : vector<16x16x4xbf16> to vector<256x4xbf16>
    %26 = vector.extract_strided_slice %2 {offsets = [16, 0], sizes = [4, 128], strides = [1, 1]} : vector<36x128xbf16> to vector<4x128xbf16>
    %cst_9 = arith.constant dense<0.000000e+00> : vector<256x128xf32>
    %27 = tpu.matmul %25, %26, %cst_9 {dimension_numbers = #tpu.dot_dimension_numbers<[1], [0], [0], [1], [0, 0, 1, 1], [], []>} : vector<256x4xbf16>, vector<4x128xbf16>, vector<256x128xf32> -> vector<256x128xf32>
    %28 = arith.addf %23, %27 : vector<256x128xf32>
    %29 = vector.extract_strided_slice %1 {offsets = [1, 2, 0], sizes = [16, 16, 4], strides = [1, 1, 1]} : vector<18x18x4xbf16> to vector<16x16x4xbf16>
    %30 = vector.shape_cast %29 : vector<16x16x4xbf16> to vector<256x4xbf16>
    %31 = vector.extract_strided_slice %2 {offsets = [20, 0], sizes = [4, 128], strides = [1, 1]} : vector<36x128xbf16> to vector<4x128xbf16>
    %cst_10 = arith.constant dense<0.000000e+00> : vector<256x128xf32>
    %32 = tpu.matmul %30, %31, %cst_10 {dimension_numbers = #tpu.dot_dimension_numbers<[1], [0], [0], [1], [0, 0, 1, 1], [], []>} : vector<256x4xbf16>, vector<4x128xbf16>, vector<256x128xf32> -> vector<256x128xf32>
    %33 = arith.addf %28, %32 : vector<256x128xf32>
    %34 = vector.extract_strided_slice %1 {offsets = [2, 0, 0], sizes = [16, 16, 4], strides = [1, 1, 1]} : vector<18x18x4xbf16> to vector<16x16x4xbf16>
    %35 = vector.shape_cast %34 : vector<16x16x4xbf16> to vector<256x4xbf16>
    %36 = vector.extract_strided_slice %2 {offsets = [24, 0], sizes = [4, 128], strides = [1, 1]} : vector<36x128xbf16> to vector<4x128xbf16>
    %cst_11 = arith.constant dense<0.000000e+00> : vector<256x128xf32>
    %37 = tpu.matmul %35, %36, %cst_11 {dimension_numbers = #tpu.dot_dimension_numbers<[1], [0], [0], [1], [0, 0, 1, 1], [], []>} : vector<256x4xbf16>, vector<4x128xbf16>, vector<256x128xf32> -> vector<256x128xf32>
    %38 = arith.addf %33, %37 : vector<256x128xf32>
    %39 = vector.extract_strided_slice %1 {offsets = [2, 1, 0], sizes = [16, 16, 4], strides = [1, 1, 1]} : vector<18x18x4xbf16> to vector<16x16x4xbf16>
    %40 = vector.shape_cast %39 : vector<16x16x4xbf16> to vector<256x4xbf16>
    %41 = vector.extract_strided_slice %2 {offsets = [28, 0], sizes = [4, 128], strides = [1, 1]} : vector<36x128xbf16> to vector<4x128xbf16>
    %cst_12 = arith.constant dense<0.000000e+00> : vector<256x128xf32>
    %42 = tpu.matmul %40, %41, %cst_12 {dimension_numbers = #tpu.dot_dimension_numbers<[1], [0], [0], [1], [0, 0, 1, 1], [], []>} : vector<256x4xbf16>, vector<4x128xbf16>, vector<256x128xf32> -> vector<256x128xf32>
    %43 = arith.addf %38, %42 : vector<256x128xf32>
    %44 = vector.extract_strided_slice %1 {offsets = [2, 2, 0], sizes = [16, 16, 4], strides = [1, 1, 1]} : vector<18x18x4xbf16> to vector<16x16x4xbf16>
    %45 = vector.shape_cast %44 : vector<16x16x4xbf16> to vector<256x4xbf16>
    %46 = vector.extract_strided_slice %2 {offsets = [32, 0], sizes = [4, 128], strides = [1, 1]} : vector<36x128xbf16> to vector<4x128xbf16>
    %cst_13 = arith.constant dense<0.000000e+00> : vector<256x128xf32>
    %47 = tpu.matmul %45, %46, %cst_13 {dimension_numbers = #tpu.dot_dimension_numbers<[1], [0], [0], [1], [0, 0, 1, 1], [], []>} : vector<256x4xbf16>, vector<4x128xbf16>, vector<256x128xf32> -> vector<256x128xf32>
    %48 = arith.addf %43, %47 : vector<256x128xf32>
    %c0_14 = arith.constant 0 : index
    %c0_15 = arith.constant 0 : index
    %49 = vector.load %arg4[%c0_14, %c0_15] : memref<1x128xf32, #tpu.memory_space<vmem>>, vector<1x128xf32>
    %50 = vector.broadcast %49 : vector<1x128xf32> to vector<256x128xf32>
    %51 = arith.addf %48, %50 : vector<256x128xf32>
    %cst_16 = arith.constant 0.000000e+00 : f32
    %52 = vector.broadcast %cst_16 : f32 to vector<256x128xf32>
    %53 = arith.maximumf %51, %52 : vector<256x128xf32>
    %54 = vector.shape_cast %53 : vector<256x128xf32> to vector<1x16x16x128xf32>
    %55 = arith.truncf %54 : vector<1x16x16x128xf32> to vector<1x16x16x128xbf16>
    %c0_17 = arith.constant 0 : index
    %c0_18 = arith.constant 0 : index
    %c0_19 = arith.constant 0 : index
    %c0_20 = arith.constant 0 : index
    %56 = vector.load %arg5[%c0_17, %c0_18, %c0_19, %c0_20] : memref<1x16x16x128xbf16, #tpu.memory_space<vmem>>, vector<1x16x16x128xbf16>
    tpu.vector_store %arg5[%c0_17, %c0_18, %c0_19, %c0_20], %55 {strides = array<i32>} : memref<1x16x16x128xbf16, #tpu.memory_space<vmem>>, vector<1x16x16x128xbf16>,
    %57 = vector.extract_strided_slice %53 {offsets = [0, 0], sizes = [256, 32], strides = [1, 1]} : vector<256x128xf32> to vector<256x32xf32>
    %58 = vector.extract_strided_slice %53 {offsets = [0, 32], sizes = [256, 32], strides = [1, 1]} : vector<256x128xf32> to vector<256x32xf32>
    %59 = arith.mulf %57, %57 : vector<256x32xf32>
    %cst_21 = arith.constant dense<0.000000e+00> : vector<256xf32>
    %60 = vector.multi_reduction <add>, %59, %cst_21 [1] : vector<256x32xf32> to vector<256xf32>
    %61 = vector.shape_cast %60 : vector<256xf32> to vector<256x1xf32>
    %cst_22 = arith.constant 1.000000e-24 : f32
    %62 = vector.broadcast %cst_22 : f32 to vector<256x1xf32>
    %63 = arith.maximumf %61, %62 : vector<256x1xf32>
    %64 = math.rsqrt %63 : vector<256x1xf32>
    %65 = arith.mulf %58, %58 : vector<256x32xf32>
    %cst_23 = arith.constant dense<0.000000e+00> : vector<256xf32>
    %66 = vector.multi_reduction <add>, %65, %cst_23 [1] : vector<256x32xf32> to vector<256xf32>
    %67 = vector.shape_cast %66 : vector<256xf32> to vector<256x1xf32>
    %cst_24 = arith.constant 1.000000e-24 : f32
    %68 = vector.broadcast %cst_24 : f32 to vector<256x1xf32>
    %69 = arith.maximumf %67, %68 : vector<256x1xf32>
    %70 = math.rsqrt %69 : vector<256x1xf32>
    %71 = vector.broadcast %64 : vector<256x1xf32> to vector<256x32xf32>
    %72 = arith.mulf %57, %71 : vector<256x32xf32>
    %73 = vector.broadcast %70 : vector<256x1xf32> to vector<256x32xf32>
    %74 = arith.mulf %58, %73 : vector<256x32xf32>
    %75 = arith.subf %72, %74 : vector<256x32xf32>
    %76 = arith.mulf %75, %75 : vector<256x32xf32>
    %cst_25 = arith.constant dense<0.000000e+00> : vector<256xf32>
    %77 = vector.multi_reduction <add>, %76, %cst_25 [1] : vector<256x32xf32> to vector<256xf32>
    %78 = vector.shape_cast %77 : vector<256xf32> to vector<1x16x16xf32>
    %c0_26 = arith.constant 0 : index
    %c0_27 = arith.constant 0 : index
    %c0_28 = arith.constant 0 : index
    %79 = vector.load %arg6[%c0_26, %c0_27, %c0_28] : memref<1x16x16xf32, #tpu.memory_space<vmem>>, vector<1x16x16xf32>
    tpu.vector_store %arg6[%c0_26, %c0_27, %c0_28], %78 {strides = array<i32>} : memref<1x16x16xf32, #tpu.memory_space<vmem>>, vector<1x16x16xf32>,
    return
  }
  func.func @transform_0(%arg0: i32, %arg1: i32) -> (i32, i32, i32, i32) {
    %c1_i32 = arith.constant 1 : i32
    %0 = arith.muli %arg0, %c1_i32 : i32
    %1 = arith.addi %0, %arg1 : i32
    %c0_i32 = arith.constant 0 : i32
    %c0_i32_0 = arith.constant 0 : i32
    %c0_i32_1 = arith.constant 0 : i32
    %c0_i32_2 = arith.constant 0 : i32
    return %1, %c0_i32, %c0_i32_0, %c0_i32_1 : i32, i32, i32, i32
  }
  func.func @transform_1(%arg0: i32, %arg1: i32) -> (i32, i32) {
    %c0_i32 = arith.constant 0 : i32
    %c0_i32_0 = arith.constant 0 : i32
    %c0_i32_1 = arith.constant 0 : i32
    return %c0_i32, %c0_i32_0 : i32, i32
  }
  func.func @transform_2(%arg0: i32, %arg1: i32) -> (i32, i32) {
    %c0_i32 = arith.constant 0 : i32
    %c0_i32_0 = arith.constant 0 : i32
    %c0_i32_1 = arith.constant 0 : i32
    return %c0_i32, %c0_i32_0 : i32, i32
  }
  func.func @transform_3(%arg0: i32, %arg1: i32) -> (i32, i32, i32, i32) {
    %c0_i32 = arith.constant 0 : i32
    %c0_i32_0 = arith.constant 0 : i32
    %c0_i32_1 = arith.constant 0 : i32
    return %arg0, %arg1, %c0_i32, %c0_i32_0 : i32, i32, i32, i32
  }
  func.func @transform_4(%arg0: i32, %arg1: i32) -> (i32, i32, i32) {
    %c0_i32 = arith.constant 0 : i32
    %c0_i32_0 = arith.constant 0 : i32
    return %arg0, %arg1, %c0_i32 : i32, i32, i32
  }
}

</mosaic_0001>

<llo_original>
// kernel: tpu_custom_call.1
$region0: #{tpu_custom_call.1}
  #allocation0 [shape = 'u32[]', space=smem, size = 0x4, offset = 0x4, fixed_abs, tag = 'smem constant byte address 0x4 - core index']
  #allocation1 [shape = 'u32[144,128]{1,0:T(1,128)}', space=vmem, size = 0x12000, scoped, tag = 'internal scratch']
  %s0 = inlined_call_operand.vmem [shape: bf16[2,18,18,4], index: 0, kind: input, shape index: {}]
  %s1 = inlined_call_operand.vmem [shape: bf16[36,128], index: 1, kind: input, shape index: {}]
  %s2 = inlined_call_operand.vmem [shape: f32[1,128], index: 2, kind: input, shape index: {}]
  %s3 = inlined_call_operand.hbm [shape: bf16[2,16,16,128], index: 3, kind: output, shape index: {0}]
  %s4 = inlined_call_operand.hbm [shape: f32[2,16,16], index: 4, kind: output, shape index: {1}]
  %5 = xla_tuple %s3, %s4
  %s6 = sld [smem:[#allocation0]]
  $region53: #{tpu_custom_call.1} parent=0
    _
  %s8 = ssub.s32 1, %s6
  %s9 = scalar_select 0, %s8, %s6
  $region1: #{tpu_custom_call.1} parent=0
    #allocation2 [shape = 'u8[131072]{0}', space=vmem, size = 0x20000, scoped, tag = 'output window, operand 0']
    #allocation3 [shape = 's32[2]{0}', space=sflag, size = 0x8, scoped, tag = 'scoped memory for tpu_custom_call.1']
    #allocation4 [shape = 'u8[16384]{0}', space=vmem, size = 0x4000, scoped, tag = 'output window, operand 1']
    #allocation5 [shape = 's32[2]{0}', space=sflag, size = 0x8, scoped, tag = 'scoped memory for tpu_custom_call.1']
    %10 = vsyncpa [#allocation3], 0
    %s11 = scalar_lea.sflag [#allocation3], 1
    %12 = vsyncpa %s11, 0
    %13 = vsyncpa [#allocation5], 0
    %s14 = scalar_lea.sflag [#allocation5], 1
    %15 = vsyncpa %s14, 0
    loop: start=0, step=1, limit=4
    $region2: #{tpu_custom_call.1} parent=1 // loop_pre_header
      _
    $region3: #{tpu_custom_call.1} parent=1 // loop_header
      %s17 = sphi 0, %s21
      %p18 = scmp.ge.s32.totalorder %s17, 4
      %s24 = sphi 0, %s36
      %s25 = sphi 0, %s32
      %s26 = sphi 0, %s24
      %s27 = sphi 0, %s25
      %s28 = sphi 0, %s26
      %s29 = sphi 0, %s27
      %s41 = sphi 0, %s43
      %s44 = sphi 0, %s41
      %s45 = sphi 0, %s44
      %s61 = sphi 0, %s45
      %s65 = sphi 0, %s65
      %s67 = sphi 0, %s65
      %s68 = sphi 0, %s67
      %s82 = sphi 0, %s68
      %s86 = sphi 0, %s86
      %s88 = sphi 0, %s86
      %s89 = sphi 0, %s88
      %s103 = sphi 0, %s89
      %s111 = sphi 0, %s113
      %s114 = sphi 0, %s111
      %s115 = sphi 0, %s114
      %s131 = sphi 0, %s115
      %s139 = sphi 0, %s141
      %s142 = sphi 0, %s139
      %s143 = sphi 0, %s142
      %s159 = sphi 0, %s143
    $region4: #{tpu_custom_call.1} parent=1 // loop_header_branch
      %20 = sbr.rel (%p18) target = $region8
    $region5: #{tpu_custom_call.1} parent=1 // loop_body
      %s22 = ssub.s32 %s17, 1
      %s23 = ssub.s32 %s17, 2
      %s30 = sadd.s32 1, %s25
      %p31 = scmp.ge.s32.totalorder %s30, 1
      %s32 = scalar_select %p31, 0, %s30
      %s33 = sadd.s32 1, %s24
      %s34 = scalar_select %p31, %s33, %s24
      %p35 = scmp.ge.s32.totalorder %s34, 2
      %s36 = scalar_select %p35, 0, %s34
      %s37 = sadd.s32 %s24, %s25
      %s38 = sadd.s32 %s36, %s32
      %s39 = ssub.s32 %s37, %s38
      %p40 = scmp.eq.s32.totalorder %s39, 0
      %s42 = sadd.s32 %s41, 1
      %s43 = scalar_select %p40, %s41, %s42
      %p46 = pneg %p40
      %p47 = scmp.eq.s32.totalorder %s17, 1
      %p48 = por %p46, %p47
      %p49 = scmp.ne.s32.totalorder %s41, %s44
      %p50 = scmp.eq.s32.totalorder %s17, 0
      %p51 = por %p49, %p50
      %p52 = scmp.ne.s32.totalorder %s41, %s44
      %p53 = scmp.eq.s32.totalorder %s22, 1
      %p54 = por %p52, %p53
      %p55 = scmp.ne.s32.totalorder %s44, %s45
      %p56 = scmp.eq.s32.totalorder %s22, 0
      %p57 = por %p55, %p56
      %p58 = scmp.ne.s32.totalorder %s44, %s45
      %p59 = scmp.eq.s32.totalorder %s23, 1
      %p60 = por %p58, %p59
      %p62 = scmp.ne.s32.totalorder %s45, %s61
      %p63 = scmp.eq.s32.totalorder %s23, 0
      %p64 = por %p62, %p63
      %s66 = sadd.s32 %s65, 1
      %p69 = scmp.eq.s32.totalorder %s17, 1
      %p70 = scmp.ne.s32.totalorder %s65, %s67
      %p71 = scmp.eq.s32.totalorder %s17, 0
      %p72 = por %p70, %p71
      %p73 = scmp.ne.s32.totalorder %s65, %s67
      %p74 = scmp.eq.s32.totalorder %s22, 1
      %p75 = por %p73, %p74
      %p76 = scmp.ne.s32.totalorder %s67, %s68
      %p77 = scmp.eq.s32.totalorder %s22, 0
      %p78 = por %p76, %p77
      %p79 = scmp.ne.s32.totalorder %s67, %s68
      %p80 = scmp.eq.s32.totalorder %s23, 1
      %p81 = por %p79, %p80
      %p83 = scmp.ne.s32.totalorder %s68, %s82
      %p84 = scmp.eq.s32.totalorder %s23, 0
      %p85 = por %p83, %p84
      %s87 = sadd.s32 %s86, 1
      %p90 = scmp.eq.s32.totalorder %s17, 1
      %p91 = scmp.ne.s32.totalorder %s86, %s88
      %p92 = scmp.eq.s32.totalorder %s17, 0
      %p93 = por %p91, %p92
      %p94 = scmp.ne.s32.totalorder %s86, %s88
      %p95 = scmp.eq.s32.totalorder %s22, 1
      %p96 = por %p94, %p95
      %p97 = scmp.ne.s32.totalorder %s88, %s89
      %p98 = scmp.eq.s32.totalorder %s22, 0
      %p99 = por %p97, %p98
      %p100 = scmp.ne.s32.totalorder %s88, %s89
      %p101 = scmp.eq.s32.totalorder %s23, 1
      %p102 = por %p100, %p101
      %p104 = scmp.ne.s32.totalorder %s89, %s103
      %p105 = scmp.eq.s32.totalorder %s23, 0
      %p106 = por %p104, %p105
      %s107 = ssub.s32 %s24, %s36
      %s108 = ssub.s32 %s25, %s32
      %s109 = sor.u32 %s107, %s108
      %p110 = scmp.eq.s32.totalorder %s109, 0
      %s112 = sadd.s32 %s111, 1
      %s113 = scalar_select %p110, %s111, %s112
      %p116 = pneg %p110
      %p117 = scmp.eq.s32.totalorder %s17, 1
      %p118 = por %p116, %p117
      %p119 = scmp.ne.s32.totalorder %s111, %s114
      %p120 = scmp.eq.s32.totalorder %s17, 0
      %p121 = por %p119, %p120
      %p122 = scmp.ne.s32.totalorder %s111, %s114
      %p123 = scmp.eq.s32.totalorder %s22, 1
      %p124 = por %p122, %p123
      %p125 = scmp.ne.s32.totalorder %s114, %s115
      %p126 = scmp.eq.s32.totalorder %s22, 0
      %p127 = por %p125, %p126
      %p128 = scmp.ne.s32.totalorder %s114, %s115
      %p129 = scmp.eq.s32.totalorder %s23, 1
      %p130 = por %p128, %p129
      %p132 = scmp.ne.s32.totalorder %s115, %s131
      %p133 = scmp.eq.s32.totalorder %s23, 0
      %p134 = por %p132, %p133
      %s135 = ssub.s32 %s24, %s36
      %s136 = ssub.s32 %s25, %s32
      %s137 = sor.u32 %s135, %s136
      %p138 = scmp.eq.s32.totalorder %s137, 0
      %s140 = sadd.s32 %s139, 1
      %s141 = scalar_select %p138, %s139, %s140
      %p144 = pneg %p138
      %p145 = scmp.eq.s32.totalorder %s17, 1
      %p146 = por %p144, %p145
      %p147 = scmp.ne.s32.totalorder %s139, %s142
      %p148 = scmp.eq.s32.totalorder %s17, 0
      %p149 = por %p147, %p148
      %p150 = scmp.ne.s32.totalorder %s139, %s142
      %p151 = scmp.eq.s32.totalorder %s22, 1
      %p152 = por %p150, %p151
      %p153 = scmp.ne.s32.totalorder %s142, %s143
      %p154 = scmp.eq.s32.totalorder %s22, 0
      %p155 = por %p153, %p154
      %p156 = scmp.ne.s32.totalorder %s142, %s143
      %p157 = scmp.eq.s32.totalorder %s23, 1
      %p158 = por %p156, %p157
      %p160 = scmp.ne.s32.totalorder %s143, %s159
      %p161 = scmp.eq.s32.totalorder %s23, 0
      %p162 = por %p160, %p161
      %p163 = scmp.le.s32.totalorder 1, %s17
      %p164 = scmp.lt.s32.totalorder %s17, 3
      %p165 = pnand %p163, %p164
      %p166 = pneg %p165
      // Predicated region
      $region9: #{tpu_custom_call.1} parent=5 // pred_check
        _
      $region10: #{tpu_custom_call.1} parent=5 // pred_check_branch
        %168 = sbr.rel (%p165) target = $region12
      $region11: #{tpu_custom_call.1} parent=5 // pred_region
        %s169 = ssub.s32 %s17, 1
        // Predicated region
        $region13: #{tpu_custom_call.1} parent=11 // pred_check
          %p170 = pneg %p78
        $region14: #{tpu_custom_call.1} parent=11 // pred_check_branch
          %172 = sbr.rel (%p170) target = $region16
        $region15: #{tpu_custom_call.1} parent=11 // pred_region
          _
        $region16: #{tpu_custom_call.1} parent=11 // pred_fallthru
          _
        // Predicated region
        $region17: #{tpu_custom_call.1} parent=11 // pred_check
          %p173 = pneg %p99
        $region18: #{tpu_custom_call.1} parent=11 // pred_check_branch
          %175 = sbr.rel (%p173) target = $region20
        $region19: #{tpu_custom_call.1} parent=11 // pred_region
          _
        $region20: #{tpu_custom_call.1} parent=11 // pred_fallthru
          _
      $region12: #{tpu_custom_call.1} parent=5 // pred_fallthru
        _
      %p176 = scmp.lt.s32.totalorder %s17, 2
      // Predicated region
      $region21: #{tpu_custom_call.1} parent=5 // pred_check
        %p177 = pneg %p176
      $region22: #{tpu_custom_call.1} parent=5 // pred_check_branch
        %179 = sbr.rel (%p177) target = $region24
      $region23: #{tpu_custom_call.1} parent=5 // pred_region
        // Predicated region
        $region25: #{tpu_custom_call.1} parent=23 // pred_check
          %p180 = pneg %p51
        $region26: #{tpu_custom_call.1} parent=23 // pred_check_branch
          %182 = sbr.rel (%p180) target = $region28
        $region27: #{tpu_custom_call.1} parent=23 // pred_region
          %s183 = sadd.s32 %s24, %s25
          %p184 = scmp.lt.s32.totalorder %s183, 1
          %s185 = scalar_select %p184, %s183, 1
          %s186 = smul.addr %s185, 54
          %s187 = smul.addr %s186, 4
          %s188 = scalar_lea.vmem %s0, %s187
          %s189 = sadd.s32 %s24, %s25
        $region28: #{tpu_custom_call.1} parent=23 // pred_fallthru
          _
      $region24: #{tpu_custom_call.1} parent=5 // pred_fallthru
        _
      %p190 = scmp.le.s32.totalorder 1, %s17
      %p191 = scmp.lt.s32.totalorder %s17, 3
      %p192 = pnand %p190, %p191
      %p193 = pneg %p192
      // Predicated region
      $region29: #{tpu_custom_call.1} parent=5 // pred_check
        _
      $region30: #{tpu_custom_call.1} parent=5 // pred_check_branch
        %195 = sbr.rel (%p192) target = $region32
      $region31: #{tpu_custom_call.1} parent=5 // pred_region
        %s196 = ssub.s32 %s17, 1
        %s197 = sadd.s32 %s26, %s27
        %p198 = scmp.lt.s32.totalorder %s197, 1
        %s199 = scalar_select %p198, %s197, 1
        %s200 = smul.addr %s199, 54
        %s201 = smul.addr %s200, 4
        %s202 = scalar_lea.vmem %s0, %s201
        %p203 = pneg %p57
        %p204 = pneg %p54
        %p205 = pneg %p78
        %p206 = pneg %p75
        %p207 = pneg %p99
        %p208 = pneg %p96
        %p209 = pneg %p127
        %p210 = pneg %p124
        %s211 = sand.u32 %s114, 1
        %s212 = scalar_lea.sflag [#allocation3], %s211
        %s213 = sand.u32 %s114, 1
        %s214 = smul.addr %s213, 128
        %s215 = scalar_lea.vmem [#allocation2], %s214
        %p216 = pneg %p155
        %p217 = pneg %p152
        %s218 = sand.u32 %s142, 1
        %s219 = scalar_lea.sflag [#allocation5], %s218
        %s220 = sand.u32 %s142, 1
        %s221 = smul.addr %s220, 16
        %s222 = scalar_lea.vmem [#allocation4], %s221
        %s223 = sadd.s32 %s26, %s27
        %p224 = scmp.lt.s32.totalorder %s223, 1
        %s225 = scalar_select %p224, %s223, 1
        %s226 = smul.addr %s225, 54
        %s227 = smul.addr %s226, 4
        %s228 = scalar_lea.vmem %s0, %s227
        %s229 = sadd.s32 %s26, %s27
        %s230 = smul.u32 16, %s27
        %s231 = smul.u32 2, %s27
        %v233 = vld [vmem:[%s228] sm:$0xf]
        %v234 = vld [vmem:[%s228 + $0x4] sm:$0xf]
        %v235 = vld [vmem:[%s228 + $0x8] sm:$0x1]
        %v236 = vld [vmem:[%s228 + $0xc] sm:$0xf]
        %v237 = vld [vmem:[%s228 + $0x10] sm:$0xf]
        %v238 = vld [vmem:[%s228 + $0x14] sm:$0x1]
        %v239 = vld [vmem:[%s228 + $0x18] sm:$0xf]
        %v240 = vld [vmem:[%s228 + $0x1c] sm:$0xf]
        %v241 = vld [vmem:[%s228 + $0x20] sm:$0x1]
        %v242 = vld [vmem:[%s228 + $0x24] sm:$0xf]
        %v243 = vld [vmem:[%s228 + $0x28] sm:$0xf]
        %v244 = vld [vmem:[%s228 + $0x2c] sm:$0x1]
        %v245 = vld [vmem:[%s228 + $0x30] sm:$0xf]
        %v246 = vld [vmem:[%s228 + $0x34] sm:$0xf]
        %v247 = vld [vmem:[%s228 + $0x38] sm:$0x1]
        %v248 = vld [vmem:[%s228 + $0x3c] sm:$0xf]
        %v249 = vld [vmem:[%s228 + $0x40] sm:$0xf]
        %v250 = vld [vmem:[%s228 + $0x44] sm:$0x1]
        %v251 = vld [vmem:[%s228 + $0x48] sm:$0xf]
        %v252 = vld [vmem:[%s228 + $0x4c] sm:$0xf]
        %v253 = vld [vmem:[%s228 + $0x50] sm:$0x1]
        %v254 = vld [vmem:[%s228 + $0x54] sm:$0xf]
        %v255 = vld [vmem:[%s228 + $0x58] sm:$0xf]
        %v256 = vld [vmem:[%s228 + $0x5c] sm:$0x1]
        %v257 = vld [vmem:[%s228 + $0x60] sm:$0xf]
        %v258 = vld [vmem:[%s228 + $0x64] sm:$0xf]
        %v259 = vld [vmem:[%s228 + $0x68] sm:$0x1]
        %v260 = vld [vmem:[%s228 + $0x6c] sm:$0xf]
        %v261 = vld [vmem:[%s228 + $0x70] sm:$0xf]
        %v262 = vld [vmem:[%s228 + $0x74] sm:$0x1]
        %v263 = vld [vmem:[%s228 + $0x78] sm:$0xf]
        %v264 = vld [vmem:[%s228 + $0x7c] sm:$0xf]
        %v265 = vld [vmem:[%s228 + $0x80] sm:$0x1]
        %v266 = vld [vmem:[%s228 + $0x84] sm:$0xf]
        %v267 = vld [vmem:[%s228 + $0x88] sm:$0xf]
        %v268 = vld [vmem:[%s228 + $0x8c] sm:$0x1]
        %v269 = vld [vmem:[%s228 + $0x90] sm:$0xf]
        %v270 = vld [vmem:[%s228 + $0x94] sm:$0xf]
        %v271 = vld [vmem:[%s228 + $0x98] sm:$0x1]
        %v272 = vld [vmem:[%s228 + $0x9c] sm:$0xf]
        %v273 = vld [vmem:[%s228 + $0xa0] sm:$0xf]
        %v274 = vld [vmem:[%s228 + $0xa4] sm:$0x1]
        %v275 = vld [vmem:[%s228 + $0xa8] sm:$0xf]
        %v276 = vld [vmem:[%s228 + $0xac] sm:$0xf]
        %v277 = vld [vmem:[%s228 + $0xb0] sm:$0x1]
        %v278 = vld [vmem:[%s228 + $0xb4] sm:$0xf]
        %v279 = vld [vmem:[%s228 + $0xb8] sm:$0xf]
        %v280 = vld [vmem:[%s228 + $0xbc] sm:$0x1]
        %v281 = vld [vmem:[%s228 + $0xc0] sm:$0xf]
        %v282 = vld [vmem:[%s228 + $0xc4] sm:$0xf]
        %v283 = vld [vmem:[%s228 + $0xc8] sm:$0x1]
        %v284 = vld [vmem:[%s228 + $0xcc] sm:$0xf]
        %v285 = vld [vmem:[%s228 + $0xd0] sm:$0xf]
        %v286 = vld [vmem:[%s228 + $0xd4] sm:$0x1]
        %v287 = vld [vmem:[%s1] sm:$0xf]
        %v288 = vld [vmem:[%s1 + $0x4] sm:$0xf]
        %v289 = vld [vmem:[%s1 + $0x8] sm:$0xf]
        %v290 = vld [vmem:[%s1 + $0xc] sm:$0xf]
        %v291 = vld [vmem:[%s1 + $0x10] sm:$0x3]
        %vm292 = vsmask.f32 3328
        %vm293 = vsmask.f32 7440
        %vm294 = vmor %vm292, %vm293
        %v296 = vshrl.u32 %v233, 16
        %v298 = vrot.slane %v296, 4
        %v299 = vshll.u32 %v233, 16
        %v301 = vrot.slane %v299, 5
        %v302 = vor.u32 %v298, %v301
        %v303 = vrot.slane %v302, 4
        %v305 = vshll.u32 %v234, 16
        %v307 = vrot.slane %v305, 5
        %v308 = vsel %vm294, %v303, %v307
        %v309 = vshrl.u32 %v234, 16
        %v311 = vrot.slane %v309, 4
        %v312 = vor.u32 %v311, %v307
        %v313 = vrot.slane %v312, 4
        %v315 = vshll.u32 %v235, 16
        %v317 = vrot.slane %v315, 5
        %v318 = vsel %vm294, %v313, %v317
        %v320 = vshrl.u32 %v236, 16
        %v322 = vrot.slane %v320, 4
        %v323 = vshll.u32 %v236, 16
        %v325 = vrot.slane %v323, 5
        %v326 = vor.u32 %v322, %v325
        %v327 = vrot.slane %v326, 4
        %v329 = vshll.u32 %v237, 16
        %v331 = vrot.slane %v329, 5
        %v332 = vsel %vm294, %v327, %v331
        %v333 = vshrl.u32 %v237, 16
        %v335 = vrot.slane %v333, 4
        %v336 = vor.u32 %v335, %v331
        %v337 = vrot.slane %v336, 4
        %v339 = vshll.u32 %v238, 16
        %v341 = vrot.slane %v339, 5
        %v342 = vsel %vm294, %v337, %v341
        %v344 = vshrl.u32 %v239, 16
        %v346 = vrot.slane %v344, 4
        %v347 = vshll.u32 %v239, 16
        %v349 = vrot.slane %v347, 5
        %v350 = vor.u32 %v346, %v349
        %v351 = vrot.slane %v350, 4
        %v353 = vshll.u32 %v240, 16
        %v355 = vrot.slane %v353, 5
        %v356 = vsel %vm294, %v351, %v355
        %v357 = vshrl.u32 %v240, 16
        %v359 = vrot.slane %v357, 4
        %v360 = vor.u32 %v359, %v355
        %v361 = vrot.slane %v360, 4
        %v363 = vshll.u32 %v241, 16
        %v365 = vrot.slane %v363, 5
        %v366 = vsel %vm294, %v361, %v365
        %v368 = vshrl.u32 %v242, 16
        %v370 = vrot.slane %v368, 4
        %v371 = vshll.u32 %v242, 16
        %v373 = vrot.slane %v371, 5
        %v374 = vor.u32 %v370, %v373
        %v375 = vrot.slane %v374, 4
        %v377 = vshll.u32 %v243, 16
        %v379 = vrot.slane %v377, 5
        %v380 = vsel %vm294, %v375, %v379
        %v381 = vshrl.u32 %v243, 16
        %v383 = vrot.slane %v381, 4
        %v384 = vor.u32 %v383, %v379
        %v385 = vrot.slane %v384, 4
        %v387 = vshll.u32 %v244, 16
        %v389 = vrot.slane %v387, 5
        %v390 = vsel %vm294, %v385, %v389
        %v392 = vshrl.u32 %v245, 16
        %v394 = vrot.slane %v392, 4
        %v395 = vshll.u32 %v245, 16
        %v397 = vrot.slane %v395, 5
        %v398 = vor.u32 %v394, %v397
        %v399 = vrot.slane %v398, 4
        %v401 = vshll.u32 %v246, 16
        %v403 = vrot.slane %v401, 5
        %v404 = vsel %vm294, %v399, %v403
        %v405 = vshrl.u32 %v246, 16
        %v407 = vrot.slane %v405, 4
        %v408 = vor.u32 %v407, %v403
        %v409 = vrot.slane %v408, 4
        %v411 = vshll.u32 %v247, 16
        %v413 = vrot.slane %v411, 5
        %v414 = vsel %vm294, %v409, %v413
        %v416 = vshrl.u32 %v248, 16
        %v418 = vrot.slane %v416, 4
        %v419 = vshll.u32 %v248, 16
        %v421 = vrot.slane %v419, 5
        %v422 = vor.u32 %v418, %v421
        %v423 = vrot.slane %v422, 4
        %v425 = vshll.u32 %v249, 16
        %v427 = vrot.slane %v425, 5
        %v428 = vsel %vm294, %v423, %v427
        %v429 = vshrl.u32 %v249, 16
        %v431 = vrot.slane %v429, 4
        %v432 = vor.u32 %v431, %v427
        %v433 = vrot.slane %v432, 4
        %v435 = vshll.u32 %v250, 16
        %v437 = vrot.slane %v435, 5
        %v438 = vsel %vm294, %v433, %v437
        %v440 = vshrl.u32 %v251, 16
        %v442 = vrot.slane %v440, 4
        %v443 = vshll.u32 %v251, 16
        %v445 = vrot.slane %v443, 5
        %v446 = vor.u32 %v442, %v445
        %v447 = vrot.slane %v446, 4
        %v449 = vshll.u32 %v252, 16
        %v451 = vrot.slane %v449, 5
        %v452 = vsel %vm294, %v447, %v451
        %v453 = vshrl.u32 %v252, 16
        %v455 = vrot.slane %v453, 4
        %v456 = vor.u32 %v455, %v451
        %v457 = vrot.slane %v456, 4
        %v459 = vshll.u32 %v253, 16
        %v461 = vrot.slane %v459, 5
        %v462 = vsel %vm294, %v457, %v461
        %v464 = vshrl.u32 %v254, 16
        %v466 = vrot.slane %v464, 4
        %v467 = vshll.u32 %v254, 16
        %v469 = vrot.slane %v467, 5
        %v470 = vor.u32 %v466, %v469
        %v471 = vrot.slane %v470, 4
        %v473 = vshll.u32 %v255, 16
        %v475 = vrot.slane %v473, 5
        %v476 = vsel %vm294, %v471, %v475
        %v477 = vshrl.u32 %v255, 16
        %v479 = vrot.slane %v477, 4
        %v480 = vor.u32 %v479, %v475
        %v481 = vrot.slane %v480, 4
        %v483 = vshll.u32 %v256, 16
        %v485 = vrot.slane %v483, 5
        %v486 = vsel %vm294, %v481, %v485
        %v488 = vshrl.u32 %v257, 16
        %v490 = vrot.slane %v488, 4
        %v491 = vshll.u32 %v257, 16
        %v493 = vrot.slane %v491, 5
        %v494 = vor.u32 %v490, %v493
        %v495 = vrot.slane %v494, 4
        %v497 = vshll.u32 %v258, 16
        %v499 = vrot.slane %v497, 5
        %v500 = vsel %vm294, %v495, %v499
        %v501 = vshrl.u32 %v258, 16
        %v503 = vrot.slane %v501, 4
        %v504 = vor.u32 %v503, %v499
        %v505 = vrot.slane %v504, 4
        %v507 = vshll.u32 %v259, 16
        %v509 = vrot.slane %v507, 5
        %v510 = vsel %vm294, %v505, %v509
        %v512 = vshrl.u32 %v260, 16
        %v514 = vrot.slane %v512, 4
        %v515 = vshll.u32 %v260, 16
        %v517 = vrot.slane %v515, 5
        %v518 = vor.u32 %v514, %v517
        %v519 = vrot.slane %v518, 4
        %v521 = vshll.u32 %v261, 16
        %v523 = vrot.slane %v521, 5
        %v524 = vsel %vm294, %v519, %v523
        %v525 = vshrl.u32 %v261, 16
        %v527 = vrot.slane %v525, 4
        %v528 = vor.u32 %v527, %v523
        %v529 = vrot.slane %v528, 4
        %v531 = vshll.u32 %v262, 16
        %v533 = vrot.slane %v531, 5
        %v534 = vsel %vm294, %v529, %v533
        %v536 = vshrl.u32 %v263, 16
        %v538 = vrot.slane %v536, 4
        %v539 = vshll.u32 %v263, 16
        %v541 = vrot.slane %v539, 5
        %v542 = vor.u32 %v538, %v541
        %v543 = vrot.slane %v542, 4
        %v545 = vshll.u32 %v264, 16
        %v547 = vrot.slane %v545, 5
        %v548 = vsel %vm294, %v543, %v547
        %v549 = vshrl.u32 %v264, 16
        %v551 = vrot.slane %v549, 4
        %v552 = vor.u32 %v551, %v547
        %v553 = vrot.slane %v552, 4
        %v555 = vshll.u32 %v265, 16
        %v557 = vrot.slane %v555, 5
        %v558 = vsel %vm294, %v553, %v557
        %v560 = vshrl.u32 %v266, 16
        %v562 = vrot.slane %v560, 4
        %v563 = vshll.u32 %v266, 16
        %v565 = vrot.slane %v563, 5
        %v566 = vor.u32 %v562, %v565
        %v567 = vrot.slane %v566, 4
        %v569 = vshll.u32 %v267, 16
        %v571 = vrot.slane %v569, 5
        %v572 = vsel %vm294, %v567, %v571
        %v573 = vshrl.u32 %v267, 16
        %v575 = vrot.slane %v573, 4
        %v576 = vor.u32 %v575, %v571
        %v577 = vrot.slane %v576, 4
        %v579 = vshll.u32 %v268, 16
        %v581 = vrot.slane %v579, 5
        %v582 = vsel %vm294, %v577, %v581
        %v584 = vshrl.u32 %v269, 16
        %v586 = vrot.slane %v584, 4
        %v587 = vshll.u32 %v269, 16
        %v589 = vrot.slane %v587, 5
        %v590 = vor.u32 %v586, %v589
        %v591 = vrot.slane %v590, 4
        %v593 = vshll.u32 %v270, 16
        %v595 = vrot.slane %v593, 5
        %v596 = vsel %vm294, %v591, %v595
        %v597 = vshrl.u32 %v270, 16
        %v599 = vrot.slane %v597, 4
        %v600 = vor.u32 %v599, %v595
        %v601 = vrot.slane %v600, 4
        %v603 = vshll.u32 %v271, 16
        %v605 = vrot.slane %v603, 5
        %v606 = vsel %vm294, %v601, %v605
        %v608 = vshrl.u32 %v272, 16
        %v610 = vrot.slane %v608, 4
        %v611 = vshll.u32 %v272, 16
        %v613 = vrot.slane %v611, 5
        %v614 = vor.u32 %v610, %v613
        %v615 = vrot.slane %v614, 4
        %v617 = vshll.u32 %v273, 16
        %v619 = vrot.slane %v617, 5
        %v620 = vsel %vm294, %v615, %v619
        %v621 = vshrl.u32 %v273, 16
        %v623 = vrot.slane %v621, 4
        %v624 = vor.u32 %v623, %v619
        %v625 = vrot.slane %v624, 4
        %v627 = vshll.u32 %v274, 16
        %v629 = vrot.slane %v627, 5
        %v630 = vsel %vm294, %v625, %v629
        %v632 = vshrl.u32 %v275, 16
        %v634 = vrot.slane %v632, 4
        %v635 = vshll.u32 %v275, 16
        %v637 = vrot.slane %v635, 5
        %v638 = vor.u32 %v634, %v637
        %v639 = vrot.slane %v638, 4
        %v641 = vshll.u32 %v276, 16
        %v643 = vrot.slane %v641, 5
        %v644 = vsel %vm294, %v639, %v643
        %v645 = vshrl.u32 %v276, 16
        %v647 = vrot.slane %v645, 4
        %v648 = vor.u32 %v647, %v643
        %v649 = vrot.slane %v648, 4
        %v651 = vshll.u32 %v277, 16
        %v653 = vrot.slane %v651, 5
        %v654 = vsel %vm294, %v649, %v653
        %v656 = vshrl.u32 %v278, 16
        %v658 = vrot.slane %v656, 4
        %v659 = vshll.u32 %v278, 16
        %v661 = vrot.slane %v659, 5
        %v662 = vor.u32 %v658, %v661
        %v663 = vrot.slane %v662, 4
        %v665 = vshll.u32 %v279, 16
        %v667 = vrot.slane %v665, 5
        %v668 = vsel %vm294, %v663, %v667
        %v669 = vshrl.u32 %v279, 16
        %v671 = vrot.slane %v669, 4
        %v672 = vor.u32 %v671, %v667
        %v673 = vrot.slane %v672, 4
        %v675 = vshll.u32 %v280, 16
        %v677 = vrot.slane %v675, 5
        %v678 = vsel %vm294, %v673, %v677
        %v679 = vunpack.c.l.b16 %v308
        %v680 = vunpack.c.l.b16 %v318
        %v681 = vunpack.c.l.b16 %v332
        %v682 = vunpack.c.l.b16 %v342
        %v683 = vunpack.c.l.b16 %v356
        %v684 = vunpack.c.l.b16 %v366
        %v685 = vunpack.c.l.b16 %v380
        %v686 = vunpack.c.l.b16 %v390
        %v687 = vunpack.c.l.b16 %v404
        %v688 = vunpack.c.l.b16 %v414
        %v689 = vunpack.c.l.b16 %v428
        %v690 = vunpack.c.l.b16 %v438
        %v691 = vunpack.c.l.b16 %v452
        %v692 = vunpack.c.l.b16 %v462
        %v693 = vunpack.c.l.b16 %v476
        %v694 = vunpack.c.l.b16 %v486
        %v695 = vunpack.c.l.b16 %v500
        %v696 = vunpack.c.l.b16 %v510
        %v697 = vunpack.c.l.b16 %v524
        %v698 = vunpack.c.l.b16 %v534
        %v699 = vunpack.c.l.b16 %v548
        %v700 = vunpack.c.l.b16 %v558
        %v701 = vunpack.c.l.b16 %v572
        %v702 = vunpack.c.l.b16 %v582
        %v703 = vunpack.c.l.b16 %v596
        %v704 = vunpack.c.l.b16 %v606
        %v705 = vunpack.c.l.b16 %v620
        %v706 = vunpack.c.l.b16 %v630
        %v707 = vunpack.c.l.b16 %v644
        %v708 = vunpack.c.l.b16 %v654
        %v709 = vunpack.c.l.b16 %v668
        %v710 = vunpack.c.l.b16 %v678
        %v711 = vpack.c.b16 %v680, %v679
        %v712 = vpack.c.b16 %v682, %v681
        %v713 = vpack.c.b16 %v684, %v683
        %v714 = vpack.c.b16 %v686, %v685
        %v715 = vpack.c.b16 %v688, %v687
        %v716 = vpack.c.b16 %v690, %v689
        %v717 = vpack.c.b16 %v692, %v691
        %v718 = vpack.c.b16 %v694, %v693
        %v719 = vpack.c.b16 %v696, %v695
        %v720 = vpack.c.b16 %v698, %v697
        %v721 = vpack.c.b16 %v700, %v699
        %v722 = vpack.c.b16 %v702, %v701
        %v723 = vpack.c.b16 %v704, %v703
        %v724 = vpack.c.b16 %v706, %v705
        %v725 = vpack.c.b16 %v708, %v707
        %v726 = vpack.c.b16 %v710, %v709
        %v728 = vunpack.c.l.b16 %v287
        %v729 = vpack.c.b16 %v728, %v728
        %v730 = vrot.slane %v729, 2
        %vm731 = vcmask 31744
        %v733 = vsel %vm731, %v711, 0
        %v736 = vsel %vm731, %v712, 0
        %v739 = vsel %vm731, %v713, 0
        %v742 = vsel %vm731, %v714, 0
        %v745 = vsel %vm731, %v715, 0
        %v748 = vsel %vm731, %v716, 0
        %v751 = vsel %vm731, %v717, 0
        %v754 = vsel %vm731, %v718, 0
        %v757 = vsel %vm731, %v719, 0
        %v760 = vsel %vm731, %v720, 0
        %v763 = vsel %vm731, %v721, 0
        %v766 = vsel %vm731, %v722, 0
        %v769 = vsel %vm731, %v723, 0
        %v772 = vsel %vm731, %v724, 0
        %v775 = vsel %vm731, %v725, 0
        %v778 = vsel %vm731, %v726, 0
        %vm780 = vcmask 1041408
        %v782 = vsel %vm780, %v730, 0
        %784 = vmatprep.subr.bf16.mxu0 0
        %785 = vmatpush1.bf16.msra.mxu0 %v782
        %786 = vmatprep.subr.bf16.mxu0 0
        %787 = vmatpush1.bf16.msra.mxu0 0
        %788 = vmatprep.subr.bf16.mxu0 0
        %789 = vmatpush1.bf16.msra.mxu0 0
        %790 = vmatprep.subr.bf16.mxu0 0
        %791 = vmatpush1.bf16.msra.mxu0 0
        %792 = vmatprep.subr.bf16.mxu0 0
        %793 = vmatpush1.bf16.msra.mxu0 0
        %794 = vmatprep.subr.bf16.mxu0 0
        %795 = vmatpush1.bf16.msra.mxu0 0
        %796 = vmatprep.subr.bf16.mxu0 0
        %797 = vmatpush1.bf16.msra.mxu0 0
        %798 = vmatprep.subr.bf16.mxu0 0
        %799 = vmatpush1.bf16.msra.mxu0 0
        %800 = vmatprep.subr.bf16.mxu0 0
        %801 = vmatpush1.bf16.msra.mxu0 0
        %802 = vmatprep.subr.bf16.mxu0 0
        %803 = vmatpush1.bf16.msra.mxu0 0
        %804 = vmatprep.subr.bf16.mxu0 0
        %805 = vmatpush1.bf16.msra.mxu0 0
        %806 = vmatprep.subr.bf16.mxu0 0
        %807 = vmatpush1.bf16.msra.mxu0 0
        %808 = vmatprep.subr.bf16.mxu0 0
        %809 = vmatpush1.bf16.msra.mxu0 0
        %810 = vmatprep.subr.bf16.mxu0 0
        %811 = vmatpush1.bf16.msra.mxu0 0
        %812 = vmatprep.subr.bf16.mxu0 0
        %813 = vmatpush1.bf16.msra.mxu0 0
        %814 = vmatprep.subr.bf16.mxu0 0
        %815 = vmatpush1.bf16.msra.mxu0 0
        %816 = vmatprep.mubr.bf16.mxu0 0
        %817 = vmatmul.mubr.bf16.gmra.mrb[0].mxu0 %v733
        %v818 = vpop.f32.mrb[0].mxu0
        %v819 = vadd.f32 0.0, %v818
        %v820 = vpop.f32.mrb[0].mxu0
        %v821 = vpop.f32.mrb[0].mxu0
        %v822 = vadd.f32 0.0, %v821
        %v823 = vpop.f32.mrb[0].mxu0
        %824 = vmatprep.mubr.bf16.mxu0 0
        %825 = vmatmul.mubr.bf16.gmra.mrb[0].mxu0 %v736
        %v826 = vpop.f32.mrb[0].mxu0
        %v827 = vadd.f32 0.0, %v826
        %v828 = vpop.f32.mrb[0].mxu0
        %v829 = vpop.f32.mrb[0].mxu0
        %v830 = vadd.f32 0.0, %v829
        %v831 = vpop.f32.mrb[0].mxu0
        %832 = vmatprep.mubr.bf16.mxu0 0
        %833 = vmatmul.mubr.bf16.gmra.mrb[0].mxu0 %v739
        %v834 = vpop.f32.mrb[0].mxu0
        %v835 = vadd.f32 0.0, %v834
        %v836 = vpop.f32.mrb[0].mxu0
        %v837 = vpop.f32.mrb[0].mxu0
        %v838 = vadd.f32 0.0, %v837
        %v839 = vpop.f32.mrb[0].mxu0
        %840 = vmatprep.mubr.bf16.mxu0 0
        %841 = vmatmul.mubr.bf16.gmra.mrb[0].mxu0 %v742
        %v842 = vpop.f32.mrb[0].mxu0
        %v843 = vadd.f32 0.0, %v842
        %v844 = vpop.f32.mrb[0].mxu0
        %v845 = vpop.f32.mrb[0].mxu0
        %v846 = vadd.f32 0.0, %v845
        %v847 = vpop.f32.mrb[0].mxu0
        %848 = vmatprep.mubr.bf16.mxu0 0
        %849 = vmatmul.mubr.bf16.gmra.mrb[0].mxu0 %v745
        %v850 = vpop.f32.mrb[0].mxu0
        %v851 = vadd.f32 0.0, %v850
        %v852 = vpop.f32.mrb[0].mxu0
        %v853 = vpop.f32.mrb[0].mxu0
        %v854 = vadd.f32 0.0, %v853
        %v855 = vpop.f32.mrb[0].mxu0
        %856 = vmatprep.mubr.bf16.mxu0 0
        %857 = vmatmul.mubr.bf16.gmra.mrb[0].mxu0 %v748
        %v858 = vpop.f32.mrb[0].mxu0
        %v859 = vadd.f32 0.0, %v858
        %v860 = vpop.f32.mrb[0].mxu0
        %v861 = vpop.f32.mrb[0].mxu0
        %v862 = vadd.f32 0.0, %v861
        %v863 = vpop.f32.mrb[0].mxu0
        %864 = vmatprep.mubr.bf16.mxu0 0
        %865 = vmatmul.mubr.bf16.gmra.mrb[0].mxu0 %v751
        %v866 = vpop.f32.mrb[0].mxu0
        %v867 = vadd.f32 0.0, %v866
        %v868 = vpop.f32.mrb[0].mxu0
        %v869 = vpop.f32.mrb[0].mxu0
        %v870 = vadd.f32 0.0, %v869
        %v871 = vpop.f32.mrb[0].mxu0
        %872 = vmatprep.mubr.bf16.mxu0 0
        %873 = vmatmul.mubr.bf16.gmra.mrb[0].mxu0 %v754
        %v874 = vpop.f32.mrb[0].mxu0
        %v875 = vadd.f32 0.0, %v874
        %v876 = vpop.f32.mrb[0].mxu0
        %v877 = vpop.f32.mrb[0].mxu0
        %v878 = vadd.f32 0.0, %v877
        %v879 = vpop.f32.mrb[0].mxu0
        %880 = vmatprep.mubr.bf16.mxu0 0
        %881 = vmatmul.mubr.bf16.gmra.mrb[0].mxu0 %v757
        %v882 = vpop.f32.mrb[0].mxu0
        %v883 = vadd.f32 0.0, %v882
        %v884 = vpop.f32.mrb[0].mxu0
        %v885 = vpop.f32.mrb[0].mxu0
        %v886 = vadd.f32 0.0, %v885
        %v887 = vpop.f32.mrb[0].mxu0
        %888 = vmatprep.mubr.bf16.mxu0 0
        %889 = vmatmul.mubr.bf16.gmra.mrb[0].mxu0 %v760
        %v890 = vpop.f32.mrb[0].mxu0
        %v891 = vadd.f32 0.0, %v890
        %v892 = vpop.f32.mrb[0].mxu0
        %v893 = vpop.f32.mrb[0].mxu0
        %v894 = vadd.f32 0.0, %v893
        %v895 = vpop.f32.mrb[0].mxu0
        %896 = vmatprep.mubr.bf16.mxu0 0
        %897 = vmatmul.mubr.bf16.gmra.mrb[0].mxu0 %v763
        %v898 = vpop.f32.mrb[0].mxu0
        %v899 = vadd.f32 0.0, %v898
        %v900 = vpop.f32.mrb[0].mxu0
        %v901 = vpop.f32.mrb[0].mxu0
        %v902 = vadd.f32 0.0, %v901
        %v903 = vpop.f32.mrb[0].mxu0
        %904 = vmatprep.mubr.bf16.mxu0 0
        %905 = vmatmul.mubr.bf16.gmra.mrb[0].mxu0 %v766
        %v906 = vpop.f32.mrb[0].mxu0
        %v907 = vadd.f32 0.0, %v906
        %v908 = vpop.f32.mrb[0].mxu0
        %v909 = vpop.f32.mrb[0].mxu0
        %v910 = vadd.f32 0.0, %v909
        %v911 = vpop.f32.mrb[0].mxu0
        %912 = vmatprep.mubr.bf16.mxu0 0
        %913 = vmatmul.mubr.bf16.gmra.mrb[0].mxu0 %v769
        %v914 = vpop.f32.mrb[0].mxu0
        %v915 = vadd.f32 0.0, %v914
        %v916 = vpop.f32.mrb[0].mxu0
        %v917 = vpop.f32.mrb[0].mxu0
        %v918 = vadd.f32 0.0, %v917
        %v919 = vpop.f32.mrb[0].mxu0
        %920 = vmatprep.mubr.bf16.mxu0 0
        %921 = vmatmul.mubr.bf16.gmra.mrb[0].mxu0 %v772
        %v922 = vpop.f32.mrb[0].mxu0
        %v923 = vadd.f32 0.0, %v922
        %v924 = vpop.f32.mrb[0].mxu0
        %v925 = vpop.f32.mrb[0].mxu0
        %v926 = vadd.f32 0.0, %v925
        %v927 = vpop.f32.mrb[0].mxu0
        %928 = vmatprep.mubr.bf16.mxu0 0
        %929 = vmatmul.mubr.bf16.gmra.mrb[0].mxu0 %v775
        %v930 = vpop.f32.mrb[0].mxu0
        %v931 = vadd.f32 0.0, %v930
        %v932 = vpop.f32.mrb[0].mxu0
        %v933 = vpop.f32.mrb[0].mxu0
        %v934 = vadd.f32 0.0, %v933
        %v935 = vpop.f32.mrb[0].mxu0
        %936 = vmatprep.mubr.bf16.mxu0 0
        %937 = vmatmul.mubr.bf16.gmra.mrb[0].mxu0 %v778
        %v938 = vpop.f32.mrb[0].mxu0
        %v939 = vadd.f32 0.0, %v938
        %v940 = vpop.f32.mrb[0].mxu0
        %v941 = vpop.f32.mrb[0].mxu0
        %v942 = vadd.f32 0.0, %v941
        %v943 = vpop.f32.mrb[0].mxu0
        %944 = vdwg.mxu0
        %v977 = vunpack.c.l.b16 %v233
        %v978 = vunpack.c.l.b16 %v234
        %v979 = vunpack.c.l.b16 %v236
        %v980 = vunpack.c.l.b16 %v237
        %v981 = vunpack.c.l.b16 %v239
        %v982 = vunpack.c.l.b16 %v240
        %v983 = vunpack.c.l.b16 %v242
        %v984 = vunpack.c.l.b16 %v243
        %v985 = vunpack.c.l.b16 %v245
        %v986 = vunpack.c.l.b16 %v246
        %v987 = vunpack.c.l.b16 %v248
        %v988 = vunpack.c.l.b16 %v249
        %v989 = vunpack.c.l.b16 %v251
        %v990 = vunpack.c.l.b16 %v252
        %v991 = vunpack.c.l.b16 %v254
        %v992 = vunpack.c.l.b16 %v255
        %v993 = vunpack.c.l.b16 %v257
        %v994 = vunpack.c.l.b16 %v258
        %v995 = vunpack.c.l.b16 %v260
        %v996 = vunpack.c.l.b16 %v261
        %v997 = vunpack.c.l.b16 %v263
        %v998 = vunpack.c.l.b16 %v264
        %v999 = vunpack.c.l.b16 %v266
        %v1000 = vunpack.c.l.b16 %v267
        %v1001 = vunpack.c.l.b16 %v269
        %v1002 = vunpack.c.l.b16 %v270
        %v1003 = vunpack.c.l.b16 %v272
        %v1004 = vunpack.c.l.b16 %v273
        %v1005 = vunpack.c.l.b16 %v275
        %v1006 = vunpack.c.l.b16 %v276
        %v1007 = vunpack.c.l.b16 %v278
        %v1008 = vunpack.c.l.b16 %v279
        %v1009 = vpack.c.b16 %v978, %v977
        %v1010 = vpack.c.b16 %v980, %v979
        %v1011 = vpack.c.b16 %v982, %v981
        %v1012 = vpack.c.b16 %v984, %v983
        %v1013 = vpack.c.b16 %v986, %v985
        %v1014 = vpack.c.b16 %v988, %v987
        %v1015 = vpack.c.b16 %v990, %v989
        %v1016 = vpack.c.b16 %v992, %v991
        %v1017 = vpack.c.b16 %v994, %v993
        %v1018 = vpack.c.b16 %v996, %v995
        %v1019 = vpack.c.b16 %v998, %v997
        %v1020 = vpack.c.b16 %v1000, %v999
        %v1021 = vpack.c.b16 %v1002, %v1001
        %v1022 = vpack.c.b16 %v1004, %v1003
        %v1023 = vpack.c.b16 %v1006, %v1005
        %v1024 = vpack.c.b16 %v1008, %v1007
        %v1026 = vsel %vm731, %v1009, 0
        %v1029 = vsel %vm731, %v1010, 0
        %v1032 = vsel %vm731, %v1011, 0
        %v1035 = vsel %vm731, %v1012, 0
        %v1038 = vsel %vm731, %v1013, 0
        %v1041 = vsel %vm731, %v1014, 0
        %v1044 = vsel %vm731, %v1015, 0
        %v1047 = vsel %vm731, %v1016, 0
        %v1050 = vsel %vm731, %v1017, 0
        %v1053 = vsel %vm731, %v1018, 0
        %v1056 = vsel %vm731, %v1019, 0
        %v1059 = vsel %vm731, %v1020, 0
        %v1062 = vsel %vm731, %v1021, 0
        %v1065 = vsel %vm731, %v1022, 0
        %v1068 = vsel %vm731, %v1023, 0
        %v1071 = vsel %vm731, %v1024, 0
        %v1074 = vsel %vm780, %v287, 0
        %1076 = vmatprep.subr.bf16.mxu0 0
        %1077 = vmatpush1.bf16.msra.mxu0 %v1074
        %1078 = vmatprep.subr.bf16.mxu0 0
        %1079 = vmatpush1.bf16.msra.mxu0 0
        %1080 = vmatprep.subr.bf16.mxu0 0
        %1081 = vmatpush1.bf16.msra.mxu0 0
        %1082 = vmatprep.subr.bf16.mxu0 0
        %1083 = vmatpush1.bf16.msra.mxu0 0
        %1084 = vmatprep.subr.bf16.mxu0 0
        %1085 = vmatpush1.bf16.msra.mxu0 0
        %1086 = vmatprep.subr.bf16.mxu0 0
        %1087 = vmatpush1.bf16.msra.mxu0 0
        %1088 = vmatprep.subr.bf16.mxu0 0
        %1089 = vmatpush1.bf16.msra.mxu0 0
        %1090 = vmatprep.subr.bf16.mxu0 0
        %1091 = vmatpush1.bf16.msra.mxu0 0
        %1092 = vmatprep.subr.bf16.mxu0 0
        %1093 = vmatpush1.bf16.msra.mxu0 0
        %1094 = vmatprep.subr.bf16.mxu0 0
        %1095 = vmatpush1.bf16.msra.mxu0 0
        %1096 = vmatprep.subr.bf16.mxu0 0
        %1097 = vmatpush1.bf16.msra.mxu0 0
        %1098 = vmatprep.subr.bf16.mxu0 0
        %1099 = vmatpush1.bf16.msra.mxu0 0
        %1100 = vmatprep.subr.bf16.mxu0 0
        %1101 = vmatpush1.bf16.msra.mxu0 0
        %1102 = vmatprep.subr.bf16.mxu0 0
        %1103 = vmatpush1.bf16.msra.mxu0 0
        %1104 = vmatprep.subr.bf16.mxu0 0
        %1105 = vmatpush1.bf16.msra.mxu0 0
        %1106 = vmatprep.subr.bf16.mxu0 0
        %1107 = vmatpush1.bf16.msra.mxu0 0
        %1108 = vmatprep.mubr.bf16.mxu0 0
        %1109 = vmatmul.mubr.bf16.gmra.mrb[0].mxu0 %v1026
        %v1110 = vpop.f32.mrb[0].mxu0
        %v1111 = vadd.f32 %v819, %v1110
        %v1112 = vpop.f32.mrb[0].mxu0
        %v1113 = vpop.f32.mrb[0].mxu0
        %v1114 = vadd.f32 %v822, %v1113
        %v1115 = vpop.f32.mrb[0].mxu0
        %1116 = vmatprep.mubr.bf16.mxu0 0
        %1117 = vmatmul.mubr.bf16.gmra.mrb[0].mxu0 %v1029
        %v1118 = vpop.f32.mrb[0].mxu0
        %v1119 = vadd.f32 %v827, %v1118
        %v1120 = vpop.f32.mrb[0].mxu0
        %v1121 = vpop.f32.mrb[0].mxu0
        %v1122 = vadd.f32 %v830, %v1121
        %v1123 = vpop.f32.mrb[0].mxu0
        %1124 = vmatprep.mubr.bf16.mxu0 0
        %1125 = vmatmul.mubr.bf16.gmra.mrb[0].mxu0 %v1032
        %v1126 = vpop.f32.mrb[0].mxu0
        %v1127 = vadd.f32 %v835, %v1126
        %v1128 = vpop.f32.mrb[0].mxu0
        %v1129 = vpop.f32.mrb[0].mxu0
        %v1130 = vadd.f32 %v838, %v1129
        %v1131 = vpop.f32.mrb[0].mxu0
        %1132 = vmatprep.mubr.bf16.mxu0 0
        %1133 = vmatmul.mubr.bf16.gmra.mrb[0].mxu0 %v1035
        %v1134 = vpop.f32.mrb[0].mxu0
        %v1135 = vadd.f32 %v843, %v1134
        %v1136 = vpop.f32.mrb[0].mxu0
        %v1137 = vpop.f32.mrb[0].mxu0
        %v1138 = vadd.f32 %v846, %v1137
        %v1139 = vpop.f32.mrb[0].mxu0
        %1140 = vmatprep.mubr.bf16.mxu0 0
        %1141 = vmatmul.mubr.bf16.gmra.mrb[0].mxu0 %v1038
        %v1142 = vpop.f32.mrb[0].mxu0
        %v1143 = vadd.f32 %v851, %v1142
        %v1144 = vpop.f32.mrb[0].mxu0
        %v1145 = vpop.f32.mrb[0].mxu0
        %v1146 = vadd.f32 %v854, %v1145
        %v1147 = vpop.f32.mrb[0].mxu0
        %1148 = vmatprep.mubr.bf16.mxu0 0
        %1149 = vmatmul.mubr.bf16.gmra.mrb[0].mxu0 %v1041
        %v1150 = vpop.f32.mrb[0].mxu0
        %v1151 = vadd.f32 %v859, %v1150
        %v1152 = vpop.f32.mrb[0].mxu0
        %v1153 = vpop.f32.mrb[0].mxu0
        %v1154 = vadd.f32 %v862, %v1153
        %v1155 = vpop.f32.mrb[0].mxu0
        %1156 = vmatprep.mubr.bf16.mxu0 0
        %1157 = vmatmul.mubr.bf16.gmra.mrb[0].mxu0 %v1044
        %v1158 = vpop.f32.mrb[0].mxu0
        %v1159 = vadd.f32 %v867, %v1158
        %v1160 = vpop.f32.mrb[0].mxu0
        %v1161 = vpop.f32.mrb[0].mxu0
        %v1162 = vadd.f32 %v870, %v1161
        %v1163 = vpop.f32.mrb[0].mxu0
        %1164 = vmatprep.mubr.bf16.mxu0 0
        %1165 = vmatmul.mubr.bf16.gmra.mrb[0].mxu0 %v1047
        %v1166 = vpop.f32.mrb[0].mxu0
        %v1167 = vadd.f32 %v875, %v1166
        %v1168 = vpop.f32.mrb[0].mxu0
        %v1169 = vpop.f32.mrb[0].mxu0
        %v1170 = vadd.f32 %v878, %v1169
        %v1171 = vpop.f32.mrb[0].mxu0
        %1172 = vmatprep.mubr.bf16.mxu0 0
        %1173 = vmatmul.mubr.bf16.gmra.mrb[0].mxu0 %v1050
        %v1174 = vpop.f32.mrb[0].mxu0
        %v1175 = vadd.f32 %v883, %v1174
        %v1176 = vpop.f32.mrb[0].mxu0
        %v1177 = vpop.f32.mrb[0].mxu0
        %v1178 = vadd.f32 %v886, %v1177
        %v1179 = vpop.f32.mrb[0].mxu0
        %1180 = vmatprep.mubr.bf16.mxu0 0
        %1181 = vmatmul.mubr.bf16.gmra.mrb[0].mxu0 %v1053
        %v1182 = vpop.f32.mrb[0].mxu0
        %v1183 = vadd.f32 %v891, %v1182
        %v1184 = vpop.f32.mrb[0].mxu0
        %v1185 = vpop.f32.mrb[0].mxu0
        %v1186 = vadd.f32 %v894, %v1185
        %v1187 = vpop.f32.mrb[0].mxu0
        %1188 = vmatprep.mubr.bf16.mxu0 0
        %1189 = vmatmul.mubr.bf16.gmra.mrb[0].mxu0 %v1056
        %v1190 = vpop.f32.mrb[0].mxu0
        %v1191 = vadd.f32 %v899, %v1190
        %v1192 = vpop.f32.mrb[0].mxu0
        %v1193 = vpop.f32.mrb[0].mxu0
        %v1194 = vadd.f32 %v902, %v1193
        %v1195 = vpop.f32.mrb[0].mxu0
        %1196 = vmatprep.mubr.bf16.mxu0 0
        %1197 = vmatmul.mubr.bf16.gmra.mrb[0].mxu0 %v1059
        %v1198 = vpop.f32.mrb[0].mxu0
        %v1199 = vadd.f32 %v907, %v1198
        %v1200 = vpop.f32.mrb[0].mxu0
        %v1201 = vpop.f32.mrb[0].mxu0
        %v1202 = vadd.f32 %v910, %v1201
        %v1203 = vpop.f32.mrb[0].mxu0
        %1204 = vmatprep.mubr.bf16.mxu0 0
        %1205 = vmatmul.mubr.bf16.gmra.mrb[0].mxu0 %v1062
        %v1206 = vpop.f32.mrb[0].mxu0
        %v1207 = vadd.f32 %v915, %v1206
        %v1208 = vpop.f32.mrb[0].mxu0
        %v1209 = vpop.f32.mrb[0].mxu0
        %v1210 = vadd.f32 %v918, %v1209
        %v1211 = vpop.f32.mrb[0].mxu0
        %1212 = vmatprep.mubr.bf16.mxu0 0
        %1213 = vmatmul.mubr.bf16.gmra.mrb[0].mxu0 %v1065
        %v1214 = vpop.f32.mrb[0].mxu0
        %v1215 = vadd.f32 %v923, %v1214
        %v1216 = vpop.f32.mrb[0].mxu0
        %v1217 = vpop.f32.mrb[0].mxu0
        %v1218 = vadd.f32 %v926, %v1217
        %v1219 = vpop.f32.mrb[0].mxu0
        %1220 = vmatprep.mubr.bf16.mxu0 0
        %1221 = vmatmul.mubr.bf16.gmra.mrb[0].mxu0 %v1068
        %v1222 = vpop.f32.mrb[0].mxu0
        %v1223 = vadd.f32 %v931, %v1222
        %v1224 = vpop.f32.mrb[0].mxu0
        %v1225 = vpop.f32.mrb[0].mxu0
        %v1226 = vadd.f32 %v934, %v1225
        %v1227 = vpop.f32.mrb[0].mxu0
        %1228 = vmatprep.mubr.bf16.mxu0 0
        %1229 = vmatmul.mubr.bf16.gmra.mrb[0].mxu0 %v1071
        %v1230 = vpop.f32.mrb[0].mxu0
        %v1231 = vadd.f32 %v939, %v1230
        %v1232 = vpop.f32.mrb[0].mxu0
        %v1233 = vpop.f32.mrb[0].mxu0
        %v1234 = vadd.f32 %v942, %v1233
        %v1235 = vpop.f32.mrb[0].mxu0
        %1236 = vdwg.mxu0
        %vm1253 = vcmask 1042432
        %vm1254 = vcmask 1046532
        %vm1255 = vmor %vm1253, %vm1254
        %v1256 = vrot.slane %v233, 5
        %v1257 = vrot.slane %v1256, 4
        %v1258 = vrot.slane %v234, 5
        %v1259 = vsel %vm1255, %v1257, %v1258
        %v1260 = vrot.slane %v1258, 4
        %v1261 = vrot.slane %v235, 5
        %v1262 = vsel %vm1255, %v1260, %v1261
        %v1263 = vrot.slane %v236, 5
        %v1264 = vrot.slane %v1263, 4
        %v1265 = vrot.slane %v237, 5
        %v1266 = vsel %vm1255, %v1264, %v1265
        %v1267 = vrot.slane %v1265, 4
        %v1268 = vrot.slane %v238, 5
        %v1269 = vsel %vm1255, %v1267, %v1268
        %v1270 = vrot.slane %v239, 5
        %v1271 = vrot.slane %v1270, 4
        %v1272 = vrot.slane %v240, 5
        %v1273 = vsel %vm1255, %v1271, %v1272
        %v1274 = vrot.slane %v1272, 4
        %v1275 = vrot.slane %v241, 5
        %v1276 = vsel %vm1255, %v1274, %v1275
        %v1277 = vrot.slane %v242, 5
        %v1278 = vrot.slane %v1277, 4
        %v1279 = vrot.slane %v243, 5
        %v1280 = vsel %vm1255, %v1278, %v1279
        %v1281 = vrot.slane %v1279, 4
        %v1282 = vrot.slane %v244, 5
        %v1283 = vsel %vm1255, %v1281, %v1282
        %v1284 = vrot.slane %v245, 5
        %v1285 = vrot.slane %v1284, 4
        %v1286 = vrot.slane %v246, 5
        %v1287 = vsel %vm1255, %v1285, %v1286
        %v1288 = vrot.slane %v1286, 4
        %v1289 = vrot.slane %v247, 5
        %v1290 = vsel %vm1255, %v1288, %v1289
        %v1291 = vrot.slane %v248, 5
        %v1292 = vrot.slane %v1291, 4
        %v1293 = vrot.slane %v249, 5
        %v1294 = vsel %vm1255, %v1292, %v1293
        %v1295 = vrot.slane %v1293, 4
        %v1296 = vrot.slane %v250, 5
        %v1297 = vsel %vm1255, %v1295, %v1296
        %v1298 = vrot.slane %v251, 5
        %v1299 = vrot.slane %v1298, 4
        %v1300 = vrot.slane %v252, 5
        %v1301 = vsel %vm1255, %v1299, %v1300
        %v1302 = vrot.slane %v1300, 4
        %v1303 = vrot.slane %v253, 5
        %v1304 = vsel %vm1255, %v1302, %v1303
        %v1305 = vrot.slane %v254, 5
        %v1306 = vrot.slane %v1305, 4
        %v1307 = vrot.slane %v255, 5
        %v1308 = vsel %vm1255, %v1306, %v1307
        %v1309 = vrot.slane %v1307, 4
        %v1310 = vrot.slane %v256, 5
        %v1311 = vsel %vm1255, %v1309, %v1310
        %v1312 = vrot.slane %v257, 5
        %v1313 = vrot.slane %v1312, 4
        %v1314 = vrot.slane %v258, 5
        %v1315 = vsel %vm1255, %v1313, %v1314
        %v1316 = vrot.slane %v1314, 4
        %v1317 = vrot.slane %v259, 5
        %v1318 = vsel %vm1255, %v1316, %v1317
        %v1319 = vrot.slane %v260, 5
        %v1320 = vrot.slane %v1319, 4
        %v1321 = vrot.slane %v261, 5
        %v1322 = vsel %vm1255, %v1320, %v1321
        %v1323 = vrot.slane %v1321, 4
        %v1324 = vrot.slane %v262, 5
        %v1325 = vsel %vm1255, %v1323, %v1324
        %v1326 = vrot.slane %v263, 5
        %v1327 = vrot.slane %v1326, 4
        %v1328 = vrot.slane %v264, 5
        %v1329 = vsel %vm1255, %v1327, %v1328
        %v1330 = vrot.slane %v1328, 4
        %v1331 = vrot.slane %v265, 5
        %v1332 = vsel %vm1255, %v1330, %v1331
        %v1333 = vrot.slane %v266, 5
        %v1334 = vrot.slane %v1333, 4
        %v1335 = vrot.slane %v267, 5
        %v1336 = vsel %vm1255, %v1334, %v1335
        %v1337 = vrot.slane %v1335, 4
        %v1338 = vrot.slane %v268, 5
        %v1339 = vsel %vm1255, %v1337, %v1338
        %v1340 = vrot.slane %v269, 5
        %v1341 = vrot.slane %v1340, 4
        %v1342 = vrot.slane %v270, 5
        %v1343 = vsel %vm1255, %v1341, %v1342
        %v1344 = vrot.slane %v1342, 4
        %v1345 = vrot.slane %v271, 5
        %v1346 = vsel %vm1255, %v1344, %v1345
        %v1347 = vrot.slane %v272, 5
        %v1348 = vrot.slane %v1347, 4
        %v1349 = vrot.slane %v273, 5
        %v1350 = vsel %vm1255, %v1348, %v1349
        %v1351 = vrot.slane %v1349, 4
        %v1352 = vrot.slane %v274, 5
        %v1353 = vsel %vm1255, %v1351, %v1352
        %v1354 = vrot.slane %v275, 5
        %v1355 = vrot.slane %v1354, 4
        %v1356 = vrot.slane %v276, 5
        %v1357 = vsel %vm1255, %v1355, %v1356
        %v1358 = vrot.slane %v1356, 4
        %v1359 = vrot.slane %v277, 5
        %v1360 = vsel %vm1255, %v1358, %v1359
        %v1361 = vrot.slane %v278, 5
        %v1362 = vrot.slane %v1361, 4
        %v1363 = vrot.slane %v279, 5
        %v1364 = vsel %vm1255, %v1362, %v1363
        %v1365 = vrot.slane %v1363, 4
        %v1366 = vrot.slane %v280, 5
        %v1367 = vsel %vm1255, %v1365, %v1366
        %v1368 = vunpack.c.l.b16 %v1259
        %v1369 = vunpack.c.l.b16 %v1262
        %v1370 = vunpack.c.l.b16 %v1266
        %v1371 = vunpack.c.l.b16 %v1269
        %v1372 = vunpack.c.l.b16 %v1273
        %v1373 = vunpack.c.l.b16 %v1276
        %v1374 = vunpack.c.l.b16 %v1280
        %v1375 = vunpack.c.l.b16 %v1283
        %v1376 = vunpack.c.l.b16 %v1287
        %v1377 = vunpack.c.l.b16 %v1290
        %v1378 = vunpack.c.l.b16 %v1294
        %v1379 = vunpack.c.l.b16 %v1297
        %v1380 = vunpack.c.l.b16 %v1301
        %v1381 = vunpack.c.l.b16 %v1304
        %v1382 = vunpack.c.l.b16 %v1308
        %v1383 = vunpack.c.l.b16 %v1311
        %v1384 = vunpack.c.l.b16 %v1315
        %v1385 = vunpack.c.l.b16 %v1318
        %v1386 = vunpack.c.l.b16 %v1322
        %v1387 = vunpack.c.l.b16 %v1325
        %v1388 = vunpack.c.l.b16 %v1329
        %v1389 = vunpack.c.l.b16 %v1332
        %v1390 = vunpack.c.l.b16 %v1336
        %v1391 = vunpack.c.l.b16 %v1339
        %v1392 = vunpack.c.l.b16 %v1343
        %v1393 = vunpack.c.l.b16 %v1346
        %v1394 = vunpack.c.l.b16 %v1350
        %v1395 = vunpack.c.l.b16 %v1353
        %v1396 = vunpack.c.l.b16 %v1357
        %v1397 = vunpack.c.l.b16 %v1360
        %v1398 = vunpack.c.l.b16 %v1364
        %v1399 = vunpack.c.l.b16 %v1367
        %v1400 = vpack.c.b16 %v1369, %v1368
        %v1401 = vpack.c.b16 %v1371, %v1370
        %v1402 = vpack.c.b16 %v1373, %v1372
        %v1403 = vpack.c.b16 %v1375, %v1374
        %v1404 = vpack.c.b16 %v1377, %v1376
        %v1405 = vpack.c.b16 %v1379, %v1378
        %v1406 = vpack.c.b16 %v1381, %v1380
        %v1407 = vpack.c.b16 %v1383, %v1382
        %v1408 = vpack.c.b16 %v1385, %v1384
        %v1409 = vpack.c.b16 %v1387, %v1386
        %v1410 = vpack.c.b16 %v1389, %v1388
        %v1411 = vpack.c.b16 %v1391, %v1390
        %v1412 = vpack.c.b16 %v1393, %v1392
        %v1413 = vpack.c.b16 %v1395, %v1394
        %v1414 = vpack.c.b16 %v1397, %v1396
        %v1415 = vpack.c.b16 %v1399, %v1398
        %v1417 = vsel %vm731, %v1400, 0
        %v1420 = vsel %vm731, %v1401, 0
        %v1423 = vsel %vm731, %v1402, 0
        %v1426 = vsel %vm731, %v1403, 0
        %v1429 = vsel %vm731, %v1404, 0
        %v1432 = vsel %vm731, %v1405, 0
        %v1435 = vsel %vm731, %v1406, 0
        %v1438 = vsel %vm731, %v1407, 0
        %v1441 = vsel %vm731, %v1408, 0
        %v1444 = vsel %vm731, %v1409, 0
        %v1447 = vsel %vm731, %v1410, 0
        %v1450 = vsel %vm731, %v1411, 0
        %v1453 = vsel %vm731, %v1412, 0
        %v1456 = vsel %vm731, %v1413, 0
        %v1459 = vsel %vm731, %v1414, 0
        %v1462 = vsel %vm731, %v1415, 0
        %v1465 = vsel %vm780, %v288, 0
        %1467 = vmatprep.subr.bf16.mxu0 0
        %1468 = vmatpush1.bf16.msra.mxu0 %v1465
        %1469 = vmatprep.subr.bf16.mxu0 0
        %1470 = vmatpush1.bf16.msra.mxu0 0
        %1471 = vmatprep.subr.bf16.mxu0 0
        %1472 = vmatpush1.bf16.msra.mxu0 0
        %1473 = vmatprep.subr.bf16.mxu0 0
        %1474 = vmatpush1.bf16.msra.mxu0 0
        %1475 = vmatprep.subr.bf16.mxu0 0
        %1476 = vmatpush1.bf16.msra.mxu0 0
        %1477 = vmatprep.subr.bf16.mxu0 0
        %1478 = vmatpush1.bf16.msra.mxu0 0
        %1479 = vmatprep.subr.bf16.mxu0 0
        %1480 = vmatpush1.bf16.msra.mxu0 0
        %1481 = vmatprep.subr.bf16.mxu0 0
        %1482 = vmatpush1.bf16.msra.mxu0 0
        %1483 = vmatprep.subr.bf16.mxu0 0
        %1484 = vmatpush1.bf16.msra.mxu0 0
        %1485 = vmatprep.subr.bf16.mxu0 0
        %1486 = vmatpush1.bf16.msra.mxu0 0
        %1487 = vmatprep.subr.bf16.mxu0 0
        %1488 = vmatpush1.bf16.msra.mxu0 0
        %1489 = vmatprep.subr.bf16.mxu0 0
        %1490 = vmatpush1.bf16.msra.mxu0 0
        %1491 = vmatprep.subr.bf16.mxu0 0
        %1492 = vmatpush1.bf16.msra.mxu0 0
        %1493 = vmatprep.subr.bf16.mxu0 0
        %1494 = vmatpush1.bf16.msra.mxu0 0
        %1495 = vmatprep.subr.bf16.mxu0 0
        %1496 = vmatpush1.bf16.msra.mxu0 0
        %1497 = vmatprep.subr.bf16.mxu0 0
        %1498 = vmatpush1.bf16.msra.mxu0 0
        %1499 = vmatprep.mubr.bf16.mxu0 0
        %1500 = vmatmul.mubr.bf16.gmra.mrb[0].mxu0 %v1417
        %v1501 = vpop.f32.mrb[0].mxu0
        %v1502 = vadd.f32 0.0, %v1501
        %v1503 = vpop.f32.mrb[0].mxu0
        %v1504 = vpop.f32.mrb[0].mxu0
        %v1505 = vadd.f32 0.0, %v1504
        %v1506 = vpop.f32.mrb[0].mxu0
        %1507 = vmatprep.mubr.bf16.mxu0 0
        %1508 = vmatmul.mubr.bf16.gmra.mrb[0].mxu0 %v1420
        %v1509 = vpop.f32.mrb[0].mxu0
        %v1510 = vadd.f32 0.0, %v1509
        %v1511 = vpop.f32.mrb[0].mxu0
        %v1512 = vpop.f32.mrb[0].mxu0
        %v1513 = vadd.f32 0.0, %v1512
        %v1514 = vpop.f32.mrb[0].mxu0
        %1515 = vmatprep.mubr.bf16.mxu0 0
        %1516 = vmatmul.mubr.bf16.gmra.mrb[0].mxu0 %v1423
        %v1517 = vpop.f32.mrb[0].mxu0
        %v1518 = vadd.f32 0.0, %v1517
        %v1519 = vpop.f32.mrb[0].mxu0
        %v1520 = vpop.f32.mrb[0].mxu0
        %v1521 = vadd.f32 0.0, %v1520
        %v1522 = vpop.f32.mrb[0].mxu0
        %1523 = vmatprep.mubr.bf16.mxu0 0
        %1524 = vmatmul.mubr.bf16.gmra.mrb[0].mxu0 %v1426
        %v1525 = vpop.f32.mrb[0].mxu0
        %v1526 = vadd.f32 0.0, %v1525
        %v1527 = vpop.f32.mrb[0].mxu0
        %v1528 = vpop.f32.mrb[0].mxu0
        %v1529 = vadd.f32 0.0, %v1528
        %v1530 = vpop.f32.mrb[0].mxu0
        %1531 = vmatprep.mubr.bf16.mxu0 0
        %1532 = vmatmul.mubr.bf16.gmra.mrb[0].mxu0 %v1429
        %v1533 = vpop.f32.mrb[0].mxu0
        %v1534 = vadd.f32 0.0, %v1533
        %v1535 = vpop.f32.mrb[0].mxu0
        %v1536 = vpop.f32.mrb[0].mxu0
        %v1537 = vadd.f32 0.0, %v1536
        %v1538 = vpop.f32.mrb[0].mxu0
        %1539 = vmatprep.mubr.bf16.mxu0 0
        %1540 = vmatmul.mubr.bf16.gmra.mrb[0].mxu0 %v1432
        %v1541 = vpop.f32.mrb[0].mxu0
        %v1542 = vadd.f32 0.0, %v1541
        %v1543 = vpop.f32.mrb[0].mxu0
        %v1544 = vpop.f32.mrb[0].mxu0
        %v1545 = vadd.f32 0.0, %v1544
        %v1546 = vpop.f32.mrb[0].mxu0
        %1547 = vmatprep.mubr.bf16.mxu0 0
        %1548 = vmatmul.mubr.bf16.gmra.mrb[0].mxu0 %v1435
        %v1549 = vpop.f32.mrb[0].mxu0
        %v1550 = vadd.f32 0.0, %v1549
        %v1551 = vpop.f32.mrb[0].mxu0
        %v1552 = vpop.f32.mrb[0].mxu0
        %v1553 = vadd.f32 0.0, %v1552
        %v1554 = vpop.f32.mrb[0].mxu0
        %1555 = vmatprep.mubr.bf16.mxu0 0
        %1556 = vmatmul.mubr.bf16.gmra.mrb[0].mxu0 %v1438
        %v1557 = vpop.f32.mrb[0].mxu0
        %v1558 = vadd.f32 0.0, %v1557
        %v1559 = vpop.f32.mrb[0].mxu0
        %v1560 = vpop.f32.mrb[0].mxu0
        %v1561 = vadd.f32 0.0, %v1560
        %v1562 = vpop.f32.mrb[0].mxu0
        %1563 = vmatprep.mubr.bf16.mxu0 0
        %1564 = vmatmul.mubr.bf16.gmra.mrb[0].mxu0 %v1441
        %v1565 = vpop.f32.mrb[0].mxu0
        %v1566 = vadd.f32 0.0, %v1565
        %v1567 = vpop.f32.mrb[0].mxu0
        %v1568 = vpop.f32.mrb[0].mxu0
        %v1569 = vadd.f32 0.0, %v1568
        %v1570 = vpop.f32.mrb[0].mxu0
        %1571 = vmatprep.mubr.bf16.mxu0 0
        %1572 = vmatmul.mubr.bf16.gmra.mrb[0].mxu0 %v1444
        %v1573 = vpop.f32.mrb[0].mxu0
        %v1574 = vadd.f32 0.0, %v1573
        %v1575 = vpop.f32.mrb[0].mxu0
        %v1576 = vpop.f32.mrb[0].mxu0
        %v1577 = vadd.f32 0.0, %v1576
        %v1578 = vpop.f32.mrb[0].mxu0
        %1579 = vmatprep.mubr.bf16.mxu0 0
        %1580 = vmatmul.mubr.bf16.gmra.mrb[0].mxu0 %v1447
        %v1581 = vpop.f32.mrb[0].mxu0
        %v1582 = vadd.f32 0.0, %v1581
        %v1583 = vpop.f32.mrb[0].mxu0
        %v1584 = vpop.f32.mrb[0].mxu0
        %v1585 = vadd.f32 0.0, %v1584
        %v1586 = vpop.f32.mrb[0].mxu0
        %1587 = vmatprep.mubr.bf16.mxu0 0
        %1588 = vmatmul.mubr.bf16.gmra.mrb[0].mxu0 %v1450
        %v1589 = vpop.f32.mrb[0].mxu0
        %v1590 = vadd.f32 0.0, %v1589
        %v1591 = vpop.f32.mrb[0].mxu0
        %v1592 = vpop.f32.mrb[0].mxu0
        %v1593 = vadd.f32 0.0, %v1592
        %v1594 = vpop.f32.mrb[0].mxu0
        %1595 = vmatprep.mubr.bf16.mxu0 0
        %1596 = vmatmul.mubr.bf16.gmra.mrb[0].mxu0 %v1453
        %v1597 = vpop.f32.mrb[0].mxu0
        %v1598 = vadd.f32 0.0, %v1597
        %v1599 = vpop.f32.mrb[0].mxu0
        %v1600 = vpop.f32.mrb[0].mxu0
        %v1601 = vadd.f32 0.0, %v1600
        %v1602 = vpop.f32.mrb[0].mxu0
        %1603 = vmatprep.mubr.bf16.mxu0 0
        %1604 = vmatmul.mubr.bf16.gmra.mrb[0].mxu0 %v1456
        %v1605 = vpop.f32.mrb[0].mxu0
        %v1606 = vadd.f32 0.0, %v1605
        %v1607 = vpop.f32.mrb[0].mxu0
        %v1608 = vpop.f32.mrb[0].mxu0
        %v1609 = vadd.f32 0.0, %v1608
        %v1610 = vpop.f32.mrb[0].mxu0
        %1611 = vmatprep.mubr.bf16.mxu0 0
        %1612 = vmatmul.mubr.bf16.gmra.mrb[0].mxu0 %v1459
        %v1613 = vpop.f32.mrb[0].mxu0
        %v1614 = vadd.f32 0.0, %v1613
        %v1615 = vpop.f32.mrb[0].mxu0
        %v1616 = vpop.f32.mrb[0].mxu0
        %v1617 = vadd.f32 0.0, %v1616
        %v1618 = vpop.f32.mrb[0].mxu0
        %1619 = vmatprep.mubr.bf16.mxu0 0
        %1620 = vmatmul.mubr.bf16.gmra.mrb[0].mxu0 %v1462
        %v1621 = vpop.f32.mrb[0].mxu0
        %v1622 = vadd.f32 0.0, %v1621
        %v1623 = vpop.f32.mrb[0].mxu0
        %v1624 = vpop.f32.mrb[0].mxu0
        %v1625 = vadd.f32 0.0, %v1624
        %v1626 = vpop.f32.mrb[0].mxu0
        %1627 = vdwg.mxu0
        %v1628 = vadd.f32 %v1111, %v1502
        %v1629 = vadd.f32 %v1114, %v1505
        %v1630 = vadd.f32 %v1119, %v1510
        %v1631 = vadd.f32 %v1122, %v1513
        %v1632 = vadd.f32 %v1127, %v1518
        %v1633 = vadd.f32 %v1130, %v1521
        %v1634 = vadd.f32 %v1135, %v1526
        %v1635 = vadd.f32 %v1138, %v1529
        %v1636 = vadd.f32 %v1143, %v1534
        %v1637 = vadd.f32 %v1146, %v1537
        %v1638 = vadd.f32 %v1151, %v1542
        %v1639 = vadd.f32 %v1154, %v1545
        %v1640 = vadd.f32 %v1159, %v1550
        %v1641 = vadd.f32 %v1162, %v1553
        %v1642 = vadd.f32 %v1167, %v1558
        %v1643 = vadd.f32 %v1170, %v1561
        %v1644 = vadd.f32 %v1175, %v1566
        %v1645 = vadd.f32 %v1178, %v1569
        %v1646 = vadd.f32 %v1183, %v1574
        %v1647 = vadd.f32 %v1186, %v1577
        %v1648 = vadd.f32 %v1191, %v1582
        %v1649 = vadd.f32 %v1194, %v1585
        %v1650 = vadd.f32 %v1199, %v1590
        %v1651 = vadd.f32 %v1202, %v1593
        %v1652 = vadd.f32 %v1207, %v1598
        %v1653 = vadd.f32 %v1210, %v1601
        %v1654 = vadd.f32 %v1215, %v1606
        %v1655 = vadd.f32 %v1218, %v1609
        %v1656 = vadd.f32 %v1223, %v1614
        %v1657 = vadd.f32 %v1226, %v1617
        %v1658 = vadd.f32 %v1231, %v1622
        %v1659 = vadd.f32 %v1234, %v1625
        %v1662 = vunpack.c.l.b16 %v281
        %v1663 = vunpack.c.l.b16 %v282
        %v1664 = vpack.c.b16 %v1663, %v1662
        %v1666 = vunpack.c.l.b16 %v288
        %v1667 = vpack.c.b16 %v1666, %v1666
        %v1668 = vrot.slane %v1667, 2
        %v1670 = vsel %vm731, %v1664, 0
        %v1673 = vsel %vm780, %v1668, 0
        %1675 = vmatprep.subr.bf16.mxu0 0
        %1676 = vmatpush1.bf16.msra.mxu0 %v1673
        %1677 = vmatprep.subr.bf16.mxu0 0
        %1678 = vmatpush1.bf16.msra.mxu0 0
        %1679 = vmatprep.subr.bf16.mxu0 0
        %1680 = vmatpush1.bf16.msra.mxu0 0
        %1681 = vmatprep.subr.bf16.mxu0 0
        %1682 = vmatpush1.bf16.msra.mxu0 0
        %1683 = vmatprep.subr.bf16.mxu0 0
        %1684 = vmatpush1.bf16.msra.mxu0 0
        %1685 = vmatprep.subr.bf16.mxu0 0
        %1686 = vmatpush1.bf16.msra.mxu0 0
        %1687 = vmatprep.subr.bf16.mxu0 0
        %1688 = vmatpush1.bf16.msra.mxu0 0
        %1689 = vmatprep.subr.bf16.mxu0 0
        %1690 = vmatpush1.bf16.msra.mxu0 0
        %1691 = vmatprep.subr.bf16.mxu0 0
        %1692 = vmatpush1.bf16.msra.mxu0 0
        %1693 = vmatprep.subr.bf16.mxu0 0
        %1694 = vmatpush1.bf16.msra.mxu0 0
        %1695 = vmatprep.subr.bf16.mxu0 0
        %1696 = vmatpush1.bf16.msra.mxu0 0
        %1697 = vmatprep.subr.bf16.mxu0 0
        %1698 = vmatpush1.bf16.msra.mxu0 0
        %1699 = vmatprep.subr.bf16.mxu0 0
        %1700 = vmatpush1.bf16.msra.mxu0 0
        %1701 = vmatprep.subr.bf16.mxu0 0
        %1702 = vmatpush1.bf16.msra.mxu0 0
        %1703 = vmatprep.subr.bf16.mxu0 0
        %1704 = vmatpush1.bf16.msra.mxu0 0
        %1705 = vmatprep.subr.bf16.mxu0 0
        %1706 = vmatpush1.bf16.msra.mxu0 0
        %1707 = vmatprep.mubr.bf16.mxu0 0
        %1708 = vmatmul.mubr.bf16.gmra.mrb[0].mxu0 %v1029
        %v1709 = vpop.f32.mrb[0].mxu0
        %v1710 = vadd.f32 0.0, %v1709
        %v1711 = vpop.f32.mrb[0].mxu0
        %v1712 = vpop.f32.mrb[0].mxu0
        %v1713 = vadd.f32 0.0, %v1712
        %v1714 = vpop.f32.mrb[0].mxu0
        %1715 = vmatprep.mubr.bf16.mxu0 0
        %1716 = vmatmul.mubr.bf16.gmra.mrb[0].mxu0 %v1032
        %v1717 = vpop.f32.mrb[0].mxu0
        %v1718 = vadd.f32 0.0, %v1717
        %v1719 = vpop.f32.mrb[0].mxu0
        %v1720 = vpop.f32.mrb[0].mxu0
        %v1721 = vadd.f32 0.0, %v1720
        %v1722 = vpop.f32.mrb[0].mxu0
        %1723 = vmatprep.mubr.bf16.mxu0 0
        %1724 = vmatmul.mubr.bf16.gmra.mrb[0].mxu0 %v1035
        %v1725 = vpop.f32.mrb[0].mxu0
        %v1726 = vadd.f32 0.0, %v1725
        %v1727 = vpop.f32.mrb[0].mxu0
        %v1728 = vpop.f32.mrb[0].mxu0
        %v1729 = vadd.f32 0.0, %v1728
        %v1730 = vpop.f32.mrb[0].mxu0
        %1731 = vmatprep.mubr.bf16.mxu0 0
        %1732 = vmatmul.mubr.bf16.gmra.mrb[0].mxu0 %v1038
        %v1733 = vpop.f32.mrb[0].mxu0
        %v1734 = vadd.f32 0.0, %v1733
        %v1735 = vpop.f32.mrb[0].mxu0
        %v1736 = vpop.f32.mrb[0].mxu0
        %v1737 = vadd.f32 0.0, %v1736
        %v1738 = vpop.f32.mrb[0].mxu0
        %1739 = vmatprep.mubr.bf16.mxu0 0
        %1740 = vmatmul.mubr.bf16.gmra.mrb[0].mxu0 %v1041
        %v1741 = vpop.f32.mrb[0].mxu0
        %v1742 = vadd.f32 0.0, %v1741
        %v1743 = vpop.f32.mrb[0].mxu0
        %v1744 = vpop.f32.mrb[0].mxu0
        %v1745 = vadd.f32 0.0, %v1744
        %v1746 = vpop.f32.mrb[0].mxu0
        %1747 = vmatprep.mubr.bf16.mxu0 0
        %1748 = vmatmul.mubr.bf16.gmra.mrb[0].mxu0 %v1044
        %v1749 = vpop.f32.mrb[0].mxu0
        %v1750 = vadd.f32 0.0, %v1749
        %v1751 = vpop.f32.mrb[0].mxu0
        %v1752 = vpop.f32.mrb[0].mxu0
        %v1753 = vadd.f32 0.0, %v1752
        %v1754 = vpop.f32.mrb[0].mxu0
        %1755 = vmatprep.mubr.bf16.mxu0 0
        %1756 = vmatmul.mubr.bf16.gmra.mrb[0].mxu0 %v1047
        %v1757 = vpop.f32.mrb[0].mxu0
        %v1758 = vadd.f32 0.0, %v1757
        %v1759 = vpop.f32.mrb[0].mxu0
        %v1760 = vpop.f32.mrb[0].mxu0
        %v1761 = vadd.f32 0.0, %v1760
        %v1762 = vpop.f32.mrb[0].mxu0
        %1763 = vmatprep.mubr.bf16.mxu0 0
        %1764 = vmatmul.mubr.bf16.gmra.mrb[0].mxu0 %v1050
        %v1765 = vpop.f32.mrb[0].mxu0
        %v1766 = vadd.f32 0.0, %v1765
        %v1767 = vpop.f32.mrb[0].mxu0
        %v1768 = vpop.f32.mrb[0].mxu0
        %v1769 = vadd.f32 0.0, %v1768
        %v1770 = vpop.f32.mrb[0].mxu0
        %1771 = vmatprep.mubr.bf16.mxu0 0
        %1772 = vmatmul.mubr.bf16.gmra.mrb[0].mxu0 %v1053
        %v1773 = vpop.f32.mrb[0].mxu0
        %v1774 = vadd.f32 0.0, %v1773
        %v1775 = vpop.f32.mrb[0].mxu0
        %v1776 = vpop.f32.mrb[0].mxu0
        %v1777 = vadd.f32 0.0, %v1776
        %v1778 = vpop.f32.mrb[0].mxu0
        %1779 = vmatprep.mubr.bf16.mxu0 0
        %1780 = vmatmul.mubr.bf16.gmra.mrb[0].mxu0 %v1056
        %v1781 = vpop.f32.mrb[0].mxu0
        %v1782 = vadd.f32 0.0, %v1781
        %v1783 = vpop.f32.mrb[0].mxu0
        %v1784 = vpop.f32.mrb[0].mxu0
        %v1785 = vadd.f32 0.0, %v1784
        %v1786 = vpop.f32.mrb[0].mxu0
        %1787 = vmatprep.mubr.bf16.mxu0 0
        %1788 = vmatmul.mubr.bf16.gmra.mrb[0].mxu0 %v1059
        %v1789 = vpop.f32.mrb[0].mxu0
        %v1790 = vadd.f32 0.0, %v1789
        %v1791 = vpop.f32.mrb[0].mxu0
        %v1792 = vpop.f32.mrb[0].mxu0
        %v1793 = vadd.f32 0.0, %v1792
        %v1794 = vpop.f32.mrb[0].mxu0
        %1795 = vmatprep.mubr.bf16.mxu0 0
        %1796 = vmatmul.mubr.bf16.gmra.mrb[0].mxu0 %v1062
        %v1797 = vpop.f32.mrb[0].mxu0
        %v1798 = vadd.f32 0.0, %v1797
        %v1799 = vpop.f32.mrb[0].mxu0
        %v1800 = vpop.f32.mrb[0].mxu0
        %v1801 = vadd.f32 0.0, %v1800
        %v1802 = vpop.f32.mrb[0].mxu0
        %1803 = vmatprep.mubr.bf16.mxu0 0
        %1804 = vmatmul.mubr.bf16.gmra.mrb[0].mxu0 %v1065
        %v1805 = vpop.f32.mrb[0].mxu0
        %v1806 = vadd.f32 0.0, %v1805
        %v1807 = vpop.f32.mrb[0].mxu0
        %v1808 = vpop.f32.mrb[0].mxu0
        %v1809 = vadd.f32 0.0, %v1808
        %v1810 = vpop.f32.mrb[0].mxu0
        %1811 = vmatprep.mubr.bf16.mxu0 0
        %1812 = vmatmul.mubr.bf16.gmra.mrb[0].mxu0 %v1068
        %v1813 = vpop.f32.mrb[0].mxu0
        %v1814 = vadd.f32 0.0, %v1813
        %v1815 = vpop.f32.mrb[0].mxu0
        %v1816 = vpop.f32.mrb[0].mxu0
        %v1817 = vadd.f32 0.0, %v1816
        %v1818 = vpop.f32.mrb[0].mxu0
        %1819 = vmatprep.mubr.bf16.mxu0 0
        %1820 = vmatmul.mubr.bf16.gmra.mrb[0].mxu0 %v1071
        %v1821 = vpop.f32.mrb[0].mxu0
        %v1822 = vadd.f32 0.0, %v1821
        %v1823 = vpop.f32.mrb[0].mxu0
        %v1824 = vpop.f32.mrb[0].mxu0
        %v1825 = vadd.f32 0.0, %v1824
        %v1826 = vpop.f32.mrb[0].mxu0
        %1827 = vmatprep.mubr.bf16.mxu0 0
        %1828 = vmatmul.mubr.bf16.gmra.mrb[0].mxu0 %v1670
        %v1829 = vpop.f32.mrb[0].mxu0
        %v1830 = vadd.f32 0.0, %v1829
        %v1831 = vpop.f32.mrb[0].mxu0
        %v1832 = vpop.f32.mrb[0].mxu0
        %v1833 = vadd.f32 0.0, %v1832
        %v1834 = vpop.f32.mrb[0].mxu0
        %1835 = vdwg.mxu0
        %v1836 = vadd.f32 %v1628, %v1710
        %v1837 = vadd.f32 %v1629, %v1713
        %v1838 = vadd.f32 %v1630, %v1718
        %v1839 = vadd.f32 %v1631, %v1721
        %v1840 = vadd.f32 %v1632, %v1726
        %v1841 = vadd.f32 %v1633, %v1729
        %v1842 = vadd.f32 %v1634, %v1734
        %v1843 = vadd.f32 %v1635, %v1737
        %v1844 = vadd.f32 %v1636, %v1742
        %v1845 = vadd.f32 %v1637, %v1745
        %v1846 = vadd.f32 %v1638, %v1750
        %v1847 = vadd.f32 %v1639, %v1753
        %v1848 = vadd.f32 %v1640, %v1758
        %v1849 = vadd.f32 %v1641, %v1761
        %v1850 = vadd.f32 %v1642, %v1766
        %v1851 = vadd.f32 %v1643, %v1769
        %v1852 = vadd.f32 %v1644, %v1774
        %v1853 = vadd.f32 %v1645, %v1777
        %v1854 = vadd.f32 %v1646, %v1782
        %v1855 = vadd.f32 %v1647, %v1785
        %v1856 = vadd.f32 %v1648, %v1790
        %v1857 = vadd.f32 %v1649, %v1793
        %v1858 = vadd.f32 %v1650, %v1798
        %v1859 = vadd.f32 %v1651, %v1801
        %v1860 = vadd.f32 %v1652, %v1806
        %v1861 = vadd.f32 %v1653, %v1809
        %v1862 = vadd.f32 %v1654, %v1814
        %v1863 = vadd.f32 %v1655, %v1817
        %v1864 = vadd.f32 %v1656, %v1822
        %v1865 = vadd.f32 %v1657, %v1825
        %v1866 = vadd.f32 %v1658, %v1830
        %v1867 = vadd.f32 %v1659, %v1833
        %v1869 = vshrl.u32 %v281, 16
        %v1871 = vrot.slane %v1869, 4
        %v1872 = vshll.u32 %v281, 16
        %v1874 = vrot.slane %v1872, 5
        %v1875 = vor.u32 %v1871, %v1874
        %v1876 = vrot.slane %v1875, 4
        %v1878 = vshll.u32 %v282, 16
        %v1880 = vrot.slane %v1878, 5
        %v1881 = vsel %vm294, %v1876, %v1880
        %v1882 = vshrl.u32 %v282, 16
        %v1884 = vrot.slane %v1882, 4
        %v1885 = vor.u32 %v1884, %v1880
        %v1886 = vrot.slane %v1885, 4
        %v1888 = vshll.u32 %v283, 16
        %v1890 = vrot.slane %v1888, 5
        %v1891 = vsel %vm294, %v1886, %v1890
        %v1892 = vunpack.c.l.b16 %v1881
        %v1893 = vunpack.c.l.b16 %v1891
        %v1894 = vpack.c.b16 %v1893, %v1892
        %v1896 = vsel %vm731, %v1894, 0
        %v1899 = vsel %vm780, %v289, 0
        %1901 = vmatprep.subr.bf16.mxu0 0
        %1902 = vmatpush1.bf16.msra.mxu0 %v1899
        %1903 = vmatprep.subr.bf16.mxu0 0
        %1904 = vmatpush1.bf16.msra.mxu0 0
        %1905 = vmatprep.subr.bf16.mxu0 0
        %1906 = vmatpush1.bf16.msra.mxu0 0
        %1907 = vmatprep.subr.bf16.mxu0 0
        %1908 = vmatpush1.bf16.msra.mxu0 0
        %1909 = vmatprep.subr.bf16.mxu0 0
        %1910 = vmatpush1.bf16.msra.mxu0 0
        %1911 = vmatprep.subr.bf16.mxu0 0
        %1912 = vmatpush1.bf16.msra.mxu0 0
        %1913 = vmatprep.subr.bf16.mxu0 0
        %1914 = vmatpush1.bf16.msra.mxu0 0
        %1915 = vmatprep.subr.bf16.mxu0 0
        %1916 = vmatpush1.bf16.msra.mxu0 0
        %1917 = vmatprep.subr.bf16.mxu0 0
        %1918 = vmatpush1.bf16.msra.mxu0 0
        %1919 = vmatprep.subr.bf16.mxu0 0
        %1920 = vmatpush1.bf16.msra.mxu0 0
        %1921 = vmatprep.subr.bf16.mxu0 0
        %1922 = vmatpush1.bf16.msra.mxu0 0
        %1923 = vmatprep.subr.bf16.mxu0 0
        %1924 = vmatpush1.bf16.msra.mxu0 0
        %1925 = vmatprep.subr.bf16.mxu0 0
        %1926 = vmatpush1.bf16.msra.mxu0 0
        %1927 = vmatprep.subr.bf16.mxu0 0
        %1928 = vmatpush1.bf16.msra.mxu0 0
        %1929 = vmatprep.subr.bf16.mxu0 0
        %1930 = vmatpush1.bf16.msra.mxu0 0
        %1931 = vmatprep.subr.bf16.mxu0 0
        %1932 = vmatpush1.bf16.msra.mxu0 0
        %1933 = vmatprep.mubr.bf16.mxu0 0
        %1934 = vmatmul.mubr.bf16.gmra.mrb[0].mxu0 %v736
        %v1935 = vpop.f32.mrb[0].mxu0
        %v1936 = vadd.f32 0.0, %v1935
        %v1937 = vpop.f32.mrb[0].mxu0
        %v1938 = vpop.f32.mrb[0].mxu0
        %v1939 = vadd.f32 0.0, %v1938
        %v1940 = vpop.f32.mrb[0].mxu0
        %1941 = vmatprep.mubr.bf16.mxu0 0
        %1942 = vmatmul.mubr.bf16.gmra.mrb[0].mxu0 %v739
        %v1943 = vpop.f32.mrb[0].mxu0
        %v1944 = vadd.f32 0.0, %v1943
        %v1945 = vpop.f32.mrb[0].mxu0
        %v1946 = vpop.f32.mrb[0].mxu0
        %v1947 = vadd.f32 0.0, %v1946
        %v1948 = vpop.f32.mrb[0].mxu0
        %1949 = vmatprep.mubr.bf16.mxu0 0
        %1950 = vmatmul.mubr.bf16.gmra.mrb[0].mxu0 %v742
        %v1951 = vpop.f32.mrb[0].mxu0
        %v1952 = vadd.f32 0.0, %v1951
        %v1953 = vpop.f32.mrb[0].mxu0
        %v1954 = vpop.f32.mrb[0].mxu0
        %v1955 = vadd.f32 0.0, %v1954
        %v1956 = vpop.f32.mrb[0].mxu0
        %1957 = vmatprep.mubr.bf16.mxu0 0
        %1958 = vmatmul.mubr.bf16.gmra.mrb[0].mxu0 %v745
        %v1959 = vpop.f32.mrb[0].mxu0
        %v1960 = vadd.f32 0.0, %v1959
        %v1961 = vpop.f32.mrb[0].mxu0
        %v1962 = vpop.f32.mrb[0].mxu0
        %v1963 = vadd.f32 0.0, %v1962
        %v1964 = vpop.f32.mrb[0].mxu0
        %1965 = vmatprep.mubr.bf16.mxu0 0
        %1966 = vmatmul.mubr.bf16.gmra.mrb[0].mxu0 %v748
        %v1967 = vpop.f32.mrb[0].mxu0
        %v1968 = vadd.f32 0.0, %v1967
        %v1969 = vpop.f32.mrb[0].mxu0
        %v1970 = vpop.f32.mrb[0].mxu0
        %v1971 = vadd.f32 0.0, %v1970
        %v1972 = vpop.f32.mrb[0].mxu0
        %1973 = vmatprep.mubr.bf16.mxu0 0
        %1974 = vmatmul.mubr.bf16.gmra.mrb[0].mxu0 %v751
        %v1975 = vpop.f32.mrb[0].mxu0
        %v1976 = vadd.f32 0.0, %v1975
        %v1977 = vpop.f32.mrb[0].mxu0
        %v1978 = vpop.f32.mrb[0].mxu0
        %v1979 = vadd.f32 0.0, %v1978
        %v1980 = vpop.f32.mrb[0].mxu0
        %1981 = vmatprep.mubr.bf16.mxu0 0
        %1982 = vmatmul.mubr.bf16.gmra.mrb[0].mxu0 %v754
        %v1983 = vpop.f32.mrb[0].mxu0
        %v1984 = vadd.f32 0.0, %v1983
        %v1985 = vpop.f32.mrb[0].mxu0
        %v1986 = vpop.f32.mrb[0].mxu0
        %v1987 = vadd.f32 0.0, %v1986
        %v1988 = vpop.f32.mrb[0].mxu0
        %1989 = vmatprep.mubr.bf16.mxu0 0
        %1990 = vmatmul.mubr.bf16.gmra.mrb[0].mxu0 %v757
        %v1991 = vpop.f32.mrb[0].mxu0
        %v1992 = vadd.f32 0.0, %v1991
        %v1993 = vpop.f32.mrb[0].mxu0
        %v1994 = vpop.f32.mrb[0].mxu0
        %v1995 = vadd.f32 0.0, %v1994
        %v1996 = vpop.f32.mrb[0].mxu0
        %1997 = vmatprep.mubr.bf16.mxu0 0
        %1998 = vmatmul.mubr.bf16.gmra.mrb[0].mxu0 %v760
        %v1999 = vpop.f32.mrb[0].mxu0
        %v2000 = vadd.f32 0.0, %v1999
        %v2001 = vpop.f32.mrb[0].mxu0
        %v2002 = vpop.f32.mrb[0].mxu0
        %v2003 = vadd.f32 0.0, %v2002
        %v2004 = vpop.f32.mrb[0].mxu0
        %2005 = vmatprep.mubr.bf16.mxu0 0
        %2006 = vmatmul.mubr.bf16.gmra.mrb[0].mxu0 %v763
        %v2007 = vpop.f32.mrb[0].mxu0
        %v2008 = vadd.f32 0.0, %v2007
        %v2009 = vpop.f32.mrb[0].mxu0
        %v2010 = vpop.f32.mrb[0].mxu0
        %v2011 = vadd.f32 0.0, %v2010
        %v2012 = vpop.f32.mrb[0].mxu0
        %2013 = vmatprep.mubr.bf16.mxu0 0
        %2014 = vmatmul.mubr.bf16.gmra.mrb[0].mxu0 %v766
        %v2015 = vpop.f32.mrb[0].mxu0
        %v2016 = vadd.f32 0.0, %v2015
        %v2017 = vpop.f32.mrb[0].mxu0
        %v2018 = vpop.f32.mrb[0].mxu0
        %v2019 = vadd.f32 0.0, %v2018
        %v2020 = vpop.f32.mrb[0].mxu0
        %2021 = vmatprep.mubr.bf16.mxu0 0
        %2022 = vmatmul.mubr.bf16.gmra.mrb[0].mxu0 %v769
        %v2023 = vpop.f32.mrb[0].mxu0
        %v2024 = vadd.f32 0.0, %v2023
        %v2025 = vpop.f32.mrb[0].mxu0
        %v2026 = vpop.f32.mrb[0].mxu0
        %v2027 = vadd.f32 0.0, %v2026
        %v2028 = vpop.f32.mrb[0].mxu0
        %2029 = vmatprep.mubr.bf16.mxu0 0
        %2030 = vmatmul.mubr.bf16.gmra.mrb[0].mxu0 %v772
        %v2031 = vpop.f32.mrb[0].mxu0
        %v2032 = vadd.f32 0.0, %v2031
        %v2033 = vpop.f32.mrb[0].mxu0
        %v2034 = vpop.f32.mrb[0].mxu0
        %v2035 = vadd.f32 0.0, %v2034
        %v2036 = vpop.f32.mrb[0].mxu0
        %2037 = vmatprep.mubr.bf16.mxu0 0
        %2038 = vmatmul.mubr.bf16.gmra.mrb[0].mxu0 %v775
        %v2039 = vpop.f32.mrb[0].mxu0
        %v2040 = vadd.f32 0.0, %v2039
        %v2041 = vpop.f32.mrb[0].mxu0
        %v2042 = vpop.f32.mrb[0].mxu0
        %v2043 = vadd.f32 0.0, %v2042
        %v2044 = vpop.f32.mrb[0].mxu0
        %2045 = vmatprep.mubr.bf16.mxu0 0
        %2046 = vmatmul.mubr.bf16.gmra.mrb[0].mxu0 %v778
        %v2047 = vpop.f32.mrb[0].mxu0
        %v2048 = vadd.f32 0.0, %v2047
        %v2049 = vpop.f32.mrb[0].mxu0
        %v2050 = vpop.f32.mrb[0].mxu0
        %v2051 = vadd.f32 0.0, %v2050
        %v2052 = vpop.f32.mrb[0].mxu0
        %2053 = vmatprep.mubr.bf16.mxu0 0
        %2054 = vmatmul.mubr.bf16.gmra.mrb[0].mxu0 %v1896
        %v2055 = vpop.f32.mrb[0].mxu0
        %v2056 = vadd.f32 0.0, %v2055
        %v2057 = vpop.f32.mrb[0].mxu0
        %v2058 = vpop.f32.mrb[0].mxu0
        %v2059 = vadd.f32 0.0, %v2058
        %v2060 = vpop.f32.mrb[0].mxu0
        %2061 = vdwg.mxu0
        %v2062 = vadd.f32 %v1836, %v1936
        %v2063 = vadd.f32 %v1837, %v1939
        %v2064 = vadd.f32 %v1838, %v1944
        %v2065 = vadd.f32 %v1839, %v1947
        %v2066 = vadd.f32 %v1840, %v1952
        %v2067 = vadd.f32 %v1841, %v1955
        %v2068 = vadd.f32 %v1842, %v1960
        %v2069 = vadd.f32 %v1843, %v1963
        %v2070 = vadd.f32 %v1844, %v1968
        %v2071 = vadd.f32 %v1845, %v1971
        %v2072 = vadd.f32 %v1846, %v1976
        %v2073 = vadd.f32 %v1847, %v1979
        %v2074 = vadd.f32 %v1848, %v1984
        %v2075 = vadd.f32 %v1849, %v1987
        %v2076 = vadd.f32 %v1850, %v1992
        %v2077 = vadd.f32 %v1851, %v1995
        %v2078 = vadd.f32 %v1852, %v2000
        %v2079 = vadd.f32 %v1853, %v2003
        %v2080 = vadd.f32 %v1854, %v2008
        %v2081 = vadd.f32 %v1855, %v2011
        %v2082 = vadd.f32 %v1856, %v2016
        %v2083 = vadd.f32 %v1857, %v2019
        %v2084 = vadd.f32 %v1858, %v2024
        %v2085 = vadd.f32 %v1859, %v2027
        %v2086 = vadd.f32 %v1860, %v2032
        %v2087 = vadd.f32 %v1861, %v2035
        %v2088 = vadd.f32 %v1862, %v2040
        %v2089 = vadd.f32 %v1863, %v2043
        %v2090 = vadd.f32 %v1864, %v2048
        %v2091 = vadd.f32 %v1865, %v2051
        %v2092 = vadd.f32 %v1866, %v2056
        %v2093 = vadd.f32 %v1867, %v2059
        %v2095 = vrot.slane %v281, 5
        %v2096 = vrot.slane %v2095, 4
        %v2097 = vrot.slane %v282, 5
        %v2098 = vsel %vm1255, %v2096, %v2097
        %v2099 = vrot.slane %v2097, 4
        %v2100 = vrot.slane %v283, 5
        %v2101 = vsel %vm1255, %v2099, %v2100
        %v2102 = vunpack.c.l.b16 %v2098
        %v2103 = vunpack.c.l.b16 %v2101
        %v2104 = vpack.c.b16 %v2103, %v2102
        %v2106 = vunpack.c.l.b16 %v289
        %v2107 = vpack.c.b16 %v2106, %v2106
        %v2108 = vrot.slane %v2107, 2
        %v2110 = vsel %vm731, %v2104, 0
        %v2113 = vsel %vm780, %v2108, 0
        %2115 = vmatprep.subr.bf16.mxu0 0
        %2116 = vmatpush1.bf16.msra.mxu0 %v2113
        %2117 = vmatprep.subr.bf16.mxu0 0
        %2118 = vmatpush1.bf16.msra.mxu0 0
        %2119 = vmatprep.subr.bf16.mxu0 0
        %2120 = vmatpush1.bf16.msra.mxu0 0
        %2121 = vmatprep.subr.bf16.mxu0 0
        %2122 = vmatpush1.bf16.msra.mxu0 0
        %2123 = vmatprep.subr.bf16.mxu0 0
        %2124 = vmatpush1.bf16.msra.mxu0 0
        %2125 = vmatprep.subr.bf16.mxu0 0
        %2126 = vmatpush1.bf16.msra.mxu0 0
        %2127 = vmatprep.subr.bf16.mxu0 0
        %2128 = vmatpush1.bf16.msra.mxu0 0
        %2129 = vmatprep.subr.bf16.mxu0 0
        %2130 = vmatpush1.bf16.msra.mxu0 0
        %2131 = vmatprep.subr.bf16.mxu0 0
        %2132 = vmatpush1.bf16.msra.mxu0 0
        %2133 = vmatprep.subr.bf16.mxu0 0
        %2134 = vmatpush1.bf16.msra.mxu0 0
        %2135 = vmatprep.subr.bf16.mxu0 0
        %2136 = vmatpush1.bf16.msra.mxu0 0
        %2137 = vmatprep.subr.bf16.mxu0 0
        %2138 = vmatpush1.bf16.msra.mxu0 0
        %2139 = vmatprep.subr.bf16.mxu0 0
        %2140 = vmatpush1.bf16.msra.mxu0 0
        %2141 = vmatprep.subr.bf16.mxu0 0
        %2142 = vmatpush1.bf16.msra.mxu0 0
        %2143 = vmatprep.subr.bf16.mxu0 0
        %2144 = vmatpush1.bf16.msra.mxu0 0
        %2145 = vmatprep.subr.bf16.mxu0 0
        %2146 = vmatpush1.bf16.msra.mxu0 0
        %2147 = vmatprep.mubr.bf16.mxu0 0
        %2148 = vmatmul.mubr.bf16.gmra.mrb[0].mxu0 %v1420
        %v2149 = vpop.f32.mrb[0].mxu0
        %v2150 = vadd.f32 0.0, %v2149
        %v2151 = vpop.f32.mrb[0].mxu0
        %v2152 = vpop.f32.mrb[0].mxu0
        %v2153 = vadd.f32 0.0, %v2152
        %v2154 = vpop.f32.mrb[0].mxu0
        %2155 = vmatprep.mubr.bf16.mxu0 0
        %2156 = vmatmul.mubr.bf16.gmra.mrb[0].mxu0 %v1423
        %v2157 = vpop.f32.mrb[0].mxu0
        %v2158 = vadd.f32 0.0, %v2157
        %v2159 = vpop.f32.mrb[0].mxu0
        %v2160 = vpop.f32.mrb[0].mxu0
        %v2161 = vadd.f32 0.0, %v2160
        %v2162 = vpop.f32.mrb[0].mxu0
        %2163 = vmatprep.mubr.bf16.mxu0 0
        %2164 = vmatmul.mubr.bf16.gmra.mrb[0].mxu0 %v1426
        %v2165 = vpop.f32.mrb[0].mxu0
        %v2166 = vadd.f32 0.0, %v2165
        %v2167 = vpop.f32.mrb[0].mxu0
        %v2168 = vpop.f32.mrb[0].mxu0
        %v2169 = vadd.f32 0.0, %v2168
        %v2170 = vpop.f32.mrb[0].mxu0
        %2171 = vmatprep.mubr.bf16.mxu0 0
        %2172 = vmatmul.mubr.bf16.gmra.mrb[0].mxu0 %v1429
        %v2173 = vpop.f32.mrb[0].mxu0
        %v2174 = vadd.f32 0.0, %v2173
        %v2175 = vpop.f32.mrb[0].mxu0
        %v2176 = vpop.f32.mrb[0].mxu0
        %v2177 = vadd.f32 0.0, %v2176
        %v2178 = vpop.f32.mrb[0].mxu0
        %2179 = vmatprep.mubr.bf16.mxu0 0
        %2180 = vmatmul.mubr.bf16.gmra.mrb[0].mxu0 %v1432
        %v2181 = vpop.f32.mrb[0].mxu0
        %v2182 = vadd.f32 0.0, %v2181
        %v2183 = vpop.f32.mrb[0].mxu0
        %v2184 = vpop.f32.mrb[0].mxu0
        %v2185 = vadd.f32 0.0, %v2184
        %v2186 = vpop.f32.mrb[0].mxu0
        %2187 = vmatprep.mubr.bf16.mxu0 0
        %2188 = vmatmul.mubr.bf16.gmra.mrb[0].mxu0 %v1435
        %v2189 = vpop.f32.mrb[0].mxu0
        %v2190 = vadd.f32 0.0, %v2189
        %v2191 = vpop.f32.mrb[0].mxu0
        %v2192 = vpop.f32.mrb[0].mxu0
        %v2193 = vadd.f32 0.0, %v2192
        %v2194 = vpop.f32.mrb[0].mxu0
        %2195 = vmatprep.mubr.bf16.mxu0 0
        %2196 = vmatmul.mubr.bf16.gmra.mrb[0].mxu0 %v1438
        %v2197 = vpop.f32.mrb[0].mxu0
        %v2198 = vadd.f32 0.0, %v2197
        %v2199 = vpop.f32.mrb[0].mxu0
        %v2200 = vpop.f32.mrb[0].mxu0
        %v2201 = vadd.f32 0.0, %v2200
        %v2202 = vpop.f32.mrb[0].mxu0
        %2203 = vmatprep.mubr.bf16.mxu0 0
        %2204 = vmatmul.mubr.bf16.gmra.mrb[0].mxu0 %v1441
        %v2205 = vpop.f32.mrb[0].mxu0
        %v2206 = vadd.f32 0.0, %v2205
        %v2207 = vpop.f32.mrb[0].mxu0
        %v2208 = vpop.f32.mrb[0].mxu0
        %v2209 = vadd.f32 0.0, %v2208
        %v2210 = vpop.f32.mrb[0].mxu0
        %2211 = vmatprep.mubr.bf16.mxu0 0
        %2212 = vmatmul.mubr.bf16.gmra.mrb[0].mxu0 %v1444
        %v2213 = vpop.f32.mrb[0].mxu0
        %v2214 = vadd.f32 0.0, %v2213
        %v2215 = vpop.f32.mrb[0].mxu0
        %v2216 = vpop.f32.mrb[0].mxu0
        %v2217 = vadd.f32 0.0, %v2216
        %v2218 = vpop.f32.mrb[0].mxu0
        %2219 = vmatprep.mubr.bf16.mxu0 0
        %2220 = vmatmul.mubr.bf16.gmra.mrb[0].mxu0 %v1447
        %v2221 = vpop.f32.mrb[0].mxu0
        %v2222 = vadd.f32 0.0, %v2221
        %v2223 = vpop.f32.mrb[0].mxu0
        %v2224 = vpop.f32.mrb[0].mxu0
        %v2225 = vadd.f32 0.0, %v2224
        %v2226 = vpop.f32.mrb[0].mxu0
        %2227 = vmatprep.mubr.bf16.mxu0 0
        %2228 = vmatmul.mubr.bf16.gmra.mrb[0].mxu0 %v1450
        %v2229 = vpop.f32.mrb[0].mxu0
        %v2230 = vadd.f32 0.0, %v2229
        %v2231 = vpop.f32.mrb[0].mxu0
        %v2232 = vpop.f32.mrb[0].mxu0
        %v2233 = vadd.f32 0.0, %v2232
        %v2234 = vpop.f32.mrb[0].mxu0
        %2235 = vmatprep.mubr.bf16.mxu0 0
        %2236 = vmatmul.mubr.bf16.gmra.mrb[0].mxu0 %v1453
        %v2237 = vpop.f32.mrb[0].mxu0
        %v2238 = vadd.f32 0.0, %v2237
        %v2239 = vpop.f32.mrb[0].mxu0
        %v2240 = vpop.f32.mrb[0].mxu0
        %v2241 = vadd.f32 0.0, %v2240
        %v2242 = vpop.f32.mrb[0].mxu0
        %2243 = vmatprep.mubr.bf16.mxu0 0
        %2244 = vmatmul.mubr.bf16.gmra.mrb[0].mxu0 %v1456
        %v2245 = vpop.f32.mrb[0].mxu0
        %v2246 = vadd.f32 0.0, %v2245
        %v2247 = vpop.f32.mrb[0].mxu0
        %v2248 = vpop.f32.mrb[0].mxu0
        %v2249 = vadd.f32 0.0, %v2248
        %v2250 = vpop.f32.mrb[0].mxu0
        %2251 = vmatprep.mubr.bf16.mxu0 0
        %2252 = vmatmul.mubr.bf16.gmra.mrb[0].mxu0 %v1459
        %v2253 = vpop.f32.mrb[0].mxu0
        %v2254 = vadd.f32 0.0, %v2253
        %v2255 = vpop.f32.mrb[0].mxu0
        %v2256 = vpop.f32.mrb[0].mxu0
        %v2257 = vadd.f32 0.0, %v2256
        %v2258 = vpop.f32.mrb[0].mxu0
        %2259 = vmatprep.mubr.bf16.mxu0 0
        %2260 = vmatmul.mubr.bf16.gmra.mrb[0].mxu0 %v1462
        %v2261 = vpop.f32.mrb[0].mxu0
        %v2262 = vadd.f32 0.0, %v2261
        %v2263 = vpop.f32.mrb[0].mxu0
        %v2264 = vpop.f32.mrb[0].mxu0
        %v2265 = vadd.f32 0.0, %v2264
        %v2266 = vpop.f32.mrb[0].mxu0
        %2267 = vmatprep.mubr.bf16.mxu0 0
        %2268 = vmatmul.mubr.bf16.gmra.mrb[0].mxu0 %v2110
        %v2269 = vpop.f32.mrb[0].mxu0
        %v2270 = vadd.f32 0.0, %v2269
        %v2271 = vpop.f32.mrb[0].mxu0
        %v2272 = vpop.f32.mrb[0].mxu0
        %v2273 = vadd.f32 0.0, %v2272
        %v2274 = vpop.f32.mrb[0].mxu0
        %2275 = vdwg.mxu0
        %v2276 = vadd.f32 %v2062, %v2150
        %v2277 = vadd.f32 %v2063, %v2153
        %v2278 = vadd.f32 %v2064, %v2158
        %v2279 = vadd.f32 %v2065, %v2161
        %v2280 = vadd.f32 %v2066, %v2166
        %v2281 = vadd.f32 %v2067, %v2169
        %v2282 = vadd.f32 %v2068, %v2174
        %v2283 = vadd.f32 %v2069, %v2177
        %v2284 = vadd.f32 %v2070, %v2182
        %v2285 = vadd.f32 %v2071, %v2185
        %v2286 = vadd.f32 %v2072, %v2190
        %v2287 = vadd.f32 %v2073, %v2193
        %v2288 = vadd.f32 %v2074, %v2198
        %v2289 = vadd.f32 %v2075, %v2201
        %v2290 = vadd.f32 %v2076, %v2206
        %v2291 = vadd.f32 %v2077, %v2209
        %v2292 = vadd.f32 %v2078, %v2214
        %v2293 = vadd.f32 %v2079, %v2217
        %v2294 = vadd.f32 %v2080, %v2222
        %v2295 = vadd.f32 %v2081, %v2225
        %v2296 = vadd.f32 %v2082, %v2230
        %v2297 = vadd.f32 %v2083, %v2233
        %v2298 = vadd.f32 %v2084, %v2238
        %v2299 = vadd.f32 %v2085, %v2241
        %v2300 = vadd.f32 %v2086, %v2246
        %v2301 = vadd.f32 %v2087, %v2249
        %v2302 = vadd.f32 %v2088, %v2254
        %v2303 = vadd.f32 %v2089, %v2257
        %v2304 = vadd.f32 %v2090, %v2262
        %v2305 = vadd.f32 %v2091, %v2265
        %v2306 = vadd.f32 %v2092, %v2270
        %v2307 = vadd.f32 %v2093, %v2273
        %v2310 = vunpack.c.l.b16 %v284
        %v2311 = vunpack.c.l.b16 %v285
        %v2312 = vpack.c.b16 %v2311, %v2310
        %v2314 = vsel %vm731, %v2312, 0
        %v2317 = vsel %vm780, %v290, 0
        %2319 = vmatprep.subr.bf16.mxu0 0
        %2320 = vmatpush1.bf16.msra.mxu0 %v2317
        %2321 = vmatprep.subr.bf16.mxu0 0
        %2322 = vmatpush1.bf16.msra.mxu0 0
        %2323 = vmatprep.subr.bf16.mxu0 0
        %2324 = vmatpush1.bf16.msra.mxu0 0
        %2325 = vmatprep.subr.bf16.mxu0 0
        %2326 = vmatpush1.bf16.msra.mxu0 0
        %2327 = vmatprep.subr.bf16.mxu0 0
        %2328 = vmatpush1.bf16.msra.mxu0 0
        %2329 = vmatprep.subr.bf16.mxu0 0
        %2330 = vmatpush1.bf16.msra.mxu0 0
        %2331 = vmatprep.subr.bf16.mxu0 0
        %2332 = vmatpush1.bf16.msra.mxu0 0
        %2333 = vmatprep.subr.bf16.mxu0 0
        %2334 = vmatpush1.bf16.msra.mxu0 0
        %2335 = vmatprep.subr.bf16.mxu0 0
        %2336 = vmatpush1.bf16.msra.mxu0 0
        %2337 = vmatprep.subr.bf16.mxu0 0
        %2338 = vmatpush1.bf16.msra.mxu0 0
        %2339 = vmatprep.subr.bf16.mxu0 0
        %2340 = vmatpush1.bf16.msra.mxu0 0
        %2341 = vmatprep.subr.bf16.mxu0 0
        %2342 = vmatpush1.bf16.msra.mxu0 0
        %2343 = vmatprep.subr.bf16.mxu0 0
        %2344 = vmatpush1.bf16.msra.mxu0 0
        %2345 = vmatprep.subr.bf16.mxu0 0
        %2346 = vmatpush1.bf16.msra.mxu0 0
        %2347 = vmatprep.subr.bf16.mxu0 0
        %2348 = vmatpush1.bf16.msra.mxu0 0
        %2349 = vmatprep.subr.bf16.mxu0 0
        %2350 = vmatpush1.bf16.msra.mxu0 0
        %2351 = vmatprep.mubr.bf16.mxu0 0
        %2352 = vmatmul.mubr.bf16.gmra.mrb[0].mxu0 %v1032
        %v2353 = vpop.f32.mrb[0].mxu0
        %v2354 = vadd.f32 0.0, %v2353
        %v2355 = vpop.f32.mrb[0].mxu0
        %v2356 = vpop.f32.mrb[0].mxu0
        %v2357 = vadd.f32 0.0, %v2356
        %v2358 = vpop.f32.mrb[0].mxu0
        %2359 = vmatprep.mubr.bf16.mxu0 0
        %2360 = vmatmul.mubr.bf16.gmra.mrb[0].mxu0 %v1035
        %v2361 = vpop.f32.mrb[0].mxu0
        %v2362 = vadd.f32 0.0, %v2361
        %v2363 = vpop.f32.mrb[0].mxu0
        %v2364 = vpop.f32.mrb[0].mxu0
        %v2365 = vadd.f32 0.0, %v2364
        %v2366 = vpop.f32.mrb[0].mxu0
        %2367 = vmatprep.mubr.bf16.mxu0 0
        %2368 = vmatmul.mubr.bf16.gmra.mrb[0].mxu0 %v1038
        %v2369 = vpop.f32.mrb[0].mxu0
        %v2370 = vadd.f32 0.0, %v2369
        %v2371 = vpop.f32.mrb[0].mxu0
        %v2372 = vpop.f32.mrb[0].mxu0
        %v2373 = vadd.f32 0.0, %v2372
        %v2374 = vpop.f32.mrb[0].mxu0
        %2375 = vmatprep.mubr.bf16.mxu0 0
        %2376 = vmatmul.mubr.bf16.gmra.mrb[0].mxu0 %v1041
        %v2377 = vpop.f32.mrb[0].mxu0
        %v2378 = vadd.f32 0.0, %v2377
        %v2379 = vpop.f32.mrb[0].mxu0
        %v2380 = vpop.f32.mrb[0].mxu0
        %v2381 = vadd.f32 0.0, %v2380
        %v2382 = vpop.f32.mrb[0].mxu0
        %2383 = vmatprep.mubr.bf16.mxu0 0
        %2384 = vmatmul.mubr.bf16.gmra.mrb[0].mxu0 %v1044
        %v2385 = vpop.f32.mrb[0].mxu0
        %v2386 = vadd.f32 0.0, %v2385
        %v2387 = vpop.f32.mrb[0].mxu0
        %v2388 = vpop.f32.mrb[0].mxu0
        %v2389 = vadd.f32 0.0, %v2388
        %v2390 = vpop.f32.mrb[0].mxu0
        %2391 = vmatprep.mubr.bf16.mxu0 0
        %2392 = vmatmul.mubr.bf16.gmra.mrb[0].mxu0 %v1047
        %v2393 = vpop.f32.mrb[0].mxu0
        %v2394 = vadd.f32 0.0, %v2393
        %v2395 = vpop.f32.mrb[0].mxu0
        %v2396 = vpop.f32.mrb[0].mxu0
        %v2397 = vadd.f32 0.0, %v2396
        %v2398 = vpop.f32.mrb[0].mxu0
        %2399 = vmatprep.mubr.bf16.mxu0 0
        %2400 = vmatmul.mubr.bf16.gmra.mrb[0].mxu0 %v1050
        %v2401 = vpop.f32.mrb[0].mxu0
        %v2402 = vadd.f32 0.0, %v2401
        %v2403 = vpop.f32.mrb[0].mxu0
        %v2404 = vpop.f32.mrb[0].mxu0
        %v2405 = vadd.f32 0.0, %v2404
        %v2406 = vpop.f32.mrb[0].mxu0
        %2407 = vmatprep.mubr.bf16.mxu0 0
        %2408 = vmatmul.mubr.bf16.gmra.mrb[0].mxu0 %v1053
        %v2409 = vpop.f32.mrb[0].mxu0
        %v2410 = vadd.f32 0.0, %v2409
        %v2411 = vpop.f32.mrb[0].mxu0
        %v2412 = vpop.f32.mrb[0].mxu0
        %v2413 = vadd.f32 0.0, %v2412
        %v2414 = vpop.f32.mrb[0].mxu0
        %2415 = vmatprep.mubr.bf16.mxu0 0
        %2416 = vmatmul.mubr.bf16.gmra.mrb[0].mxu0 %v1056
        %v2417 = vpop.f32.mrb[0].mxu0
        %v2418 = vadd.f32 0.0, %v2417
        %v2419 = vpop.f32.mrb[0].mxu0
        %v2420 = vpop.f32.mrb[0].mxu0
        %v2421 = vadd.f32 0.0, %v2420
        %v2422 = vpop.f32.mrb[0].mxu0
        %2423 = vmatprep.mubr.bf16.mxu0 0
        %2424 = vmatmul.mubr.bf16.gmra.mrb[0].mxu0 %v1059
        %v2425 = vpop.f32.mrb[0].mxu0
        %v2426 = vadd.f32 0.0, %v2425
        %v2427 = vpop.f32.mrb[0].mxu0
        %v2428 = vpop.f32.mrb[0].mxu0
        %v2429 = vadd.f32 0.0, %v2428
        %v2430 = vpop.f32.mrb[0].mxu0
        %2431 = vmatprep.mubr.bf16.mxu0 0
        %2432 = vmatmul.mubr.bf16.gmra.mrb[0].mxu0 %v1062
        %v2433 = vpop.f32.mrb[0].mxu0
        %v2434 = vadd.f32 0.0, %v2433
        %v2435 = vpop.f32.mrb[0].mxu0
        %v2436 = vpop.f32.mrb[0].mxu0
        %v2437 = vadd.f32 0.0, %v2436
        %v2438 = vpop.f32.mrb[0].mxu0
        %2439 = vmatprep.mubr.bf16.mxu0 0
        %2440 = vmatmul.mubr.bf16.gmra.mrb[0].mxu0 %v1065
        %v2441 = vpop.f32.mrb[0].mxu0
        %v2442 = vadd.f32 0.0, %v2441
        %v2443 = vpop.f32.mrb[0].mxu0
        %v2444 = vpop.f32.mrb[0].mxu0
        %v2445 = vadd.f32 0.0, %v2444
        %v2446 = vpop.f32.mrb[0].mxu0
        %2447 = vmatprep.mubr.bf16.mxu0 0
        %2448 = vmatmul.mubr.bf16.gmra.mrb[0].mxu0 %v1068
        %v2449 = vpop.f32.mrb[0].mxu0
        %v2450 = vadd.f32 0.0, %v2449
        %v2451 = vpop.f32.mrb[0].mxu0
        %v2452 = vpop.f32.mrb[0].mxu0
        %v2453 = vadd.f32 0.0, %v2452
        %v2454 = vpop.f32.mrb[0].mxu0
        %2455 = vmatprep.mubr.bf16.mxu0 0
        %2456 = vmatmul.mubr.bf16.gmra.mrb[0].mxu0 %v1071
        %v2457 = vpop.f32.mrb[0].mxu0
        %v2458 = vadd.f32 0.0, %v2457
        %v2459 = vpop.f32.mrb[0].mxu0
        %v2460 = vpop.f32.mrb[0].mxu0
        %v2461 = vadd.f32 0.0, %v2460
        %v2462 = vpop.f32.mrb[0].mxu0
        %2463 = vmatprep.mubr.bf16.mxu0 0
        %2464 = vmatmul.mubr.bf16.gmra.mrb[0].mxu0 %v1670
        %v2465 = vpop.f32.mrb[0].mxu0
        %v2466 = vadd.f32 0.0, %v2465
        %v2467 = vpop.f32.mrb[0].mxu0
        %v2468 = vpop.f32.mrb[0].mxu0
        %v2469 = vadd.f32 0.0, %v2468
        %v2470 = vpop.f32.mrb[0].mxu0
        %2471 = vmatprep.mubr.bf16.mxu0 0
        %2472 = vmatmul.mubr.bf16.gmra.mrb[0].mxu0 %v2314
        %v2473 = vpop.f32.mrb[0].mxu0
        %v2474 = vadd.f32 0.0, %v2473
        %v2475 = vpop.f32.mrb[0].mxu0
        %v2476 = vpop.f32.mrb[0].mxu0
        %v2477 = vadd.f32 0.0, %v2476
        %v2478 = vpop.f32.mrb[0].mxu0
        %2479 = vdwg.mxu0
        %v2480 = vadd.f32 %v2276, %v2354
        %v2481 = vadd.f32 %v2277, %v2357
        %v2482 = vadd.f32 %v2278, %v2362
        %v2483 = vadd.f32 %v2279, %v2365
        %v2484 = vadd.f32 %v2280, %v2370
        %v2485 = vadd.f32 %v2281, %v2373
        %v2486 = vadd.f32 %v2282, %v2378
        %v2487 = vadd.f32 %v2283, %v2381
        %v2488 = vadd.f32 %v2284, %v2386
        %v2489 = vadd.f32 %v2285, %v2389
        %v2490 = vadd.f32 %v2286, %v2394
        %v2491 = vadd.f32 %v2287, %v2397
        %v2492 = vadd.f32 %v2288, %v2402
        %v2493 = vadd.f32 %v2289, %v2405
        %v2494 = vadd.f32 %v2290, %v2410
        %v2495 = vadd.f32 %v2291, %v2413
        %v2496 = vadd.f32 %v2292, %v2418
        %v2497 = vadd.f32 %v2293, %v2421
        %v2498 = vadd.f32 %v2294, %v2426
        %v2499 = vadd.f32 %v2295, %v2429
        %v2500 = vadd.f32 %v2296, %v2434
        %v2501 = vadd.f32 %v2297, %v2437
        %v2502 = vadd.f32 %v2298, %v2442
        %v2503 = vadd.f32 %v2299, %v2445
        %v2504 = vadd.f32 %v2300, %v2450
        %v2505 = vadd.f32 %v2301, %v2453
        %v2506 = vadd.f32 %v2302, %v2458
        %v2507 = vadd.f32 %v2303, %v2461
        %v2508 = vadd.f32 %v2304, %v2466
        %v2509 = vadd.f32 %v2305, %v2469
        %v2510 = vadd.f32 %v2306, %v2474
        %v2511 = vadd.f32 %v2307, %v2477
        %v2513 = vshrl.u32 %v284, 16
        %v2515 = vrot.slane %v2513, 4
        %v2516 = vshll.u32 %v284, 16
        %v2518 = vrot.slane %v2516, 5
        %v2519 = vor.u32 %v2515, %v2518
        %v2520 = vrot.slane %v2519, 4
        %v2522 = vshll.u32 %v285, 16
        %v2524 = vrot.slane %v2522, 5
        %v2525 = vsel %vm294, %v2520, %v2524
        %v2526 = vshrl.u32 %v285, 16
        %v2528 = vrot.slane %v2526, 4
        %v2529 = vor.u32 %v2528, %v2524
        %v2530 = vrot.slane %v2529, 4
        %v2532 = vshll.u32 %v286, 16
        %v2534 = vrot.slane %v2532, 5
        %v2535 = vsel %vm294, %v2530, %v2534
        %v2536 = vunpack.c.l.b16 %v2525
        %v2537 = vunpack.c.l.b16 %v2535
        %v2538 = vpack.c.b16 %v2537, %v2536
        %v2540 = vunpack.c.l.b16 %v290
        %v2541 = vpack.c.b16 %v2540, %v2540
        %v2542 = vrot.slane %v2541, 2
        %v2544 = vsel %vm731, %v2538, 0
        %v2547 = vsel %vm780, %v2542, 0
        %2549 = vmatprep.subr.bf16.mxu0 0
        %2550 = vmatpush1.bf16.msra.mxu0 %v2547
        %2551 = vmatprep.subr.bf16.mxu0 0
        %2552 = vmatpush1.bf16.msra.mxu0 0
        %2553 = vmatprep.subr.bf16.mxu0 0
        %2554 = vmatpush1.bf16.msra.mxu0 0
        %2555 = vmatprep.subr.bf16.mxu0 0
        %2556 = vmatpush1.bf16.msra.mxu0 0
        %2557 = vmatprep.subr.bf16.mxu0 0
        %2558 = vmatpush1.bf16.msra.mxu0 0
        %2559 = vmatprep.subr.bf16.mxu0 0
        %2560 = vmatpush1.bf16.msra.mxu0 0
        %2561 = vmatprep.subr.bf16.mxu0 0
        %2562 = vmatpush1.bf16.msra.mxu0 0
        %2563 = vmatprep.subr.bf16.mxu0 0
        %2564 = vmatpush1.bf16.msra.mxu0 0
        %2565 = vmatprep.subr.bf16.mxu0 0
        %2566 = vmatpush1.bf16.msra.mxu0 0
        %2567 = vmatprep.subr.bf16.mxu0 0
        %2568 = vmatpush1.bf16.msra.mxu0 0
        %2569 = vmatprep.subr.bf16.mxu0 0
        %2570 = vmatpush1.bf16.msra.mxu0 0
        %2571 = vmatprep.subr.bf16.mxu0 0
        %2572 = vmatpush1.bf16.msra.mxu0 0
        %2573 = vmatprep.subr.bf16.mxu0 0
        %2574 = vmatpush1.bf16.msra.mxu0 0
        %2575 = vmatprep.subr.bf16.mxu0 0
        %2576 = vmatpush1.bf16.msra.mxu0 0
        %2577 = vmatprep.subr.bf16.mxu0 0
        %2578 = vmatpush1.bf16.msra.mxu0 0
        %2579 = vmatprep.subr.bf16.mxu0 0
        %2580 = vmatpush1.bf16.msra.mxu0 0
        %2581 = vmatprep.mubr.bf16.mxu0 0
        %2582 = vmatmul.mubr.bf16.gmra.mrb[0].mxu0 %v739
        %v2583 = vpop.f32.mrb[0].mxu0
        %v2584 = vadd.f32 0.0, %v2583
        %v2585 = vpop.f32.mrb[0].mxu0
        %v2586 = vpop.f32.mrb[0].mxu0
        %v2587 = vadd.f32 0.0, %v2586
        %v2588 = vpop.f32.mrb[0].mxu0
        %2589 = vmatprep.mubr.bf16.mxu0 0
        %2590 = vmatmul.mubr.bf16.gmra.mrb[0].mxu0 %v742
        %v2591 = vpop.f32.mrb[0].mxu0
        %v2592 = vadd.f32 0.0, %v2591
        %v2593 = vpop.f32.mrb[0].mxu0
        %v2594 = vpop.f32.mrb[0].mxu0
        %v2595 = vadd.f32 0.0, %v2594
        %v2596 = vpop.f32.mrb[0].mxu0
        %2597 = vmatprep.mubr.bf16.mxu0 0
        %2598 = vmatmul.mubr.bf16.gmra.mrb[0].mxu0 %v745
        %v2599 = vpop.f32.mrb[0].mxu0
        %v2600 = vadd.f32 0.0, %v2599
        %v2601 = vpop.f32.mrb[0].mxu0
        %v2602 = vpop.f32.mrb[0].mxu0
        %v2603 = vadd.f32 0.0, %v2602
        %v2604 = vpop.f32.mrb[0].mxu0
        %2605 = vmatprep.mubr.bf16.mxu0 0
        %2606 = vmatmul.mubr.bf16.gmra.mrb[0].mxu0 %v748
        %v2607 = vpop.f32.mrb[0].mxu0
        %v2608 = vadd.f32 0.0, %v2607
        %v2609 = vpop.f32.mrb[0].mxu0
        %v2610 = vpop.f32.mrb[0].mxu0
        %v2611 = vadd.f32 0.0, %v2610
        %v2612 = vpop.f32.mrb[0].mxu0
        %2613 = vmatprep.mubr.bf16.mxu0 0
        %2614 = vmatmul.mubr.bf16.gmra.mrb[0].mxu0 %v751
        %v2615 = vpop.f32.mrb[0].mxu0
        %v2616 = vadd.f32 0.0, %v2615
        %v2617 = vpop.f32.mrb[0].mxu0
        %v2618 = vpop.f32.mrb[0].mxu0
        %v2619 = vadd.f32 0.0, %v2618
        %v2620 = vpop.f32.mrb[0].mxu0
        %2621 = vmatprep.mubr.bf16.mxu0 0
        %2622 = vmatmul.mubr.bf16.gmra.mrb[0].mxu0 %v754
        %v2623 = vpop.f32.mrb[0].mxu0
        %v2624 = vadd.f32 0.0, %v2623
        %v2625 = vpop.f32.mrb[0].mxu0
        %v2626 = vpop.f32.mrb[0].mxu0
        %v2627 = vadd.f32 0.0, %v2626
        %v2628 = vpop.f32.mrb[0].mxu0
        %2629 = vmatprep.mubr.bf16.mxu0 0
        %2630 = vmatmul.mubr.bf16.gmra.mrb[0].mxu0 %v757
        %v2631 = vpop.f32.mrb[0].mxu0
        %v2632 = vadd.f32 0.0, %v2631
        %v2633 = vpop.f32.mrb[0].mxu0
        %v2634 = vpop.f32.mrb[0].mxu0
        %v2635 = vadd.f32 0.0, %v2634
        %v2636 = vpop.f32.mrb[0].mxu0
        %2637 = vmatprep.mubr.bf16.mxu0 0
        %2638 = vmatmul.mubr.bf16.gmra.mrb[0].mxu0 %v760
        %v2639 = vpop.f32.mrb[0].mxu0
        %v2640 = vadd.f32 0.0, %v2639
        %v2641 = vpop.f32.mrb[0].mxu0
        %v2642 = vpop.f32.mrb[0].mxu0
        %v2643 = vadd.f32 0.0, %v2642
        %v2644 = vpop.f32.mrb[0].mxu0
        %2645 = vmatprep.mubr.bf16.mxu0 0
        %2646 = vmatmul.mubr.bf16.gmra.mrb[0].mxu0 %v763
        %v2647 = vpop.f32.mrb[0].mxu0
        %v2648 = vadd.f32 0.0, %v2647
        %v2649 = vpop.f32.mrb[0].mxu0
        %v2650 = vpop.f32.mrb[0].mxu0
        %v2651 = vadd.f32 0.0, %v2650
        %v2652 = vpop.f32.mrb[0].mxu0
        %2653 = vmatprep.mubr.bf16.mxu0 0
        %2654 = vmatmul.mubr.bf16.gmra.mrb[0].mxu0 %v766
        %v2655 = vpop.f32.mrb[0].mxu0
        %v2656 = vadd.f32 0.0, %v2655
        %v2657 = vpop.f32.mrb[0].mxu0
        %v2658 = vpop.f32.mrb[0].mxu0
        %v2659 = vadd.f32 0.0, %v2658
        %v2660 = vpop.f32.mrb[0].mxu0
        %2661 = vmatprep.mubr.bf16.mxu0 0
        %2662 = vmatmul.mubr.bf16.gmra.mrb[0].mxu0 %v769
        %v2663 = vpop.f32.mrb[0].mxu0
        %v2664 = vadd.f32 0.0, %v2663
        %v2665 = vpop.f32.mrb[0].mxu0
        %v2666 = vpop.f32.mrb[0].mxu0
        %v2667 = vadd.f32 0.0, %v2666
        %v2668 = vpop.f32.mrb[0].mxu0
        %2669 = vmatprep.mubr.bf16.mxu0 0
        %2670 = vmatmul.mubr.bf16.gmra.mrb[0].mxu0 %v772
        %v2671 = vpop.f32.mrb[0].mxu0
        %v2672 = vadd.f32 0.0, %v2671
        %v2673 = vpop.f32.mrb[0].mxu0
        %v2674 = vpop.f32.mrb[0].mxu0
        %v2675 = vadd.f32 0.0, %v2674
        %v2676 = vpop.f32.mrb[0].mxu0
        %2677 = vmatprep.mubr.bf16.mxu0 0
        %2678 = vmatmul.mubr.bf16.gmra.mrb[0].mxu0 %v775
        %v2679 = vpop.f32.mrb[0].mxu0
        %v2680 = vadd.f32 0.0, %v2679
        %v2681 = vpop.f32.mrb[0].mxu0
        %v2682 = vpop.f32.mrb[0].mxu0
        %v2683 = vadd.f32 0.0, %v2682
        %v2684 = vpop.f32.mrb[0].mxu0
        %2685 = vmatprep.mubr.bf16.mxu0 0
        %2686 = vmatmul.mubr.bf16.gmra.mrb[0].mxu0 %v778
        %v2687 = vpop.f32.mrb[0].mxu0
        %v2688 = vadd.f32 0.0, %v2687
        %v2689 = vpop.f32.mrb[0].mxu0
        %v2690 = vpop.f32.mrb[0].mxu0
        %v2691 = vadd.f32 0.0, %v2690
        %v2692 = vpop.f32.mrb[0].mxu0
        %2693 = vmatprep.mubr.bf16.mxu0 0
        %2694 = vmatmul.mubr.bf16.gmra.mrb[0].mxu0 %v1896
        %v2695 = vpop.f32.mrb[0].mxu0
        %v2696 = vadd.f32 0.0, %v2695
        %v2697 = vpop.f32.mrb[0].mxu0
        %v2698 = vpop.f32.mrb[0].mxu0
        %v2699 = vadd.f32 0.0, %v2698
        %v2700 = vpop.f32.mrb[0].mxu0
        %2701 = vmatprep.mubr.bf16.mxu0 0
        %2702 = vmatmul.mubr.bf16.gmra.mrb[0].mxu0 %v2544
        %v2703 = vpop.f32.mrb[0].mxu0
        %v2704 = vadd.f32 0.0, %v2703
        %v2705 = vpop.f32.mrb[0].mxu0
        %v2706 = vpop.f32.mrb[0].mxu0
        %v2707 = vadd.f32 0.0, %v2706
        %v2708 = vpop.f32.mrb[0].mxu0
        %2709 = vdwg.mxu0
        %v2710 = vadd.f32 %v2480, %v2584
        %v2711 = vadd.f32 %v2481, %v2587
        %v2712 = vadd.f32 %v2482, %v2592
        %v2713 = vadd.f32 %v2483, %v2595
        %v2714 = vadd.f32 %v2484, %v2600
        %v2715 = vadd.f32 %v2485, %v2603
        %v2716 = vadd.f32 %v2486, %v2608
        %v2717 = vadd.f32 %v2487, %v2611
        %v2718 = vadd.f32 %v2488, %v2616
        %v2719 = vadd.f32 %v2489, %v2619
        %v2720 = vadd.f32 %v2490, %v2624
        %v2721 = vadd.f32 %v2491, %v2627
        %v2722 = vadd.f32 %v2492, %v2632
        %v2723 = vadd.f32 %v2493, %v2635
        %v2724 = vadd.f32 %v2494, %v2640
        %v2725 = vadd.f32 %v2495, %v2643
        %v2726 = vadd.f32 %v2496, %v2648
        %v2727 = vadd.f32 %v2497, %v2651
        %v2728 = vadd.f32 %v2498, %v2656
        %v2729 = vadd.f32 %v2499, %v2659
        %v2730 = vadd.f32 %v2500, %v2664
        %v2731 = vadd.f32 %v2501, %v2667
        %v2732 = vadd.f32 %v2502, %v2672
        %v2733 = vadd.f32 %v2503, %v2675
        %v2734 = vadd.f32 %v2504, %v2680
        %v2735 = vadd.f32 %v2505, %v2683
        %v2736 = vadd.f32 %v2506, %v2688
        %v2737 = vadd.f32 %v2507, %v2691
        %v2738 = vadd.f32 %v2508, %v2696
        %v2739 = vadd.f32 %v2509, %v2699
        %v2740 = vadd.f32 %v2510, %v2704
        %v2741 = vadd.f32 %v2511, %v2707
        %v2743 = vrot.slane %v284, 5
        %v2744 = vrot.slane %v2743, 4
        %v2745 = vrot.slane %v285, 5
        %v2746 = vsel %vm1255, %v2744, %v2745
        %v2747 = vrot.slane %v2745, 4
        %v2748 = vrot.slane %v286, 5
        %v2749 = vsel %vm1255, %v2747, %v2748
        %v2750 = vunpack.c.l.b16 %v2746
        %v2751 = vunpack.c.l.b16 %v2749
        %v2752 = vpack.c.b16 %v2751, %v2750
        %v2754 = vsel %vm731, %v2752, 0
        %v2757 = vsel %vm780, %v291, 0
        %2759 = vmatprep.subr.bf16.mxu0 0
        %2760 = vmatpush1.bf16.msra.mxu0 %v2757
        %2761 = vmatprep.subr.bf16.mxu0 0
        %2762 = vmatpush1.bf16.msra.mxu0 0
        %2763 = vmatprep.subr.bf16.mxu0 0
        %2764 = vmatpush1.bf16.msra.mxu0 0
        %2765 = vmatprep.subr.bf16.mxu0 0
        %2766 = vmatpush1.bf16.msra.mxu0 0
        %2767 = vmatprep.subr.bf16.mxu0 0
        %2768 = vmatpush1.bf16.msra.mxu0 0
        %2769 = vmatprep.subr.bf16.mxu0 0
        %2770 = vmatpush1.bf16.msra.mxu0 0
        %2771 = vmatprep.subr.bf16.mxu0 0
        %2772 = vmatpush1.bf16.msra.mxu0 0
        %2773 = vmatprep.subr.bf16.mxu0 0
        %2774 = vmatpush1.bf16.msra.mxu0 0
        %2775 = vmatprep.subr.bf16.mxu0 0
        %2776 = vmatpush1.bf16.msra.mxu0 0
        %2777 = vmatprep.subr.bf16.mxu0 0
        %2778 = vmatpush1.bf16.msra.mxu0 0
        %2779 = vmatprep.subr.bf16.mxu0 0
        %2780 = vmatpush1.bf16.msra.mxu0 0
        %2781 = vmatprep.subr.bf16.mxu0 0
        %2782 = vmatpush1.bf16.msra.mxu0 0
        %2783 = vmatprep.subr.bf16.mxu0 0
        %2784 = vmatpush1.bf16.msra.mxu0 0
        %2785 = vmatprep.subr.bf16.mxu0 0
        %2786 = vmatpush1.bf16.msra.mxu0 0
        %2787 = vmatprep.subr.bf16.mxu0 0
        %2788 = vmatpush1.bf16.msra.mxu0 0
        %2789 = vmatprep.subr.bf16.mxu0 0
        %2790 = vmatpush1.bf16.msra.mxu0 0
        %2791 = vmatprep.mubr.bf16.mxu0 0
        %2792 = vmatmul.mubr.bf16.gmra.mrb[0].mxu0 %v1423
        %v2793 = vpop.f32.mrb[0].mxu0
        %v2794 = vadd.f32 0.0, %v2793
        %v2795 = vpop.f32.mrb[0].mxu0
        %v2796 = vpop.f32.mrb[0].mxu0
        %v2797 = vadd.f32 0.0, %v2796
        %v2798 = vpop.f32.mrb[0].mxu0
        %2799 = vmatprep.mubr.bf16.mxu0 0
        %2800 = vmatmul.mubr.bf16.gmra.mrb[0].mxu0 %v1426
        %v2801 = vpop.f32.mrb[0].mxu0
        %v2802 = vadd.f32 0.0, %v2801
        %v2803 = vpop.f32.mrb[0].mxu0
        %v2804 = vpop.f32.mrb[0].mxu0
        %v2805 = vadd.f32 0.0, %v2804
        %v2806 = vpop.f32.mrb[0].mxu0
        %2807 = vmatprep.mubr.bf16.mxu0 0
        %2808 = vmatmul.mubr.bf16.gmra.mrb[0].mxu0 %v1429
        %v2809 = vpop.f32.mrb[0].mxu0
        %v2810 = vadd.f32 0.0, %v2809
        %v2811 = vpop.f32.mrb[0].mxu0
        %v2812 = vpop.f32.mrb[0].mxu0
        %v2813 = vadd.f32 0.0, %v2812
        %v2814 = vpop.f32.mrb[0].mxu0
        %2815 = vmatprep.mubr.bf16.mxu0 0
        %2816 = vmatmul.mubr.bf16.gmra.mrb[0].mxu0 %v1432
        %v2817 = vpop.f32.mrb[0].mxu0
        %v2818 = vadd.f32 0.0, %v2817
        %v2819 = vpop.f32.mrb[0].mxu0
        %v2820 = vpop.f32.mrb[0].mxu0
        %v2821 = vadd.f32 0.0, %v2820
        %v2822 = vpop.f32.mrb[0].mxu0
        %2823 = vmatprep.mubr.bf16.mxu0 0
        %2824 = vmatmul.mubr.bf16.gmra.mrb[0].mxu0 %v1435
        %v2825 = vpop.f32.mrb[0].mxu0
        %v2826 = vadd.f32 0.0, %v2825
        %v2827 = vpop.f32.mrb[0].mxu0
        %v2828 = vpop.f32.mrb[0].mxu0
        %v2829 = vadd.f32 0.0, %v2828
        %v2830 = vpop.f32.mrb[0].mxu0
        %2831 = vmatprep.mubr.bf16.mxu0 0
        %2832 = vmatmul.mubr.bf16.gmra.mrb[0].mxu0 %v1438
        %v2833 = vpop.f32.mrb[0].mxu0
        %v2834 = vadd.f32 0.0, %v2833
        %v2835 = vpop.f32.mrb[0].mxu0
        %v2836 = vpop.f32.mrb[0].mxu0
        %v2837 = vadd.f32 0.0, %v2836
        %v2838 = vpop.f32.mrb[0].mxu0
        %2839 = vmatprep.mubr.bf16.mxu0 0
        %2840 = vmatmul.mubr.bf16.gmra.mrb[0].mxu0 %v1441
        %v2841 = vpop.f32.mrb[0].mxu0
        %v2842 = vadd.f32 0.0, %v2841
        %v2843 = vpop.f32.mrb[0].mxu0
        %v2844 = vpop.f32.mrb[0].mxu0
        %v2845 = vadd.f32 0.0, %v2844
        %v2846 = vpop.f32.mrb[0].mxu0
        %2847 = vmatprep.mubr.bf16.mxu0 0
        %2848 = vmatmul.mubr.bf16.gmra.mrb[0].mxu0 %v1444
        %v2849 = vpop.f32.mrb[0].mxu0
        %v2850 = vadd.f32 0.0, %v2849
        %v2851 = vpop.f32.mrb[0].mxu0
        %v2852 = vpop.f32.mrb[0].mxu0
        %v2853 = vadd.f32 0.0, %v2852
        %v2854 = vpop.f32.mrb[0].mxu0
        %2855 = vmatprep.mubr.bf16.mxu0 0
        %2856 = vmatmul.mubr.bf16.gmra.mrb[0].mxu0 %v1447
        %v2857 = vpop.f32.mrb[0].mxu0
        %v2858 = vadd.f32 0.0, %v2857
        %v2859 = vpop.f32.mrb[0].mxu0
        %v2860 = vpop.f32.mrb[0].mxu0
        %v2861 = vadd.f32 0.0, %v2860
        %v2862 = vpop.f32.mrb[0].mxu0
        %2863 = vmatprep.mubr.bf16.mxu0 0
        %2864 = vmatmul.mubr.bf16.gmra.mrb[0].mxu0 %v1450
        %v2865 = vpop.f32.mrb[0].mxu0
        %v2866 = vadd.f32 0.0, %v2865
        %v2867 = vpop.f32.mrb[0].mxu0
        %v2868 = vpop.f32.mrb[0].mxu0
        %v2869 = vadd.f32 0.0, %v2868
        %v2870 = vpop.f32.mrb[0].mxu0
        %2871 = vmatprep.mubr.bf16.mxu0 0
        %2872 = vmatmul.mubr.bf16.gmra.mrb[0].mxu0 %v1453
        %v2873 = vpop.f32.mrb[0].mxu0
        %v2874 = vadd.f32 0.0, %v2873
        %v2875 = vpop.f32.mrb[0].mxu0
        %v2876 = vpop.f32.mrb[0].mxu0
        %v2877 = vadd.f32 0.0, %v2876
        %v2878 = vpop.f32.mrb[0].mxu0
        %2879 = vmatprep.mubr.bf16.mxu0 0
        %2880 = vmatmul.mubr.bf16.gmra.mrb[0].mxu0 %v1456
        %v2881 = vpop.f32.mrb[0].mxu0
        %v2882 = vadd.f32 0.0, %v2881
        %v2883 = vpop.f32.mrb[0].mxu0
        %v2884 = vpop.f32.mrb[0].mxu0
        %v2885 = vadd.f32 0.0, %v2884
        %v2886 = vpop.f32.mrb[0].mxu0
        %2887 = vmatprep.mubr.bf16.mxu0 0
        %2888 = vmatmul.mubr.bf16.gmra.mrb[0].mxu0 %v1459
        %v2889 = vpop.f32.mrb[0].mxu0
        %v2890 = vadd.f32 0.0, %v2889
        %v2891 = vpop.f32.mrb[0].mxu0
        %v2892 = vpop.f32.mrb[0].mxu0
        %v2893 = vadd.f32 0.0, %v2892
        %v2894 = vpop.f32.mrb[0].mxu0
        %2895 = vmatprep.mubr.bf16.mxu0 0
        %2896 = vmatmul.mubr.bf16.gmra.mrb[0].mxu0 %v1462
        %v2897 = vpop.f32.mrb[0].mxu0
        %v2898 = vadd.f32 0.0, %v2897
        %v2899 = vpop.f32.mrb[0].mxu0
        %v2900 = vpop.f32.mrb[0].mxu0
        %v2901 = vadd.f32 0.0, %v2900
        %v2902 = vpop.f32.mrb[0].mxu0
        %2903 = vmatprep.mubr.bf16.mxu0 0
        %2904 = vmatmul.mubr.bf16.gmra.mrb[0].mxu0 %v2110
        %v2905 = vpop.f32.mrb[0].mxu0
        %v2906 = vadd.f32 0.0, %v2905
        %v2907 = vpop.f32.mrb[0].mxu0
        %v2908 = vpop.f32.mrb[0].mxu0
        %v2909 = vadd.f32 0.0, %v2908
        %v2910 = vpop.f32.mrb[0].mxu0
        %2911 = vmatprep.mubr.bf16.mxu0 0
        %2912 = vmatmul.mubr.bf16.gmra.mrb[0].mxu0 %v2754
        %v2913 = vpop.f32.mrb[0].mxu0
        %v2914 = vadd.f32 0.0, %v2913
        %v2915 = vpop.f32.mrb[0].mxu0
        %v2916 = vpop.f32.mrb[0].mxu0
        %v2917 = vadd.f32 0.0, %v2916
        %v2918 = vpop.f32.mrb[0].mxu0
        %2919 = vdwg.mxu0
        %v2920 = vadd.f32 %v2710, %v2794
        %v2921 = vadd.f32 %v2711, %v2797
        %v2922 = vadd.f32 %v2712, %v2802
        %v2923 = vadd.f32 %v2713, %v2805
        %v2924 = vadd.f32 %v2714, %v2810
        %v2925 = vadd.f32 %v2715, %v2813
        %v2926 = vadd.f32 %v2716, %v2818
        %v2927 = vadd.f32 %v2717, %v2821
        %v2928 = vadd.f32 %v2718, %v2826
        %v2929 = vadd.f32 %v2719, %v2829
        %v2930 = vadd.f32 %v2720, %v2834
        %v2931 = vadd.f32 %v2721, %v2837
        %v2932 = vadd.f32 %v2722, %v2842
        %v2933 = vadd.f32 %v2723, %v2845
        %v2934 = vadd.f32 %v2724, %v2850
        %v2935 = vadd.f32 %v2725, %v2853
        %v2936 = vadd.f32 %v2726, %v2858
        %v2937 = vadd.f32 %v2727, %v2861
        %v2938 = vadd.f32 %v2728, %v2866
        %v2939 = vadd.f32 %v2729, %v2869
        %v2940 = vadd.f32 %v2730, %v2874
        %v2941 = vadd.f32 %v2731, %v2877
        %v2942 = vadd.f32 %v2732, %v2882
        %v2943 = vadd.f32 %v2733, %v2885
        %v2944 = vadd.f32 %v2734, %v2890
        %v2945 = vadd.f32 %v2735, %v2893
        %v2946 = vadd.f32 %v2736, %v2898
        %v2947 = vadd.f32 %v2737, %v2901
        %v2948 = vadd.f32 %v2738, %v2906
        %v2949 = vadd.f32 %v2739, %v2909
        %v2950 = vadd.f32 %v2740, %v2914
        %v2951 = vadd.f32 %v2741, %v2917
        %v2952 = vld [vmem:[%s2] sm:$0x1]
        %v2954 = vlaneseq
        %v2955 = vshrl.u32 %v2954, 7
        %v2956 = vsub.s32 0, %v2955
        %v2957 = vrot.slane %v2952, %v2956
        %v2959 = vadd.f32 %v2920, %v2957
        %v2960 = vadd.f32 %v2921, %v2957
        %v2961 = vadd.f32 %v2922, %v2957
        %v2962 = vadd.f32 %v2923, %v2957
        %v2963 = vadd.f32 %v2924, %v2957
        %v2964 = vadd.f32 %v2925, %v2957
        %v2965 = vadd.f32 %v2926, %v2957
        %v2966 = vadd.f32 %v2927, %v2957
        %v2967 = vadd.f32 %v2928, %v2957
        %v2968 = vadd.f32 %v2929, %v2957
        %v2969 = vadd.f32 %v2930, %v2957
        %v2970 = vadd.f32 %v2931, %v2957
        %v2971 = vadd.f32 %v2932, %v2957
        %v2972 = vadd.f32 %v2933, %v2957
        %v2973 = vadd.f32 %v2934, %v2957
        %v2974 = vadd.f32 %v2935, %v2957
        %v2975 = vadd.f32 %v2936, %v2957
        %v2976 = vadd.f32 %v2937, %v2957
        %v2977 = vadd.f32 %v2938, %v2957
        %v2978 = vadd.f32 %v2939, %v2957
        %v2979 = vadd.f32 %v2940, %v2957
        %v2980 = vadd.f32 %v2941, %v2957
        %v2981 = vadd.f32 %v2942, %v2957
        %v2982 = vadd.f32 %v2943, %v2957
        %v2983 = vadd.f32 %v2944, %v2957
        %v2984 = vadd.f32 %v2945, %v2957
        %v2985 = vadd.f32 %v2946, %v2957
        %v2986 = vadd.f32 %v2947, %v2957
        %v2987 = vadd.f32 %v2948, %v2957
        %v2988 = vadd.f32 %v2949, %v2957
        %v2989 = vadd.f32 %v2950, %v2957
        %v2990 = vadd.f32 %v2951, %v2957
        %v2991 = vmax.f32 %v2959, 0.0
        %v2992 = vmax.f32 %v2960, 0.0
        %v2993 = vmax.f32 %v2961, 0.0
        %v2994 = vmax.f32 %v2962, 0.0
        %v2995 = vmax.f32 %v2963, 0.0
        %v2996 = vmax.f32 %v2964, 0.0
        %v2997 = vmax.f32 %v2965, 0.0
        %v2998 = vmax.f32 %v2966, 0.0
        %v2999 = vmax.f32 %v2967, 0.0
        %v3000 = vmax.f32 %v2968, 0.0
        %v3001 = vmax.f32 %v2969, 0.0
        %v3002 = vmax.f32 %v2970, 0.0
        %v3003 = vmax.f32 %v2971, 0.0
        %v3004 = vmax.f32 %v2972, 0.0
        %v3005 = vmax.f32 %v2973, 0.0
        %v3006 = vmax.f32 %v2974, 0.0
        %v3007 = vmax.f32 %v2975, 0.0
        %v3008 = vmax.f32 %v2976, 0.0
        %v3009 = vmax.f32 %v2977, 0.0
        %v3010 = vmax.f32 %v2978, 0.0
        %v3011 = vmax.f32 %v2979, 0.0
        %v3012 = vmax.f32 %v2980, 0.0
        %v3013 = vmax.f32 %v2981, 0.0
        %v3014 = vmax.f32 %v2982, 0.0
        %v3015 = vmax.f32 %v2983, 0.0
        %v3016 = vmax.f32 %v2984, 0.0
        %v3017 = vmax.f32 %v2985, 0.0
        %v3018 = vmax.f32 %v2986, 0.0
        %v3019 = vmax.f32 %v2987, 0.0
        %v3020 = vmax.f32 %v2988, 0.0
        %v3021 = vmax.f32 %v2989, 0.0
        %v3022 = vmax.f32 %v2990, 0.0
        %v3023 = vpack.c.bf16 %v2992, %v2991
        %v3024 = vpack.c.bf16 %v2994, %v2993
        %v3025 = vpack.c.bf16 %v2996, %v2995
        %v3026 = vpack.c.bf16 %v2998, %v2997
        %v3027 = vpack.c.bf16 %v3000, %v2999
        %v3028 = vpack.c.bf16 %v3002, %v3001
        %v3029 = vpack.c.bf16 %v3004, %v3003
        %v3030 = vpack.c.bf16 %v3006, %v3005
        %v3031 = vpack.c.bf16 %v3008, %v3007
        %v3032 = vpack.c.bf16 %v3010, %v3009
        %v3033 = vpack.c.bf16 %v3012, %v3011
        %v3034 = vpack.c.bf16 %v3014, %v3013
        %v3035 = vpack.c.bf16 %v3016, %v3015
        %v3036 = vpack.c.bf16 %v3018, %v3017
        %v3037 = vpack.c.bf16 %v3020, %v3019
        %v3038 = vpack.c.bf16 %v3022, %v3021
        %v3055 = vunpack.c.l.b16 %v3023
        %v3056 = vunpack.c.h.b16 %v3023
        %v3057 = vunpack.c.l.b16 %v3024
        %v3058 = vunpack.c.h.b16 %v3024
        %v3059 = vunpack.c.l.b16 %v3025
        %v3060 = vunpack.c.h.b16 %v3025
        %v3061 = vunpack.c.l.b16 %v3026
        %v3062 = vunpack.c.h.b16 %v3026
        %v3063 = vunpack.c.l.b16 %v3027
        %v3064 = vunpack.c.h.b16 %v3027
        %v3065 = vunpack.c.l.b16 %v3028
        %v3066 = vunpack.c.h.b16 %v3028
        %v3067 = vunpack.c.l.b16 %v3029
        %v3068 = vunpack.c.h.b16 %v3029
        %v3069 = vunpack.c.l.b16 %v3030
        %v3070 = vunpack.c.h.b16 %v3030
        %v3071 = vunpack.c.l.b16 %v3031
        %v3072 = vunpack.c.h.b16 %v3031
        %v3073 = vunpack.c.l.b16 %v3032
        %v3074 = vunpack.c.h.b16 %v3032
        %v3075 = vunpack.c.l.b16 %v3033
        %v3076 = vunpack.c.h.b16 %v3033
        %v3077 = vunpack.c.l.b16 %v3034
        %v3078 = vunpack.c.h.b16 %v3034
        %v3079 = vunpack.c.l.b16 %v3035
        %v3080 = vunpack.c.h.b16 %v3035
        %v3081 = vunpack.c.l.b16 %v3036
        %v3082 = vunpack.c.h.b16 %v3036
        %v3083 = vunpack.c.l.b16 %v3037
        %v3084 = vunpack.c.h.b16 %v3037
        %v3085 = vunpack.c.l.b16 %v3038
        %v3086 = vunpack.c.h.b16 %v3038
        %v3087 = vpack.c.b16 %v3055, %v3055
        %v3088 = vpack.c.b16 %v3056, %v3056
        %v3089 = vpack.c.b16 %v3057, %v3057
        %v3090 = vpack.c.b16 %v3058, %v3058
        %v3091 = vpack.c.b16 %v3059, %v3059
        %v3092 = vpack.c.b16 %v3060, %v3060
        %v3093 = vpack.c.b16 %v3061, %v3061
        %v3094 = vpack.c.b16 %v3062, %v3062
        %v3095 = vpack.c.b16 %v3063, %v3063
        %v3096 = vpack.c.b16 %v3064, %v3064
        %v3097 = vpack.c.b16 %v3065, %v3065
        %v3098 = vpack.c.b16 %v3066, %v3066
        %v3099 = vpack.c.b16 %v3067, %v3067
        %v3100 = vpack.c.b16 %v3068, %v3068
        %v3101 = vpack.c.b16 %v3069, %v3069
        %v3102 = vpack.c.b16 %v3070, %v3070
        %v3103 = vpack.c.b16 %v3071, %v3071
        %v3104 = vpack.c.b16 %v3072, %v3072
        %v3105 = vpack.c.b16 %v3073, %v3073
        %v3106 = vpack.c.b16 %v3074, %v3074
        %v3107 = vpack.c.b16 %v3075, %v3075
        %v3108 = vpack.c.b16 %v3076, %v3076
        %v3109 = vpack.c.b16 %v3077, %v3077
        %v3110 = vpack.c.b16 %v3078, %v3078
        %v3111 = vpack.c.b16 %v3079, %v3079
        %v3112 = vpack.c.b16 %v3080, %v3080
        %v3113 = vpack.c.b16 %v3081, %v3081
        %v3114 = vpack.c.b16 %v3082, %v3082
        %v3115 = vpack.c.b16 %v3083, %v3083
        %v3116 = vpack.c.b16 %v3084, %v3084
        %v3117 = vpack.c.b16 %v3085, %v3085
        %v3118 = vpack.c.b16 %v3086, %v3086
        %3151 = vst [vmem:[%s215] sm:$0xf] %v3087
        %3152 = vst [vmem:[%s215 + $0x4] sm:$0xf] %v3088
        %3153 = vst [vmem:[%s215 + $0x8] sm:$0xf] %v3089
        %3154 = vst [vmem:[%s215 + $0xc] sm:$0xf] %v3090
        %3155 = vst [vmem:[%s215 + $0x10] sm:$0xf] %v3091
        %3156 = vst [vmem:[%s215 + $0x14] sm:$0xf] %v3092
        %3157 = vst [vmem:[%s215 + $0x18] sm:$0xf] %v3093
        %3158 = vst [vmem:[%s215 + $0x1c] sm:$0xf] %v3094
        %3159 = vst [vmem:[%s215 + $0x20] sm:$0xf] %v3095
        %3160 = vst [vmem:[%s215 + $0x24] sm:$0xf] %v3096
        %3161 = vst [vmem:[%s215 + $0x28] sm:$0xf] %v3097
        %3162 = vst [vmem:[%s215 + $0x2c] sm:$0xf] %v3098
        %3163 = vst [vmem:[%s215 + $0x30] sm:$0xf] %v3099
        %3164 = vst [vmem:[%s215 + $0x34] sm:$0xf] %v3100
        %3165 = vst [vmem:[%s215 + $0x38] sm:$0xf] %v3101
        %3166 = vst [vmem:[%s215 + $0x3c] sm:$0xf] %v3102
        %3167 = vst [vmem:[%s215 + $0x40] sm:$0xf] %v3103
        %3168 = vst [vmem:[%s215 + $0x44] sm:$0xf] %v3104
        %3169 = vst [vmem:[%s215 + $0x48] sm:$0xf] %v3105
        %3170 = vst [vmem:[%s215 + $0x4c] sm:$0xf] %v3106
        %3171 = vst [vmem:[%s215 + $0x50] sm:$0xf] %v3107
        %3172 = vst [vmem:[%s215 + $0x54] sm:$0xf] %v3108
        %3173 = vst [vmem:[%s215 + $0x58] sm:$0xf] %v3109
        %3174 = vst [vmem:[%s215 + $0x5c] sm:$0xf] %v3110
        %3175 = vst [vmem:[%s215 + $0x60] sm:$0xf] %v3111
        %3176 = vst [vmem:[%s215 + $0x64] sm:$0xf] %v3112
        %3177 = vst [vmem:[%s215 + $0x68] sm:$0xf] %v3113
        %3178 = vst [vmem:[%s215 + $0x6c] sm:$0xf] %v3114
        %3179 = vst [vmem:[%s215 + $0x70] sm:$0xf] %v3115
        %3180 = vst [vmem:[%s215 + $0x74] sm:$0xf] %v3116
        %3181 = vst [vmem:[%s215 + $0x78] sm:$0xf] %v3117
        %3182 = vst [vmem:[%s215 + $0x7c] sm:$0xf] %v3118
        %v3183 = vmul.f32 %v2991, %v2991
        %v3184 = vmul.f32 %v2992, %v2992
        %v3185 = vmul.f32 %v2993, %v2993
        %v3186 = vmul.f32 %v2994, %v2994
        %v3187 = vmul.f32 %v2995, %v2995
        %v3188 = vmul.f32 %v2996, %v2996
        %v3189 = vmul.f32 %v2997, %v2997
        %v3190 = vmul.f32 %v2998, %v2998
        %v3191 = vmul.f32 %v2999, %v2999
        %v3192 = vmul.f32 %v3000, %v3000
        %v3193 = vmul.f32 %v3001, %v3001
        %v3194 = vmul.f32 %v3002, %v3002
        %v3195 = vmul.f32 %v3003, %v3003
        %v3196 = vmul.f32 %v3004, %v3004
        %v3197 = vmul.f32 %v3005, %v3005
        %v3198 = vmul.f32 %v3006, %v3006
        %v3199 = vmul.f32 %v3007, %v3007
        %v3200 = vmul.f32 %v3008, %v3008
        %v3201 = vmul.f32 %v3009, %v3009
        %v3202 = vmul.f32 %v3010, %v3010
        %v3203 = vmul.f32 %v3011, %v3011
        %v3204 = vmul.f32 %v3012, %v3012
        %v3205 = vmul.f32 %v3013, %v3013
        %v3206 = vmul.f32 %v3014, %v3014
        %v3207 = vmul.f32 %v3015, %v3015
        %v3208 = vmul.f32 %v3016, %v3016
        %v3209 = vmul.f32 %v3017, %v3017
        %v3210 = vmul.f32 %v3018, %v3018
        %v3211 = vmul.f32 %v3019, %v3019
        %v3212 = vmul.f32 %v3020, %v3020
        %v3213 = vmul.f32 %v3021, %v3021
        %v3214 = vmul.f32 %v3022, %v3022
        %vm3215 = vcmask 261120
        %v3216 = vsel %vm3215, %v3183, 0.0
        %3217 = vadd.xlane.f32.xlu0 %v3216
        %v3218 = vpop.xlane.xlu0 %3217
        %v3219 = vsel %vm3215, %v3184, 0.0
        %3220 = vadd.xlane.f32.xlu0 %v3219
        %v3221 = vpop.xlane.xlu0 %3220
        %v3222 = vsel %vm3215, %v3185, 0.0
        %3223 = vadd.xlane.f32.xlu0 %v3222
        %v3224 = vpop.xlane.xlu0 %3223
        %v3225 = vsel %vm3215, %v3186, 0.0
        %3226 = vadd.xlane.f32.xlu0 %v3225
        %v3227 = vpop.xlane.xlu0 %3226
        %v3228 = vsel %vm3215, %v3187, 0.0
        %3229 = vadd.xlane.f32.xlu0 %v3228
        %v3230 = vpop.xlane.xlu0 %3229
        %v3231 = vsel %vm3215, %v3188, 0.0
        %3232 = vadd.xlane.f32.xlu0 %v3231
        %v3233 = vpop.xlane.xlu0 %3232
        %v3234 = vsel %vm3215, %v3189, 0.0
        %3235 = vadd.xlane.f32.xlu0 %v3234
        %v3236 = vpop.xlane.xlu0 %3235
        %v3237 = vsel %vm3215, %v3190, 0.0
        %3238 = vadd.xlane.f32.xlu0 %v3237
        %v3239 = vpop.xlane.xlu0 %3238
        %v3240 = vsel %vm3215, %v3191, 0.0
        %3241 = vadd.xlane.f32.xlu0 %v3240
        %v3242 = vpop.xlane.xlu0 %3241
        %v3243 = vsel %vm3215, %v3192, 0.0
        %3244 = vadd.xlane.f32.xlu0 %v3243
        %v3245 = vpop.xlane.xlu0 %3244
        %v3246 = vsel %vm3215, %v3193, 0.0
        %3247 = vadd.xlane.f32.xlu0 %v3246
        %v3248 = vpop.xlane.xlu0 %3247
        %v3249 = vsel %vm3215, %v3194, 0.0
        %3250 = vadd.xlane.f32.xlu0 %v3249
        %v3251 = vpop.xlane.xlu0 %3250
        %v3252 = vsel %vm3215, %v3195, 0.0
        %3253 = vadd.xlane.f32.xlu0 %v3252
        %v3254 = vpop.xlane.xlu0 %3253
        %v3255 = vsel %vm3215, %v3196, 0.0
        %3256 = vadd.xlane.f32.xlu0 %v3255
        %v3257 = vpop.xlane.xlu0 %3256
        %v3258 = vsel %vm3215, %v3197, 0.0
        %3259 = vadd.xlane.f32.xlu0 %v3258
        %v3260 = vpop.xlane.xlu0 %3259
        %v3261 = vsel %vm3215, %v3198, 0.0
        %3262 = vadd.xlane.f32.xlu0 %v3261
        %v3263 = vpop.xlane.xlu0 %3262
        %v3264 = vsel %vm3215, %v3199, 0.0
        %3265 = vadd.xlane.f32.xlu0 %v3264
        %v3266 = vpop.xlane.xlu0 %3265
        %v3267 = vsel %vm3215, %v3200, 0.0
        %3268 = vadd.xlane.f32.xlu0 %v3267
        %v3269 = vpop.xlane.xlu0 %3268
        %v3270 = vsel %vm3215, %v3201, 0.0
        %3271 = vadd.xlane.f32.xlu0 %v3270
        %v3272 = vpop.xlane.xlu0 %3271
        %v3273 = vsel %vm3215, %v3202, 0.0
        %3274 = vadd.xlane.f32.xlu0 %v3273
        %v3275 = vpop.xlane.xlu0 %3274
        %v3276 = vsel %vm3215, %v3203, 0.0
        %3277 = vadd.xlane.f32.xlu0 %v3276
        %v3278 = vpop.xlane.xlu0 %3277
        %v3279 = vsel %vm3215, %v3204, 0.0
        %3280 = vadd.xlane.f32.xlu0 %v3279
        %v3281 = vpop.xlane.xlu0 %3280
        %v3282 = vsel %vm3215, %v3205, 0.0
        %3283 = vadd.xlane.f32.xlu0 %v3282
        %v3284 = vpop.xlane.xlu0 %3283
        %v3285 = vsel %vm3215, %v3206, 0.0
        %3286 = vadd.xlane.f32.xlu0 %v3285
        %v3287 = vpop.xlane.xlu0 %3286
        %v3288 = vsel %vm3215, %v3207, 0.0
        %3289 = vadd.xlane.f32.xlu0 %v3288
        %v3290 = vpop.xlane.xlu0 %3289
        %v3291 = vsel %vm3215, %v3208, 0.0
        %3292 = vadd.xlane.f32.xlu0 %v3291
        %v3293 = vpop.xlane.xlu0 %3292
        %v3294 = vsel %vm3215, %v3209, 0.0
        %3295 = vadd.xlane.f32.xlu0 %v3294
        %v3296 = vpop.xlane.xlu0 %3295
        %v3297 = vsel %vm3215, %v3210, 0.0
        %3298 = vadd.xlane.f32.xlu0 %v3297
        %v3299 = vpop.xlane.xlu0 %3298
        %v3300 = vsel %vm3215, %v3211, 0.0
        %3301 = vadd.xlane.f32.xlu0 %v3300
        %v3302 = vpop.xlane.xlu0 %3301
        %v3303 = vsel %vm3215, %v3212, 0.0
        %3304 = vadd.xlane.f32.xlu0 %v3303
        %v3305 = vpop.xlane.xlu0 %3304
        %v3306 = vsel %vm3215, %v3213, 0.0
        %3307 = vadd.xlane.f32.xlu0 %v3306
        %v3308 = vpop.xlane.xlu0 %3307
        %v3309 = vsel %vm3215, %v3214, 0.0
        %3310 = vadd.xlane.f32.xlu0 %v3309
        %v3311 = vpop.xlane.xlu0 %3310
        %v3312 = vmax.f32 %v3218, 1e-24
        %v3313 = vmax.f32 %v3221, 1e-24
        %v3314 = vmax.f32 %v3224, 1e-24
        %v3315 = vmax.f32 %v3227, 1e-24
        %v3316 = vmax.f32 %v3230, 1e-24
        %v3317 = vmax.f32 %v3233, 1e-24
        %v3318 = vmax.f32 %v3236, 1e-24
        %v3319 = vmax.f32 %v3239, 1e-24
        %v3320 = vmax.f32 %v3242, 1e-24
        %v3321 = vmax.f32 %v3245, 1e-24
        %v3322 = vmax.f32 %v3248, 1e-24
        %v3323 = vmax.f32 %v3251, 1e-24
        %v3324 = vmax.f32 %v3254, 1e-24
        %v3325 = vmax.f32 %v3257, 1e-24
        %v3326 = vmax.f32 %v3260, 1e-24
        %v3327 = vmax.f32 %v3263, 1e-24
        %v3328 = vmax.f32 %v3266, 1e-24
        %v3329 = vmax.f32 %v3269, 1e-24
        %v3330 = vmax.f32 %v3272, 1e-24
        %v3331 = vmax.f32 %v3275, 1e-24
        %v3332 = vmax.f32 %v3278, 1e-24
        %v3333 = vmax.f32 %v3281, 1e-24
        %v3334 = vmax.f32 %v3284, 1e-24
        %v3335 = vmax.f32 %v3287, 1e-24
        %v3336 = vmax.f32 %v3290, 1e-24
        %v3337 = vmax.f32 %v3293, 1e-24
        %v3338 = vmax.f32 %v3296, 1e-24
        %v3339 = vmax.f32 %v3299, 1e-24
        %v3340 = vmax.f32 %v3302, 1e-24
        %v3341 = vmax.f32 %v3305, 1e-24
        %v3342 = vmax.f32 %v3308, 1e-24
        %v3343 = vmax.f32 %v3311, 1e-24
        %v3344 = vrsqrt.pop %v3312
        %v3345 = vrsqrt.pop %v3313
        %v3346 = vrsqrt.pop %v3314
        %v3347 = vrsqrt.pop %v3315
        %v3348 = vrsqrt.pop %v3316
        %v3349 = vrsqrt.pop %v3317
        %v3350 = vrsqrt.pop %v3318
        %v3351 = vrsqrt.pop %v3319
        %v3352 = vrsqrt.pop %v3320
        %v3353 = vrsqrt.pop %v3321
        %v3354 = vrsqrt.pop %v3322
        %v3355 = vrsqrt.pop %v3323
        %v3356 = vrsqrt.pop %v3324
        %v3357 = vrsqrt.pop %v3325
        %v3358 = vrsqrt.pop %v3326
        %v3359 = vrsqrt.pop %v3327
        %v3360 = vrsqrt.pop %v3328
        %v3361 = vrsqrt.pop %v3329
        %v3362 = vrsqrt.pop %v3330
        %v3363 = vrsqrt.pop %v3331
        %v3364 = vrsqrt.pop %v3332
        %v3365 = vrsqrt.pop %v3333
        %v3366 = vrsqrt.pop %v3334
        %v3367 = vrsqrt.pop %v3335
        %v3368 = vrsqrt.pop %v3336
        %v3369 = vrsqrt.pop %v3337
        %v3370 = vrsqrt.pop %v3338
        %v3371 = vrsqrt.pop %v3339
        %v3372 = vrsqrt.pop %v3340
        %v3373 = vrsqrt.pop %v3341
        %v3374 = vrsqrt.pop %v3342
        %v3375 = vrsqrt.pop %v3343
        %3408 = vrot.lane.b32.xlu0 %v3183, 96
        %v3409 = vpop.permute.xlu0 %3408
        %3410 = vrot.lane.b32.xlu0 %v3184, 96
        %v3411 = vpop.permute.xlu0 %3410
        %3412 = vrot.lane.b32.xlu0 %v3185, 96
        %v3413 = vpop.permute.xlu0 %3412
        %3414 = vrot.lane.b32.xlu0 %v3186, 96
        %v3415 = vpop.permute.xlu0 %3414
        %3416 = vrot.lane.b32.xlu0 %v3187, 96
        %v3417 = vpop.permute.xlu0 %3416
        %3418 = vrot.lane.b32.xlu0 %v3188, 96
        %v3419 = vpop.permute.xlu0 %3418
        %3420 = vrot.lane.b32.xlu0 %v3189, 96
        %v3421 = vpop.permute.xlu0 %3420
        %3422 = vrot.lane.b32.xlu0 %v3190, 96
        %v3423 = vpop.permute.xlu0 %3422
        %3424 = vrot.lane.b32.xlu0 %v3191, 96
        %v3425 = vpop.permute.xlu0 %3424
        %3426 = vrot.lane.b32.xlu0 %v3192, 96
        %v3427 = vpop.permute.xlu0 %3426
        %3428 = vrot.lane.b32.xlu0 %v3193, 96
        %v3429 = vpop.permute.xlu0 %3428
        %3430 = vrot.lane.b32.xlu0 %v3194, 96
        %v3431 = vpop.permute.xlu0 %3430
        %3432 = vrot.lane.b32.xlu0 %v3195, 96
        %v3433 = vpop.permute.xlu0 %3432
        %3434 = vrot.lane.b32.xlu0 %v3196, 96
        %v3435 = vpop.permute.xlu0 %3434
        %3436 = vrot.lane.b32.xlu0 %v3197, 96
        %v3437 = vpop.permute.xlu0 %3436
        %3438 = vrot.lane.b32.xlu0 %v3198, 96
        %v3439 = vpop.permute.xlu0 %3438
        %3440 = vrot.lane.b32.xlu0 %v3199, 96
        %v3441 = vpop.permute.xlu0 %3440
        %3442 = vrot.lane.b32.xlu0 %v3200, 96
        %v3443 = vpop.permute.xlu0 %3442
        %3444 = vrot.lane.b32.xlu0 %v3201, 96
        %v3445 = vpop.permute.xlu0 %3444
        %3446 = vrot.lane.b32.xlu0 %v3202, 96
        %v3447 = vpop.permute.xlu0 %3446
        %3448 = vrot.lane.b32.xlu0 %v3203, 96
        %v3449 = vpop.permute.xlu0 %3448
        %3450 = vrot.lane.b32.xlu0 %v3204, 96
        %v3451 = vpop.permute.xlu0 %3450
        %3452 = vrot.lane.b32.xlu0 %v3205, 96
        %v3453 = vpop.permute.xlu0 %3452
        %3454 = vrot.lane.b32.xlu0 %v3206, 96
        %v3455 = vpop.permute.xlu0 %3454
        %3456 = vrot.lane.b32.xlu0 %v3207, 96
        %v3457 = vpop.permute.xlu0 %3456
        %3458 = vrot.lane.b32.xlu0 %v3208, 96
        %v3459 = vpop.permute.xlu0 %3458
        %3460 = vrot.lane.b32.xlu0 %v3209, 96
        %v3461 = vpop.permute.xlu0 %3460
        %3462 = vrot.lane.b32.xlu0 %v3210, 96
        %v3463 = vpop.permute.xlu0 %3462
        %3464 = vrot.lane.b32.xlu0 %v3211, 96
        %v3465 = vpop.permute.xlu0 %3464
        %3466 = vrot.lane.b32.xlu0 %v3212, 96
        %v3467 = vpop.permute.xlu0 %3466
        %3468 = vrot.lane.b32.xlu0 %v3213, 96
        %v3469 = vpop.permute.xlu0 %3468
        %3470 = vrot.lane.b32.xlu0 %v3214, 96
        %v3471 = vpop.permute.xlu0 %3470
        %v3504 = vsel %vm3215, %v3409, 0.0
        %3505 = vadd.xlane.f32.xlu0 %v3504
        %v3506 = vpop.xlane.xlu0 %3505
        %v3507 = vsel %vm3215, %v3411, 0.0
        %3508 = vadd.xlane.f32.xlu0 %v3507
        %v3509 = vpop.xlane.xlu0 %3508
        %v3510 = vsel %vm3215, %v3413, 0.0
        %3511 = vadd.xlane.f32.xlu0 %v3510
        %v3512 = vpop.xlane.xlu0 %3511
        %v3513 = vsel %vm3215, %v3415, 0.0
        %3514 = vadd.xlane.f32.xlu0 %v3513
        %v3515 = vpop.xlane.xlu0 %3514
        %v3516 = vsel %vm3215, %v3417, 0.0
        %3517 = vadd.xlane.f32.xlu0 %v3516
        %v3518 = vpop.xlane.xlu0 %3517
        %v3519 = vsel %vm3215, %v3419, 0.0
        %3520 = vadd.xlane.f32.xlu0 %v3519
        %v3521 = vpop.xlane.xlu0 %3520
        %v3522 = vsel %vm3215, %v3421, 0.0
        %3523 = vadd.xlane.f32.xlu0 %v3522
        %v3524 = vpop.xlane.xlu0 %3523
        %v3525 = vsel %vm3215, %v3423, 0.0
        %3526 = vadd.xlane.f32.xlu0 %v3525
        %v3527 = vpop.xlane.xlu0 %3526
        %v3528 = vsel %vm3215, %v3425, 0.0
        %3529 = vadd.xlane.f32.xlu0 %v3528
        %v3530 = vpop.xlane.xlu0 %3529
        %v3531 = vsel %vm3215, %v3427, 0.0
        %3532 = vadd.xlane.f32.xlu0 %v3531
        %v3533 = vpop.xlane.xlu0 %3532
        %v3534 = vsel %vm3215, %v3429, 0.0
        %3535 = vadd.xlane.f32.xlu0 %v3534
        %v3536 = vpop.xlane.xlu0 %3535
        %v3537 = vsel %vm3215, %v3431, 0.0
        %3538 = vadd.xlane.f32.xlu0 %v3537
        %v3539 = vpop.xlane.xlu0 %3538
        %v3540 = vsel %vm3215, %v3433, 0.0
        %3541 = vadd.xlane.f32.xlu0 %v3540
        %v3542 = vpop.xlane.xlu0 %3541
        %v3543 = vsel %vm3215, %v3435, 0.0
        %3544 = vadd.xlane.f32.xlu0 %v3543
        %v3545 = vpop.xlane.xlu0 %3544
        %v3546 = vsel %vm3215, %v3437, 0.0
        %3547 = vadd.xlane.f32.xlu0 %v3546
        %v3548 = vpop.xlane.xlu0 %3547
        %v3549 = vsel %vm3215, %v3439, 0.0
        %3550 = vadd.xlane.f32.xlu0 %v3549
        %v3551 = vpop.xlane.xlu0 %3550
        %v3552 = vsel %vm3215, %v3441, 0.0
        %3553 = vadd.xlane.f32.xlu0 %v3552
        %v3554 = vpop.xlane.xlu0 %3553
        %v3555 = vsel %vm3215, %v3443, 0.0
        %3556 = vadd.xlane.f32.xlu0 %v3555
        %v3557 = vpop.xlane.xlu0 %3556
        %v3558 = vsel %vm3215, %v3445, 0.0
        %3559 = vadd.xlane.f32.xlu0 %v3558
        %v3560 = vpop.xlane.xlu0 %3559
        %v3561 = vsel %vm3215, %v3447, 0.0
        %3562 = vadd.xlane.f32.xlu0 %v3561
        %v3563 = vpop.xlane.xlu0 %3562
        %v3564 = vsel %vm3215, %v3449, 0.0
        %3565 = vadd.xlane.f32.xlu0 %v3564
        %v3566 = vpop.xlane.xlu0 %3565
        %v3567 = vsel %vm3215, %v3451, 0.0
        %3568 = vadd.xlane.f32.xlu0 %v3567
        %v3569 = vpop.xlane.xlu0 %3568
        %v3570 = vsel %vm3215, %v3453, 0.0
        %3571 = vadd.xlane.f32.xlu0 %v3570
        %v3572 = vpop.xlane.xlu0 %3571
        %v3573 = vsel %vm3215, %v3455, 0.0
        %3574 = vadd.xlane.f32.xlu0 %v3573
        %v3575 = vpop.xlane.xlu0 %3574
        %v3576 = vsel %vm3215, %v3457, 0.0
        %3577 = vadd.xlane.f32.xlu0 %v3576
        %v3578 = vpop.xlane.xlu0 %3577
        %v3579 = vsel %vm3215, %v3459, 0.0
        %3580 = vadd.xlane.f32.xlu0 %v3579
        %v3581 = vpop.xlane.xlu0 %3580
        %v3582 = vsel %vm3215, %v3461, 0.0
        %3583 = vadd.xlane.f32.xlu0 %v3582
        %v3584 = vpop.xlane.xlu0 %3583
        %v3585 = vsel %vm3215, %v3463, 0.0
        %3586 = vadd.xlane.f32.xlu0 %v3585
        %v3587 = vpop.xlane.xlu0 %3586
        %v3588 = vsel %vm3215, %v3465, 0.0
        %3589 = vadd.xlane.f32.xlu0 %v3588
        %v3590 = vpop.xlane.xlu0 %3589
        %v3591 = vsel %vm3215, %v3467, 0.0
        %3592 = vadd.xlane.f32.xlu0 %v3591
        %v3593 = vpop.xlane.xlu0 %3592
        %v3594 = vsel %vm3215, %v3469, 0.0
        %3595 = vadd.xlane.f32.xlu0 %v3594
        %v3596 = vpop.xlane.xlu0 %3595
        %v3597 = vsel %vm3215, %v3471, 0.0
        %3598 = vadd.xlane.f32.xlu0 %v3597
        %v3599 = vpop.xlane.xlu0 %3598
        %v3600 = vmax.f32 %v3506, 1e-24
        %v3601 = vmax.f32 %v3509, 1e-24
        %v3602 = vmax.f32 %v3512, 1e-24
        %v3603 = vmax.f32 %v3515, 1e-24
        %v3604 = vmax.f32 %v3518, 1e-24
        %v3605 = vmax.f32 %v3521, 1e-24
        %v3606 = vmax.f32 %v3524, 1e-24
        %v3607 = vmax.f32 %v3527, 1e-24
        %v3608 = vmax.f32 %v3530, 1e-24
        %v3609 = vmax.f32 %v3533, 1e-24
        %v3610 = vmax.f32 %v3536, 1e-24
        %v3611 = vmax.f32 %v3539, 1e-24
        %v3612 = vmax.f32 %v3542, 1e-24
        %v3613 = vmax.f32 %v3545, 1e-24
        %v3614 = vmax.f32 %v3548, 1e-24
        %v3615 = vmax.f32 %v3551, 1e-24
        %v3616 = vmax.f32 %v3554, 1e-24
        %v3617 = vmax.f32 %v3557, 1e-24
        %v3618 = vmax.f32 %v3560, 1e-24
        %v3619 = vmax.f32 %v3563, 1e-24
        %v3620 = vmax.f32 %v3566, 1e-24
        %v3621 = vmax.f32 %v3569, 1e-24
        %v3622 = vmax.f32 %v3572, 1e-24
        %v3623 = vmax.f32 %v3575, 1e-24
        %v3624 = vmax.f32 %v3578, 1e-24
        %v3625 = vmax.f32 %v3581, 1e-24
        %v3626 = vmax.f32 %v3584, 1e-24
        %v3627 = vmax.f32 %v3587, 1e-24
        %v3628 = vmax.f32 %v3590, 1e-24
        %v3629 = vmax.f32 %v3593, 1e-24
        %v3630 = vmax.f32 %v3596, 1e-24
        %v3631 = vmax.f32 %v3599, 1e-24
        %v3632 = vrsqrt.pop %v3600
        %v3633 = vrsqrt.pop %v3601
        %v3634 = vrsqrt.pop %v3602
        %v3635 = vrsqrt.pop %v3603
        %v3636 = vrsqrt.pop %v3604
        %v3637 = vrsqrt.pop %v3605
        %v3638 = vrsqrt.pop %v3606
        %v3639 = vrsqrt.pop %v3607
        %v3640 = vrsqrt.pop %v3608
        %v3641 = vrsqrt.pop %v3609
        %v3642 = vrsqrt.pop %v3610
        %v3643 = vrsqrt.pop %v3611
        %v3644 = vrsqrt.pop %v3612
        %v3645 = vrsqrt.pop %v3613
        %v3646 = vrsqrt.pop %v3614
        %v3647 = vrsqrt.pop %v3615
        %v3648 = vrsqrt.pop %v3616
        %v3649 = vrsqrt.pop %v3617
        %v3650 = vrsqrt.pop %v3618
        %v3651 = vrsqrt.pop %v3619
        %v3652 = vrsqrt.pop %v3620
        %v3653 = vrsqrt.pop %v3621
        %v3654 = vrsqrt.pop %v3622
        %v3655 = vrsqrt.pop %v3623
        %v3656 = vrsqrt.pop %v3624
        %v3657 = vrsqrt.pop %v3625
        %v3658 = vrsqrt.pop %v3626
        %v3659 = vrsqrt.pop %v3627
        %v3660 = vrsqrt.pop %v3628
        %v3661 = vrsqrt.pop %v3629
        %v3662 = vrsqrt.pop %v3630
        %v3663 = vrsqrt.pop %v3631
        %v3664 = vmul.f32 %v2991, %v3344
        %v3665 = vmul.f32 %v2992, %v3345
        %v3666 = vmul.f32 %v2993, %v3346
        %v3667 = vmul.f32 %v2994, %v3347
        %v3668 = vmul.f32 %v2995, %v3348
        %v3669 = vmul.f32 %v2996, %v3349
        %v3670 = vmul.f32 %v2997, %v3350
        %v3671 = vmul.f32 %v2998, %v3351
        %v3672 = vmul.f32 %v2999, %v3352
        %v3673 = vmul.f32 %v3000, %v3353
        %v3674 = vmul.f32 %v3001, %v3354
        %v3675 = vmul.f32 %v3002, %v3355
        %v3676 = vmul.f32 %v3003, %v3356
        %v3677 = vmul.f32 %v3004, %v3357
        %v3678 = vmul.f32 %v3005, %v3358
        %v3679 = vmul.f32 %v3006, %v3359
        %v3680 = vmul.f32 %v3007, %v3360
        %v3681 = vmul.f32 %v3008, %v3361
        %v3682 = vmul.f32 %v3009, %v3362
        %v3683 = vmul.f32 %v3010, %v3363
        %v3684 = vmul.f32 %v3011, %v3364
        %v3685 = vmul.f32 %v3012, %v3365
        %v3686 = vmul.f32 %v3013, %v3366
        %v3687 = vmul.f32 %v3014, %v3367
        %v3688 = vmul.f32 %v3015, %v3368
        %v3689 = vmul.f32 %v3016, %v3369
        %v3690 = vmul.f32 %v3017, %v3370
        %v3691 = vmul.f32 %v3018, %v3371
        %v3692 = vmul.f32 %v3019, %v3372
        %v3693 = vmul.f32 %v3020, %v3373
        %v3694 = vmul.f32 %v3021, %v3374
        %v3695 = vmul.f32 %v3022, %v3375
        %v3696 = vmul.f32 %v2991, %v3632
        %v3697 = vmul.f32 %v2992, %v3633
        %v3698 = vmul.f32 %v2993, %v3634
        %v3699 = vmul.f32 %v2994, %v3635
        %v3700 = vmul.f32 %v2995, %v3636
        %v3701 = vmul.f32 %v2996, %v3637
        %v3702 = vmul.f32 %v2997, %v3638
        %v3703 = vmul.f32 %v2998, %v3639
        %v3704 = vmul.f32 %v2999, %v3640
        %v3705 = vmul.f32 %v3000, %v3641
        %v3706 = vmul.f32 %v3001, %v3642
        %v3707 = vmul.f32 %v3002, %v3643
        %v3708 = vmul.f32 %v3003, %v3644
        %v3709 = vmul.f32 %v3004, %v3645
        %v3710 = vmul.f32 %v3005, %v3646
        %v3711 = vmul.f32 %v3006, %v3647
        %v3712 = vmul.f32 %v3007, %v3648
        %v3713 = vmul.f32 %v3008, %v3649
        %v3714 = vmul.f32 %v3009, %v3650
        %v3715 = vmul.f32 %v3010, %v3651
        %v3716 = vmul.f32 %v3011, %v3652
        %v3717 = vmul.f32 %v3012, %v3653
        %v3718 = vmul.f32 %v3013, %v3654
        %v3719 = vmul.f32 %v3014, %v3655
        %v3720 = vmul.f32 %v3015, %v3656
        %v3721 = vmul.f32 %v3016, %v3657
        %v3722 = vmul.f32 %v3017, %v3658
        %v3723 = vmul.f32 %v3018, %v3659
        %v3724 = vmul.f32 %v3019, %v3660
        %v3725 = vmul.f32 %v3020, %v3661
        %v3726 = vmul.f32 %v3021, %v3662
        %v3727 = vmul.f32 %v3022, %v3663
        %3760 = vrot.lane.b32.xlu0 %v3696, 96
        %v3761 = vpop.permute.xlu0 %3760
        %3762 = vrot.lane.b32.xlu0 %v3697, 96
        %v3763 = vpop.permute.xlu0 %3762
        %3764 = vrot.lane.b32.xlu0 %v3698, 96
        %v3765 = vpop.permute.xlu0 %3764
        %3766 = vrot.lane.b32.xlu0 %v3699, 96
        %v3767 = vpop.permute.xlu0 %3766
        %3768 = vrot.lane.b32.xlu0 %v3700, 96
        %v3769 = vpop.permute.xlu0 %3768
        %3770 = vrot.lane.b32.xlu0 %v3701, 96
        %v3771 = vpop.permute.xlu0 %3770
        %3772 = vrot.lane.b32.xlu0 %v3702, 96
        %v3773 = vpop.permute.xlu0 %3772
        %3774 = vrot.lane.b32.xlu0 %v3703, 96
        %v3775 = vpop.permute.xlu0 %3774
        %3776 = vrot.lane.b32.xlu0 %v3704, 96
        %v3777 = vpop.permute.xlu0 %3776
        %3778 = vrot.lane.b32.xlu0 %v3705, 96
        %v3779 = vpop.permute.xlu0 %3778
        %3780 = vrot.lane.b32.xlu0 %v3706, 96
        %v3781 = vpop.permute.xlu0 %3780
        %3782 = vrot.lane.b32.xlu0 %v3707, 96
        %v3783 = vpop.permute.xlu0 %3782
        %3784 = vrot.lane.b32.xlu0 %v3708, 96
        %v3785 = vpop.permute.xlu0 %3784
        %3786 = vrot.lane.b32.xlu0 %v3709, 96
        %v3787 = vpop.permute.xlu0 %3786
        %3788 = vrot.lane.b32.xlu0 %v3710, 96
        %v3789 = vpop.permute.xlu0 %3788
        %3790 = vrot.lane.b32.xlu0 %v3711, 96
        %v3791 = vpop.permute.xlu0 %3790
        %3792 = vrot.lane.b32.xlu0 %v3712, 96
        %v3793 = vpop.permute.xlu0 %3792
        %3794 = vrot.lane.b32.xlu0 %v3713, 96
        %v3795 = vpop.permute.xlu0 %3794
        %3796 = vrot.lane.b32.xlu0 %v3714, 96
        %v3797 = vpop.permute.xlu0 %3796
        %3798 = vrot.lane.b32.xlu0 %v3715, 96
        %v3799 = vpop.permute.xlu0 %3798
        %3800 = vrot.lane.b32.xlu0 %v3716, 96
        %v3801 = vpop.permute.xlu0 %3800
        %3802 = vrot.lane.b32.xlu0 %v3717, 96
        %v3803 = vpop.permute.xlu0 %3802
        %3804 = vrot.lane.b32.xlu0 %v3718, 96
        %v3805 = vpop.permute.xlu0 %3804
        %3806 = vrot.lane.b32.xlu0 %v3719, 96
        %v3807 = vpop.permute.xlu0 %3806
        %3808 = vrot.lane.b32.xlu0 %v3720, 96
        %v3809 = vpop.permute.xlu0 %3808
        %3810 = vrot.lane.b32.xlu0 %v3721, 96
        %v3811 = vpop.permute.xlu0 %3810
        %3812 = vrot.lane.b32.xlu0 %v3722, 96
        %v3813 = vpop.permute.xlu0 %3812
        %3814 = vrot.lane.b32.xlu0 %v3723, 96
        %v3815 = vpop.permute.xlu0 %3814
        %3816 = vrot.lane.b32.xlu0 %v3724, 96
        %v3817 = vpop.permute.xlu0 %3816
        %3818 = vrot.lane.b32.xlu0 %v3725, 96
        %v3819 = vpop.permute.xlu0 %3818
        %3820 = vrot.lane.b32.xlu0 %v3726, 96
        %v3821 = vpop.permute.xlu0 %3820
        %3822 = vrot.lane.b32.xlu0 %v3727, 96
        %v3823 = vpop.permute.xlu0 %3822
        %v3856 = vsub.f32 %v3664, %v3761
        %v3857 = vsub.f32 %v3665, %v3763
        %v3858 = vsub.f32 %v3666, %v3765
        %v3859 = vsub.f32 %v3667, %v3767
        %v3860 = vsub.f32 %v3668, %v3769
        %v3861 = vsub.f32 %v3669, %v3771
        %v3862 = vsub.f32 %v3670, %v3773
        %v3863 = vsub.f32 %v3671, %v3775
        %v3864 = vsub.f32 %v3672, %v3777
        %v3865 = vsub.f32 %v3673, %v3779
        %v3866 = vsub.f32 %v3674, %v3781
        %v3867 = vsub.f32 %v3675, %v3783
        %v3868 = vsub.f32 %v3676, %v3785
        %v3869 = vsub.f32 %v3677, %v3787
        %v3870 = vsub.f32 %v3678, %v3789
        %v3871 = vsub.f32 %v3679, %v3791
        %v3872 = vsub.f32 %v3680, %v3793
        %v3873 = vsub.f32 %v3681, %v3795
        %v3874 = vsub.f32 %v3682, %v3797
        %v3875 = vsub.f32 %v3683, %v3799
        %v3876 = vsub.f32 %v3684, %v3801
        %v3877 = vsub.f32 %v3685, %v3803
        %v3878 = vsub.f32 %v3686, %v3805
        %v3879 = vsub.f32 %v3687, %v3807
        %v3880 = vsub.f32 %v3688, %v3809
        %v3881 = vsub.f32 %v3689, %v3811
        %v3882 = vsub.f32 %v3690, %v3813
        %v3883 = vsub.f32 %v3691, %v3815
        %v3884 = vsub.f32 %v3692, %v3817
        %v3885 = vsub.f32 %v3693, %v3819
        %v3886 = vsub.f32 %v3694, %v3821
        %v3887 = vsub.f32 %v3695, %v3823
        %v3888 = vmul.f32 %v3856, %v3856
        %v3889 = vmul.f32 %v3857, %v3857
        %v3890 = vmul.f32 %v3858, %v3858
        %v3891 = vmul.f32 %v3859, %v3859
        %v3892 = vmul.f32 %v3860, %v3860
        %v3893 = vmul.f32 %v3861, %v3861
        %v3894 = vmul.f32 %v3862, %v3862
        %v3895 = vmul.f32 %v3863, %v3863
        %v3896 = vmul.f32 %v3864, %v3864
        %v3897 = vmul.f32 %v3865, %v3865
        %v3898 = vmul.f32 %v3866, %v3866
        %v3899 = vmul.f32 %v3867, %v3867
        %v3900 = vmul.f32 %v3868, %v3868
        %v3901 = vmul.f32 %v3869, %v3869
        %v3902 = vmul.f32 %v3870, %v3870
        %v3903 = vmul.f32 %v3871, %v3871
        %v3904 = vmul.f32 %v3872, %v3872
        %v3905 = vmul.f32 %v3873, %v3873
        %v3906 = vmul.f32 %v3874, %v3874
        %v3907 = vmul.f32 %v3875, %v3875
        %v3908 = vmul.f32 %v3876, %v3876
        %v3909 = vmul.f32 %v3877, %v3877
        %v3910 = vmul.f32 %v3878, %v3878
        %v3911 = vmul.f32 %v3879, %v3879
        %v3912 = vmul.f32 %v3880, %v3880
        %v3913 = vmul.f32 %v3881, %v3881
        %v3914 = vmul.f32 %v3882, %v3882
        %v3915 = vmul.f32 %v3883, %v3883
        %v3916 = vmul.f32 %v3884, %v3884
        %v3917 = vmul.f32 %v3885, %v3885
        %v3918 = vmul.f32 %v3886, %v3886
        %v3919 = vmul.f32 %v3887, %v3887
        %v3920 = vsel %vm3215, %v3888, 0.0
        %3921 = vadd.xlane.f32.xlu0 %v3920
        %v3922 = vpop.xlane.xlu0 %3921
        %v3923 = vsel %vm3215, %v3889, 0.0
        %3924 = vadd.xlane.f32.xlu0 %v3923
        %v3925 = vpop.xlane.xlu0 %3924
        %v3926 = vsel %vm3215, %v3890, 0.0
        %3927 = vadd.xlane.f32.xlu0 %v3926
        %v3928 = vpop.xlane.xlu0 %3927
        %v3929 = vsel %vm3215, %v3891, 0.0
        %3930 = vadd.xlane.f32.xlu0 %v3929
        %v3931 = vpop.xlane.xlu0 %3930
        %v3932 = vsel %vm3215, %v3892, 0.0
        %3933 = vadd.xlane.f32.xlu0 %v3932
        %v3934 = vpop.xlane.xlu0 %3933
        %v3935 = vsel %vm3215, %v3893, 0.0
        %3936 = vadd.xlane.f32.xlu0 %v3935
        %v3937 = vpop.xlane.xlu0 %3936
        %v3938 = vsel %vm3215, %v3894, 0.0
        %3939 = vadd.xlane.f32.xlu0 %v3938
        %v3940 = vpop.xlane.xlu0 %3939
        %v3941 = vsel %vm3215, %v3895, 0.0
        %3942 = vadd.xlane.f32.xlu0 %v3941
        %v3943 = vpop.xlane.xlu0 %3942
        %v3944 = vsel %vm3215, %v3896, 0.0
        %3945 = vadd.xlane.f32.xlu0 %v3944
        %v3946 = vpop.xlane.xlu0 %3945
        %v3947 = vsel %vm3215, %v3897, 0.0
        %3948 = vadd.xlane.f32.xlu0 %v3947
        %v3949 = vpop.xlane.xlu0 %3948
        %v3950 = vsel %vm3215, %v3898, 0.0
        %3951 = vadd.xlane.f32.xlu0 %v3950
        %v3952 = vpop.xlane.xlu0 %3951
        %v3953 = vsel %vm3215, %v3899, 0.0
        %3954 = vadd.xlane.f32.xlu0 %v3953
        %v3955 = vpop.xlane.xlu0 %3954
        %v3956 = vsel %vm3215, %v3900, 0.0
        %3957 = vadd.xlane.f32.xlu0 %v3956
        %v3958 = vpop.xlane.xlu0 %3957
        %v3959 = vsel %vm3215, %v3901, 0.0
        %3960 = vadd.xlane.f32.xlu0 %v3959
        %v3961 = vpop.xlane.xlu0 %3960
        %v3962 = vsel %vm3215, %v3902, 0.0
        %3963 = vadd.xlane.f32.xlu0 %v3962
        %v3964 = vpop.xlane.xlu0 %3963
        %v3965 = vsel %vm3215, %v3903, 0.0
        %3966 = vadd.xlane.f32.xlu0 %v3965
        %v3967 = vpop.xlane.xlu0 %3966
        %v3968 = vsel %vm3215, %v3904, 0.0
        %3969 = vadd.xlane.f32.xlu0 %v3968
        %v3970 = vpop.xlane.xlu0 %3969
        %v3971 = vsel %vm3215, %v3905, 0.0
        %3972 = vadd.xlane.f32.xlu0 %v3971
        %v3973 = vpop.xlane.xlu0 %3972
        %v3974 = vsel %vm3215, %v3906, 0.0
        %3975 = vadd.xlane.f32.xlu0 %v3974
        %v3976 = vpop.xlane.xlu0 %3975
        %v3977 = vsel %vm3215, %v3907, 0.0
        %3978 = vadd.xlane.f32.xlu0 %v3977
        %v3979 = vpop.xlane.xlu0 %3978
        %v3980 = vsel %vm3215, %v3908, 0.0
        %3981 = vadd.xlane.f32.xlu0 %v3980
        %v3982 = vpop.xlane.xlu0 %3981
        %v3983 = vsel %vm3215, %v3909, 0.0
        %3984 = vadd.xlane.f32.xlu0 %v3983
        %v3985 = vpop.xlane.xlu0 %3984
        %v3986 = vsel %vm3215, %v3910, 0.0
        %3987 = vadd.xlane.f32.xlu0 %v3986
        %v3988 = vpop.xlane.xlu0 %3987
        %v3989 = vsel %vm3215, %v3911, 0.0
        %3990 = vadd.xlane.f32.xlu0 %v3989
        %v3991 = vpop.xlane.xlu0 %3990
        %v3992 = vsel %vm3215, %v3912, 0.0
        %3993 = vadd.xlane.f32.xlu0 %v3992
        %v3994 = vpop.xlane.xlu0 %3993
        %v3995 = vsel %vm3215, %v3913, 0.0
        %3996 = vadd.xlane.f32.xlu0 %v3995
        %v3997 = vpop.xlane.xlu0 %3996
        %v3998 = vsel %vm3215, %v3914, 0.0
        %3999 = vadd.xlane.f32.xlu0 %v3998
        %v4000 = vpop.xlane.xlu0 %3999
        %v4001 = vsel %vm3215, %v3915, 0.0
        %4002 = vadd.xlane.f32.xlu0 %v4001
        %v4003 = vpop.xlane.xlu0 %4002
        %v4004 = vsel %vm3215, %v3916, 0.0
        %4005 = vadd.xlane.f32.xlu0 %v4004
        %v4006 = vpop.xlane.xlu0 %4005
        %v4007 = vsel %vm3215, %v3917, 0.0
        %4008 = vadd.xlane.f32.xlu0 %v4007
        %v4009 = vpop.xlane.xlu0 %4008
        %v4010 = vsel %vm3215, %v3918, 0.0
        %4011 = vadd.xlane.f32.xlu0 %v4010
        %v4012 = vpop.xlane.xlu0 %4011
        %v4013 = vsel %vm3215, %v3919, 0.0
        %4014 = vadd.xlane.f32.xlu0 %v4013
        %v4015 = vpop.xlane.xlu0 %4014
        %v4048 = vlaneseq
        %v4049 = vand.u32 %v4048, 127
        %v4050 = vlaneseq
        %v4051 = vshrl.u32 %v4050, 7
        %v4052 = vsub.s32 %v4049, %v4051
        %v4053 = vrot.slane %v3922, %v4052
        %v4054 = vadd.s32 %v4049, 4294967288
        %v4055 = vlaneseq
        %v4056 = vshrl.u32 %v4055, 7
        %v4057 = vsub.s32 %v4054, %v4056
        %v4058 = vrot.slane %v3925, %v4057
        %vm4059 = vcmask 130112
        %v4060 = vsel %vm4059, %v4058, %v4053
        %v4061 = vlaneseq
        %v4062 = vshrl.u32 %v4061, 7
        %v4063 = vsub.s32 %v4049, %v4062
        %v4064 = vrot.slane %v3928, %v4063
        %v4065 = vlaneseq
        %v4066 = vshrl.u32 %v4065, 7
        %v4067 = vsub.s32 %v4054, %v4066
        %v4068 = vrot.slane %v3931, %v4067
        %v4069 = vsel %vm4059, %v4068, %v4064
        %v4070 = vlaneseq
        %v4071 = vshrl.u32 %v4070, 7
        %v4072 = vsub.s32 %v4049, %v4071
        %v4073 = vrot.slane %v3934, %v4072
        %v4074 = vlaneseq
        %v4075 = vshrl.u32 %v4074, 7
        %v4076 = vsub.s32 %v4054, %v4075
        %v4077 = vrot.slane %v3937, %v4076
        %v4078 = vsel %vm4059, %v4077, %v4073
        %v4079 = vlaneseq
        %v4080 = vshrl.u32 %v4079, 7
        %v4081 = vsub.s32 %v4049, %v4080
        %v4082 = vrot.slane %v3940, %v4081
        %v4083 = vlaneseq
        %v4084 = vshrl.u32 %v4083, 7
        %v4085 = vsub.s32 %v4054, %v4084
        %v4086 = vrot.slane %v3943, %v4085
        %v4087 = vsel %vm4059, %v4086, %v4082
        %v4088 = vlaneseq
        %v4089 = vshrl.u32 %v4088, 7
        %v4090 = vsub.s32 %v4049, %v4089
        %v4091 = vrot.slane %v3946, %v4090
        %v4092 = vlaneseq
        %v4093 = vshrl.u32 %v4092, 7
        %v4094 = vsub.s32 %v4054, %v4093
        %v4095 = vrot.slane %v3949, %v4094
        %v4096 = vsel %vm4059, %v4095, %v4091
        %v4097 = vlaneseq
        %v4098 = vshrl.u32 %v4097, 7
        %v4099 = vsub.s32 %v4049, %v4098
        %v4100 = vrot.slane %v3952, %v4099
        %v4101 = vlaneseq
        %v4102 = vshrl.u32 %v4101, 7
        %v4103 = vsub.s32 %v4054, %v4102
        %v4104 = vrot.slane %v3955, %v4103
        %v4105 = vsel %vm4059, %v4104, %v4100
        %v4106 = vlaneseq
        %v4107 = vshrl.u32 %v4106, 7
        %v4108 = vsub.s32 %v4049, %v4107
        %v4109 = vrot.slane %v3958, %v4108
        %v4110 = vlaneseq
        %v4111 = vshrl.u32 %v4110, 7
        %v4112 = vsub.s32 %v4054, %v4111
        %v4113 = vrot.slane %v3961, %v4112
        %v4114 = vsel %vm4059, %v4113, %v4109
        %v4115 = vlaneseq
        %v4116 = vshrl.u32 %v4115, 7
        %v4117 = vsub.s32 %v4049, %v4116
        %v4118 = vrot.slane %v3964, %v4117
        %v4119 = vlaneseq
        %v4120 = vshrl.u32 %v4119, 7
        %v4121 = vsub.s32 %v4054, %v4120
        %v4122 = vrot.slane %v3967, %v4121
        %v4123 = vsel %vm4059, %v4122, %v4118
        %v4124 = vlaneseq
        %v4125 = vshrl.u32 %v4124, 7
        %v4126 = vsub.s32 %v4049, %v4125
        %v4127 = vrot.slane %v3970, %v4126
        %v4128 = vlaneseq
        %v4129 = vshrl.u32 %v4128, 7
        %v4130 = vsub.s32 %v4054, %v4129
        %v4131 = vrot.slane %v3973, %v4130
        %v4132 = vsel %vm4059, %v4131, %v4127
        %v4133 = vlaneseq
        %v4134 = vshrl.u32 %v4133, 7
        %v4135 = vsub.s32 %v4049, %v4134
        %v4136 = vrot.slane %v3976, %v4135
        %v4137 = vlaneseq
        %v4138 = vshrl.u32 %v4137, 7
        %v4139 = vsub.s32 %v4054, %v4138
        %v4140 = vrot.slane %v3979, %v4139
        %v4141 = vsel %vm4059, %v4140, %v4136
        %v4142 = vlaneseq
        %v4143 = vshrl.u32 %v4142, 7
        %v4144 = vsub.s32 %v4049, %v4143
        %v4145 = vrot.slane %v3982, %v4144
        %v4146 = vlaneseq
        %v4147 = vshrl.u32 %v4146, 7
        %v4148 = vsub.s32 %v4054, %v4147
        %v4149 = vrot.slane %v3985, %v4148
        %v4150 = vsel %vm4059, %v4149, %v4145
        %v4151 = vlaneseq
        %v4152 = vshrl.u32 %v4151, 7
        %v4153 = vsub.s32 %v4049, %v4152
        %v4154 = vrot.slane %v3988, %v4153
        %v4155 = vlaneseq
        %v4156 = vshrl.u32 %v4155, 7
        %v4157 = vsub.s32 %v4054, %v4156
        %v4158 = vrot.slane %v3991, %v4157
        %v4159 = vsel %vm4059, %v4158, %v4154
        %v4160 = vlaneseq
        %v4161 = vshrl.u32 %v4160, 7
        %v4162 = vsub.s32 %v4049, %v4161
        %v4163 = vrot.slane %v3994, %v4162
        %v4164 = vlaneseq
        %v4165 = vshrl.u32 %v4164, 7
        %v4166 = vsub.s32 %v4054, %v4165
        %v4167 = vrot.slane %v3997, %v4166
        %v4168 = vsel %vm4059, %v4167, %v4163
        %v4169 = vlaneseq
        %v4170 = vshrl.u32 %v4169, 7
        %v4171 = vsub.s32 %v4049, %v4170
        %v4172 = vrot.slane %v4000, %v4171
        %v4173 = vlaneseq
        %v4174 = vshrl.u32 %v4173, 7
        %v4175 = vsub.s32 %v4054, %v4174
        %v4176 = vrot.slane %v4003, %v4175
        %v4177 = vsel %vm4059, %v4176, %v4172
        %v4178 = vlaneseq
        %v4179 = vshrl.u32 %v4178, 7
        %v4180 = vsub.s32 %v4049, %v4179
        %v4181 = vrot.slane %v4006, %v4180
        %v4182 = vlaneseq
        %v4183 = vshrl.u32 %v4182, 7
        %v4184 = vsub.s32 %v4054, %v4183
        %v4185 = vrot.slane %v4009, %v4184
        %v4186 = vsel %vm4059, %v4185, %v4181
        %v4187 = vlaneseq
        %v4188 = vshrl.u32 %v4187, 7
        %v4189 = vsub.s32 %v4049, %v4188
        %v4190 = vrot.slane %v4012, %v4189
        %v4191 = vlaneseq
        %v4192 = vshrl.u32 %v4191, 7
        %v4193 = vsub.s32 %v4054, %v4192
        %v4194 = vrot.slane %v4015, %v4193
        %v4195 = vsel %vm4059, %v4194, %v4190
        %vm4196 = vcmask 1041409
        %v4197 = vsel %vm4196, %v4069, %v4060
        %vm4198 = vcmask 1042434
        %v4199 = vsel %vm4198, %v4078, %v4197
        %vm4200 = vcmask 1043459
        %v4201 = vsel %vm4200, %v4087, %v4199
        %vm4202 = vcmask 1044484
        %v4203 = vsel %vm4202, %v4096, %v4201
        %vm4204 = vcmask 1045509
        %v4205 = vsel %vm4204, %v4105, %v4203
        %vm4206 = vcmask 1046534
        %v4207 = vsel %vm4206, %v4114, %v4205
        %vm4208 = vcmask 1047559
        %v4209 = vsel %vm4208, %v4123, %v4207
        %v4210 = vsel %vm4196, %v4141, %v4132
        %v4211 = vsel %vm4198, %v4150, %v4210
        %v4212 = vsel %vm4200, %v4159, %v4211
        %v4213 = vsel %vm4202, %v4168, %v4212
        %v4214 = vsel %vm4204, %v4177, %v4213
        %v4215 = vsel %vm4206, %v4186, %v4214
        %v4216 = vsel %vm4208, %v4195, %v4215
        %vm4219 = vcmask 130048
        %4220 = vst.msk [vmem:[%s222] sm:$0xff] %vm4219, %v4209
        %4221 = vst.msk [vmem:[%s222 + $0x8] sm:$0xff] %vm4219, %v4216
        %s4222 = sand.u32 %s114, 1
        %s4223 = scalar_lea.sflag [#allocation3], %s4222
        %s4224 = sand.u32 %s114, 1
        %s4225 = smul.addr %s4224, 128
        %s4226 = scalar_lea.vmem [#allocation2], %s4225
        %s4227 = sand.u32 %s142, 1
        %s4228 = scalar_lea.sflag [#allocation5], %s4227
        %s4229 = sand.u32 %s142, 1
        %s4230 = smul.addr %s4229, 16
        %s4231 = scalar_lea.vmem [#allocation4], %s4230
        // Predicated region
        $region33: #{tpu_custom_call.1} parent=31 // pred_check
          %p4232 = pneg %p124
        $region34: #{tpu_custom_call.1} parent=31 // pred_check_branch
          %4234 = sbr.rel (%p4232) target = $region36
        $region35: #{tpu_custom_call.1} parent=31 // pred_region
          %s4235 = smul.u32 16, %s27
          %s4237 = ssub.s32 2048, 2048
          %4238 = vsyncadd %s4223, %s4237
          %s4239 = smul.addr %s4235, 2
          %s4240 = smul.addr %s26, 32
          %s4241 = sadd.s32 %s4239, %s4240
          %s4242 = smul.addr %s4241, 64
          %s4243 = scalar_lea.hbm %s3, %s4242
          %s4244 = sshll.u32 %s4226, 4
          %s4245 = int_to_ptr.vmem [resolvable:$true] %s4244
          %4250 = dma.vmem_to_hbm [thread:$0]  %s4245, 2048, %s4243, %s4223, 64, 64, 4
        $region36: #{tpu_custom_call.1} parent=31 // pred_fallthru
          _
        // Predicated region
        $region37: #{tpu_custom_call.1} parent=31 // pred_check
          %p4251 = pneg %p152
        $region38: #{tpu_custom_call.1} parent=31 // pred_check_branch
          %4253 = sbr.rel (%p4251) target = $region40
        $region39: #{tpu_custom_call.1} parent=31 // pred_region
          %s4254 = smul.u32 2, %s27
          %s4256 = ssub.s32 256, 256
          %4257 = vsyncadd %s4228, %s4256
          %s4258 = smul.addr %s26, 2
          %s4259 = sadd.s32 %s4254, %s4258
          %s4260 = smul.addr %s4259, 128
          %s4261 = scalar_lea.hbm %s4, %s4260
          %s4262 = sshll.u32 %s4231, 4
          %s4263 = int_to_ptr.vmem [resolvable:$true] %s4262
          %4268 = dma.vmem_to_hbm [thread:$0]  %s4263, 256, %s4261, %s4228, 128, 128, 8
        $region40: #{tpu_custom_call.1} parent=31 // pred_fallthru
          _
      $region32: #{tpu_custom_call.1} parent=5 // pred_fallthru
        _
      %p4269 = scmp.le.s32.totalorder 2, %s17
      // Predicated region
      $region41: #{tpu_custom_call.1} parent=5 // pred_check
        %p4270 = pneg %p4269
      $region42: #{tpu_custom_call.1} parent=5 // pred_check_branch
        %4272 = sbr.rel (%p4270) target = $region44
      $region43: #{tpu_custom_call.1} parent=5 // pred_region
        %s4273 = ssub.s32 %s17, 2
        // Predicated region
        $region45: #{tpu_custom_call.1} parent=43 // pred_check
          %p4274 = pneg %p130
        $region46: #{tpu_custom_call.1} parent=43 // pred_check_branch
          %4276 = sbr.rel (%p4274) target = $region48
        $region47: #{tpu_custom_call.1} parent=43 // pred_region
          %s4277 = sand.u32 %s115, 1
          %s4278 = scalar_lea.sflag [#allocation3], %s4277
          %s4279 = sand.u32 %s115, 1
          %s4280 = smul.addr %s4279, 128
          %s4281 = scalar_lea.vmem [#allocation2], %s4280
          %4282 = dma.done %s4278, 2048
        $region48: #{tpu_custom_call.1} parent=43 // pred_fallthru
          _
        // Predicated region
        $region49: #{tpu_custom_call.1} parent=43 // pred_check
          %p4283 = pneg %p158
        $region50: #{tpu_custom_call.1} parent=43 // pred_check_branch
          %4285 = sbr.rel (%p4283) target = $region52
        $region51: #{tpu_custom_call.1} parent=43 // pred_region
          %s4286 = sand.u32 %s143, 1
          %s4287 = scalar_lea.sflag [#allocation5], %s4286
          %s4288 = sand.u32 %s143, 1
          %s4289 = smul.addr %s4288, 16
          %s4290 = scalar_lea.vmem [#allocation4], %s4289
          %4291 = dma.done %s4287, 256
        $region52: #{tpu_custom_call.1} parent=43 // pred_fallthru
          _
      $region44: #{tpu_custom_call.1} parent=5 // pred_fallthru
        _
    $region6: #{tpu_custom_call.1} parent=1 // loop_footer
      %s21 = sadd.s32 1, %s17
    $region7: #{tpu_custom_call.1} parent=1 // loop_footer_branch
      %16 = sbr.rel target = $region3
    $region8: #{tpu_custom_call.1} parent=1 // loop_exit
      _
    %4292 = vsyncpa [#allocation3], 1
    %s4293 = scalar_lea.sflag [#allocation3], 1
    %4294 = vsyncpa %s4293, 1
    %4295 = vsyncpa [#allocation5], 1
    %s4296 = scalar_lea.sflag [#allocation5], 1
    %4297 = vsyncpa %s4296, 1

</llo_original>
